<compile_context>
chip_gen: v7x
topology: tpu7x:2x2x1
jax: 0.10.0
libtpu: 0.0.40
codegen_flags: <defaults>
</compile_context>

<pallas_src>
import jax
import jax.numpy as jnp
from jax.experimental import pallas as pl
from jax.experimental.pallas import tpu as pltpu

# --- model hyperparameters (small, consistent with the module) ---
HIDDEN = 32              # hidden_size
NUM_HEADS = 2            # num_heads (hidden % heads == 0)
HEAD = HIDDEN // NUM_HEADS
WINDOW = 8               # window_size (memory length / k_len)
TILE_B = 32              # samples (memory, utterance) pairs per grid step
NEG_INF = -1e10

# Set to jnp.bfloat16 on v6e / v7x to halve HBM->VMEM bytes for the projection
# matmuls (accumulation stays f32).  Kept f32 by default (v5e guidance + exact
# parity with the f32 reference).
MXU_INPUT_DTYPE = jnp.float32


def _attention_kernel(mem_ref, cu_ref, mask_ref, wkv_ref, wq_ref,
                      selk_ref, selv_ref, wo_ref, x_ref, attn_ref):
    """One grid step == one batch tile of TILE_B (memory, utterance) pairs.

    mem_ref  : [TILE_B*WINDOW, HIDDEN]      flattened memories (row = (b, w))
    cu_ref   : [TILE_B, HIDDEN]             current utterances
    mask_ref : [TILE_B*WINDOW, 1]           1.0 = attend, 0.0 = pad
    wkv_ref  : [HIDDEN, 2*HIDDEN]           [Wk^T | Wv^T]   (or [I | I])
    wq_ref   : [HIDDEN, 2*HIDDEN]           [Wq^T | 0]      (or [I | 0])
    selk_ref : [2*HIDDEN, NUM_HEADS]        head selector on the K columns
    selv_ref : [NUM_HEADS, 2*HIDDEN]        head selector on the V columns
    wo_ref   : [2*HIDDEN, HIDDEN]           [0 ; Wo^T]      (or [0 ; I])
    x_ref    : [TILE_B, HIDDEN]             contextualized embeddings
    attn_ref : [TILE_B*WINDOW, NUM_HEADS]   attention maps (row = (b, w), lane = head)
    """
    f32 = jnp.float32
    TBW = mem_ref.shape[0]
    TB = TBW // WINDOW
    H2 = 2 * HIDDEN

    mem = mem_ref[...]                                   # [TB*W, H]
    cu = cu_ref[...]                                     # [TB, H]

    # Fused projections: one wide MXU matmul per operand for the whole tile.
    kv = jnp.dot(mem, wkv_ref[...], preferred_element_type=f32)   # [TB*W, 2H] = [K | V]
    q = jnp.dot(cu, wq_ref[...], preferred_element_type=f32)      # [TB,   2H] = [Q | 0]

    # scores[(b,w), h] = sum_{d in head h} Q[b,d] * K[(b,w),d]
    # The V columns of `prod` are zero because q's V columns are zero, and the
    # selector selk has zero rows there, so no lane slicing is needed anywhere.
    kv3 = kv.reshape(TB, WINDOW, H2)
    prod = (kv3 * q[:, None, :]).reshape(TBW, H2)                   # [TB*W, 2H]
    scores = jnp.dot(prod, selk_ref[...], preferred_element_type=f32)   # [TB*W, NH]

    # masked_fill(mask == 0, -1e10): exact PyTorch semantics (replace, not add).
    scores = jnp.where(mask_ref[...] == 0.0, jnp.float32(NEG_INF), scores)

    # Softmax over the WINDOW (key) axis for every (sample, head) of the tile.
    s3 = scores.reshape(TB, WINDOW, NUM_HEADS)
    m = jnp.max(s3, axis=1, keepdims=True)
    e = jnp.exp(s3 - m)
    attn3 = e / jnp.sum(e, axis=1, keepdims=True)        # exact normalization
    attn = attn3.reshape(TBW, NUM_HEADS)                 # [TB*W, NH]

    # ctx[b, c] = sum_w attn[b, head(c), w] * V[(b,w), c]  (only V columns nonzero)
    attn_cols = jnp.dot(attn, selv_ref[...], preferred_element_type=f32)  # [TB*W, 2H]
    ctx = (attn_cols * kv).reshape(TB, WINDOW, H2).sum(axis=1)            # [TB, 2H]

    # Output projection: [0 ; Wo^T] picks the V column block and applies Wo.
    x = jnp.dot(ctx, wo_ref[...], preferred_element_type=f32)             # [TB, H]

    x_ref[...] = x.astype(x_ref.dtype)
    attn_ref[...] = attn.astype(attn_ref.dtype)


def fuse_attention_weights(params=None, need_weights=True):
    """Build all constant kernel operands ONCE at parameter-init time.

    params: dict of PyTorch-layout ([out, in]) weights "wk","wq","wv","wo"
            (ignored when need_weights=False — identity projections are used).
    Returns a dict of operands consumed by the kernel.
    """
    f32 = jnp.float32
    eye = jnp.eye(HIDDEN, dtype=f32)
    zeros_hh = jnp.zeros((HIDDEN, HIDDEN), f32)
    if need_weights:
        wk_t = params["wk"].T.astype(f32)
        wv_t = params["wv"].T.astype(f32)
        wq_t = params["wq"].T.astype(f32)
        wo_t = params["wo"].T.astype(f32)
    else:
        wk_t = wv_t = wq_t = wo_t = eye

    w_kv = jnp.concatenate([wk_t, wv_t], axis=1)                 # [H, 2H]
    w_q = jnp.concatenate([wq_t, zeros_hh], axis=1)              # [H, 2H]
    w_o = jnp.concatenate([zeros_hh, wo_t], axis=0)              # [2H, H]

    # head selector sel[h, d] = 1 if feature d belongs to head h
    sel = (jnp.arange(HIDDEN)[None, :] // HEAD
           == jnp.arange(NUM_HEADS)[:, None]).astype(f32)        # [NH, H]
    sel_k = jnp.concatenate([sel.T, jnp.zeros((HIDDEN, NUM_HEADS), f32)], axis=0)  # [2H, NH]
    sel_v = jnp.concatenate([jnp.zeros((NUM_HEADS, HIDDEN), f32), sel], axis=1)    # [NH, 2H]
    return {"w_kv": w_kv, "w_q": w_q, "w_o": w_o, "sel_k": sel_k, "sel_v": sel_v}


@jax.jit
def attention_forward_batched(memory, current_utterance, fused, attention_mask=None):
    """Batched forward: B independent (memory, utterance) pairs in one pallas_call.

    memory            : [B, WINDOW, HIDDEN]
    current_utterance : [B, 1, HIDDEN]
    fused             : dict from fuse_attention_weights (built once at init)
    attention_mask    : optional [B, WINDOW] (1 = attend, 0 = pad)
    returns x: [B, 1, HIDDEN], attention: [B, NUM_HEADS, 1, WINDOW]
    """
    B = memory.shape[0]
    Bp = ((B + TILE_B - 1) // TILE_B) * TILE_B
    num_tiles = Bp // TILE_B

    mem = memory.astype(jnp.float32)
    cu = current_utterance.reshape(B, HIDDEN).astype(jnp.float32)
    if attention_mask is None:
        mask = jnp.ones((B, WINDOW), jnp.float32)
    else:
        mask = attention_mask.reshape(B, WINDOW).astype(jnp.float32)

    # Pad the batch to a multiple of TILE_B (padded rows are discarded below).
    if Bp != B:
        mem = jnp.pad(mem, ((0, Bp - B), (0, 0), (0, 0)))
        cu = jnp.pad(cu, ((0, Bp - B), (0, 0)))
        mask = jnp.pad(mask, ((0, Bp - B), (0, 0)), constant_values=1.0)

    mem_flat = mem.reshape(Bp * WINDOW, HIDDEN).astype(MXU_INPUT_DTYPE)
    cu = cu.astype(MXU_INPUT_DTYPE)
    mask_flat = mask.reshape(Bp * WINDOW, 1)
    w_kv = fused["w_kv"].astype(MXU_INPUT_DTYPE)
    w_q = fused["w_q"].astype(MXU_INPUT_DTYPE)

    out_shapes = (
        jax.ShapeDtypeStruct((Bp, HIDDEN), jnp.float32),
        jax.ShapeDtypeStruct((Bp * WINDOW, NUM_HEADS), jnp.float32),
    )

    # NOTE: the constant operands below could additionally be single-buffered
    # (pipeline_mode); with a 1-2 step grid and ~16 KiB of weights the saving is
    # negligible, so the default double-buffering is kept for portability.
    x_flat, attn_flat = pl.pallas_call(
        _attention_kernel,
        out_shape=out_shapes,
        grid=(num_tiles,),
        in_specs=[
            pl.BlockSpec((TILE_B * WINDOW, HIDDEN), lambda i: (i, 0)),      # memory
            pl.BlockSpec((TILE_B, HIDDEN), lambda i: (i, 0)),               # utterances
            pl.BlockSpec((TILE_B * WINDOW, 1), lambda i: (i, 0)),           # mask
            pl.BlockSpec((HIDDEN, 2 * HIDDEN), lambda i: (0, 0)),           # [Wk^T | Wv^T]
            pl.BlockSpec((HIDDEN, 2 * HIDDEN), lambda i: (0, 0)),           # [Wq^T | 0]
            pl.BlockSpec((2 * HIDDEN, NUM_HEADS), lambda i: (0, 0)),        # sel_k
            pl.BlockSpec((NUM_HEADS, 2 * HIDDEN), lambda i: (0, 0)),        # sel_v
            pl.BlockSpec((2 * HIDDEN, HIDDEN), lambda i: (0, 0)),           # [0 ; Wo^T]
        ],
        out_specs=(
            pl.BlockSpec((TILE_B, HIDDEN), lambda i: (i, 0)),               # x
            pl.BlockSpec((TILE_B * WINDOW, NUM_HEADS), lambda i: (i, 0)),   # attention
        ),
        compiler_params=pltpu.CompilerParams(dimension_semantics=("parallel",)),
    )(mem_flat, cu, mask_flat, w_kv, w_q,
      fused["sel_k"], fused["sel_v"], fused["w_o"])

    x = x_flat[:B].reshape(B, 1, HIDDEN)
    attention = attn_flat.reshape(Bp, WINDOW, NUM_HEADS)[:B]
    attention = jnp.transpose(attention, (0, 2, 1))[:, :, None, :]   # [B, NH, 1, W]
    return x, attention


def attention_forward(memory, current_utterance, fused, attention_mask=None):
    """Single-pair API mirroring AttentionModel.forward.

    memory [WINDOW, HIDDEN], current_utterance [1, HIDDEN], mask optional [WINDOW]
    or [1, WINDOW].  Returns (x [1, HIDDEN], attention [1, NUM_HEADS, 1, WINDOW]).
    """
    mask_b = None if attention_mask is None else attention_mask.reshape(1, WINDOW)
    x, attention = attention_forward_batched(
        memory[None], current_utterance[None], fused, mask_b)
    return x[0], attention


def _reference_forward_batched(memory, current_utterance, params,
                               attention_mask=None, need_weights=True):
    """Pure-JAX reference replicating the PyTorch forward exactly (batched)."""
    B = memory.shape[0]
    key, query, value = memory, current_utterance, memory
    if need_weights:
        key = key @ params["wk"].T
        query = query @ params["wq"].T
        value = value @ params["wv"].T
    K = key.reshape(B, -1, NUM_HEADS, HEAD).transpose(0, 2, 1, 3)
    Q = query.reshape(B, -1, NUM_HEADS, HEAD).transpose(0, 2, 1, 3)
    V = value.reshape(B, -1, NUM_HEADS, HEAD).transpose(0, 2, 1, 3)
    weights = Q @ jnp.swapaxes(K, -1, -2)                 # [B, NH, 1, W]
    if attention_mask is not None:
        am = attention_mask.reshape(B, 1, 1, WINDOW)
        weights = jnp.where(am == 0, NEG_INF, weights)
    attention = jax.nn.softmax(weights, axis=-1)
    x = attention @ V                                     # [B, NH, 1, HEAD]
    x = jnp.transpose(x, (0, 2, 1, 3)).reshape(B, 1, HIDDEN)
    if need_weights:
        x = x @ params["wo"].T
    return x, attention


if __name__ == "__main__":
    key = jax.random.PRNGKey(0)
    k_mem, k_cu, k_wk, k_wq, k_wv, k_wo = jax.random.split(key, 6)

    B = 64  # batch of (memory, utterance) pairs -> grid = (B / TILE_B,) = (2,)
    memory = jax.random.normal(k_mem, (B, WINDOW, HIDDEN), dtype=jnp.float32)
    current_utterance = jax.random.normal(k_cu, (B, 1, HIDDEN), dtype=jnp.float32)
    # deterministic "Linear" weights in PyTorch layout [out_features, in_features]
    params = {
        "wk": 0.05 * jax.random.normal(k_wk, (HIDDEN, HIDDEN), dtype=jnp.float32),
        "wq": 0.05 * jax.random.normal(k_wq, (HIDDEN, HIDDEN), dtype=jnp.float32),
        "wv": 0.05 * jax.random.normal(k_wv, (HIDDEN, HIDDEN), dtype=jnp.float32),
        "wo": 0.05 * jax.random.normal(k_wo, (HIDDEN, HIDDEN), dtype=jnp.float32),
    }
    # fuse / pad / transpose all constant operands ONCE at init time
    fused = fuse_attention_weights(params, need_weights=True)

    # per-sample masks: sample b pads out its last (b % WINDOW) key positions
    pad_counts = jnp.arange(B) % WINDOW
    attention_mask = (jnp.arange(WINDOW)[None, :]
                      < (WINDOW - pad_counts)[:, None]).astype(jnp.float32)   # [B, W]

    x, attention = attention_forward_batched(memory, current_utterance, fused,
                                             attention_mask)
    jax.block_until_ready((x, attention))

    assert x.shape == (B, 1, HIDDEN)
    assert attention.shape == (B, NUM_HEADS, 1, WINDOW)

    x_ref, attn_ref = _reference_forward_batched(memory, current_utterance, params,
                                                 attention_mask)
    assert jnp.allclose(x, x_ref, atol=2e-3, rtol=2e-3), "x mismatch"
    assert jnp.allclose(attention, attn_ref, atol=2e-3, rtol=2e-3), "attention mismatch"

    # also exercise the single-pair, module-shaped entry point (mask=None path,
    # which also exercises the batch-padding path: B=1 -> TILE_B)
    x1, a1 = attention_forward(memory[0], current_utterance[0], fused)
    jax.block_until_ready((x1, a1))
    x1_ref, a1_ref = _reference_forward_batched(memory[:1], current_utterance[:1],
                                                params, None)
    assert x1.shape == (1, HIDDEN) and a1.shape == (1, NUM_HEADS, 1, WINDOW)
    assert jnp.allclose(x1, x1_ref[0], atol=2e-3, rtol=2e-3)
    assert jnp.allclose(a1, a1_ref, atol=2e-3, rtol=2e-3)

    print("KERNEL_OK")
</pallas_src>

<mosaic_0001>
module attributes {stable_mosaic.version = 11 : i64} {
  func.func @_attention_kernel(%arg0: i32, %arg1: memref<256x32xf32, #tpu.memory_space<vmem>>, %arg2: memref<32x32xf32, #tpu.memory_space<vmem>>, %arg3: memref<256x1xf32, #tpu.memory_space<vmem>>, %arg4: memref<32x64xf32, #tpu.memory_space<vmem>>, %arg5: memref<32x64xf32, #tpu.memory_space<vmem>>, %arg6: memref<64x2xf32, #tpu.memory_space<vmem>>, %arg7: memref<2x64xf32, #tpu.memory_space<vmem>>, %arg8: memref<64x32xf32, #tpu.memory_space<vmem>>, %arg9: memref<32x32xf32, #tpu.memory_space<vmem>>, %arg10: memref<256x2xf32, #tpu.memory_space<vmem>>) attributes {dimension_semantics = [#tpu.dimension_semantics<parallel>], iteration_bounds = array<i64: 2>, scalar_prefetch = 0 : i64, scratch_operands = 0 : i64, tpu.core_type = #tpu.core_type<tc>, window_params = [{transform_indices = @transform_0, window_bounds = array<i64: 256, 32>}, {transform_indices = @transform_1, window_bounds = array<i64: 32, 32>}, {transform_indices = @transform_2, window_bounds = array<i64: 256, 1>}, {pipeline_mode = #tpu.pipeline_mode<synchronous>, transform_indices = @transform_3, window_bounds = array<i64: 32, 64>}, {pipeline_mode = #tpu.pipeline_mode<synchronous>, transform_indices = @transform_4, window_bounds = array<i64: 32, 64>}, {pipeline_mode = #tpu.pipeline_mode<synchronous>, transform_indices = @transform_5, window_bounds = array<i64: 64, 2>}, {pipeline_mode = #tpu.pipeline_mode<synchronous>, transform_indices = @transform_6, window_bounds = array<i64: 2, 64>}, {pipeline_mode = #tpu.pipeline_mode<synchronous>, transform_indices = @transform_7, window_bounds = array<i64: 64, 32>}, {transform_indices = @transform_8, window_bounds = array<i64: 32, 32>}, {transform_indices = @transform_9, window_bounds = array<i64: 256, 2>}]} {
    %c0 = arith.constant 0 : index
    %c0_0 = arith.constant 0 : index
    %0 = vector.load %arg1[%c0, %c0_0] : memref<256x32xf32, #tpu.memory_space<vmem>>, vector<256x32xf32>
    %c0_1 = arith.constant 0 : index
    %c0_2 = arith.constant 0 : index
    %1 = vector.load %arg2[%c0_1, %c0_2] : memref<32x32xf32, #tpu.memory_space<vmem>>, vector<32x32xf32>
    %c0_3 = arith.constant 0 : index
    %c0_4 = arith.constant 0 : index
    %2 = vector.load %arg4[%c0_3, %c0_4] : memref<32x64xf32, #tpu.memory_space<vmem>>, vector<32x64xf32>
    %cst = arith.constant dense<0.000000e+00> : vector<256x64xf32>
    %3 = tpu.matmul %0, %2, %cst {dimension_numbers = #tpu.dot_dimension_numbers<[1], [0], [0], [1], [0, 0, 1, 1], [], []>} : vector<256x32xf32>, vector<32x64xf32>, vector<256x64xf32> -> vector<256x64xf32>
    %c0_5 = arith.constant 0 : index
    %c0_6 = arith.constant 0 : index
    %4 = vector.load %arg5[%c0_5, %c0_6] : memref<32x64xf32, #tpu.memory_space<vmem>>, vector<32x64xf32>
    %cst_7 = arith.constant dense<0.000000e+00> : vector<32x64xf32>
    %5 = tpu.matmul %1, %4, %cst_7 {dimension_numbers = #tpu.dot_dimension_numbers<[1], [0], [0], [1], [0, 0, 1, 1], [], []>} : vector<32x32xf32>, vector<32x64xf32>, vector<32x64xf32> -> vector<32x64xf32>
    %6 = vector.shape_cast %3 : vector<256x64xf32> to vector<32x8x64xf32>
    %7 = vector.shape_cast %5 : vector<32x64xf32> to vector<32x1x64xf32>
    %8 = vector.broadcast %7 : vector<32x1x64xf32> to vector<32x8x64xf32>
    %9 = arith.mulf %6, %8 : vector<32x8x64xf32>
    %10 = vector.shape_cast %9 : vector<32x8x64xf32> to vector<256x64xf32>
    %c0_8 = arith.constant 0 : index
    %c0_9 = arith.constant 0 : index
    %11 = vector.load %arg6[%c0_8, %c0_9] : memref<64x2xf32, #tpu.memory_space<vmem>>, vector<64x2xf32>
    %cst_10 = arith.constant dense<0.000000e+00> : vector<256x2xf32>
    %12 = tpu.matmul %10, %11, %cst_10 {dimension_numbers = #tpu.dot_dimension_numbers<[1], [0], [0], [1], [0, 0, 1, 1], [], []>} : vector<256x64xf32>, vector<64x2xf32>, vector<256x2xf32> -> vector<256x2xf32>
    %c0_11 = arith.constant 0 : index
    %c0_12 = arith.constant 0 : index
    %13 = vector.load %arg3[%c0_11, %c0_12] : memref<256x1xf32, #tpu.memory_space<vmem>>, vector<256x1xf32>
    %cst_13 = arith.constant 0.000000e+00 : f32
    %14 = vector.broadcast %cst_13 : f32 to vector<256x1xf32>
    %15 = arith.cmpf oeq, %13, %14 : vector<256x1xf32>
    %cst_14 = arith.constant -1.000000e+10 : f32
    %16 = vector.shape_cast %15 : vector<256x1xi1> to vector<256x1xi1>
    %17 = vector.broadcast %16 : vector<256x1xi1> to vector<256x2xi1>
    %18 = vector.broadcast %cst_14 : f32 to vector<256x2xf32>
    %19 = arith.select %17, %18, %12 : vector<256x2xi1>, vector<256x2xf32>
    %20 = vector.shape_cast %19 : vector<256x2xf32> to vector<32x8x2xf32>
    %cst_15 = arith.constant dense<0xFF800000> : vector<32x2xf32>
    %21 = vector.multi_reduction <maximumf>, %20, %cst_15 [1] : vector<32x8x2xf32> to vector<32x2xf32>
    %22 = vector.shape_cast %21 : vector<32x2xf32> to vector<32x1x2xf32>
    %23 = vector.broadcast %22 : vector<32x1x2xf32> to vector<32x8x2xf32>
    %24 = arith.subf %20, %23 : vector<32x8x2xf32>
    %25 = math.exp %24 : vector<32x8x2xf32>
    %cst_16 = arith.constant dense<0.000000e+00> : vector<32x2xf32>
    %26 = vector.multi_reduction <add>, %25, %cst_16 [1] : vector<32x8x2xf32> to vector<32x2xf32>
    %27 = vector.shape_cast %26 : vector<32x2xf32> to vector<32x1x2xf32>
    %28 = vector.broadcast %27 : vector<32x1x2xf32> to vector<32x8x2xf32>
    %29 = arith.divf %25, %28 : vector<32x8x2xf32>
    %30 = vector.shape_cast %29 : vector<32x8x2xf32> to vector<256x2xf32>
    %c0_17 = arith.constant 0 : index
    %c0_18 = arith.constant 0 : index
    %31 = vector.load %arg7[%c0_17, %c0_18] : memref<2x64xf32, #tpu.memory_space<vmem>>, vector<2x64xf32>
    %cst_19 = arith.constant dense<0.000000e+00> : vector<256x64xf32>
    %32 = tpu.matmul %30, %31, %cst_19 {dimension_numbers = #tpu.dot_dimension_numbers<[1], [0], [0], [1], [0, 0, 1, 1], [], []>} : vector<256x2xf32>, vector<2x64xf32>, vector<256x64xf32> -> vector<256x64xf32>
    %33 = arith.mulf %32, %3 : vector<256x64xf32>
    %34 = vector.shape_cast %33 : vector<256x64xf32> to vector<32x8x64xf32>
    %cst_20 = arith.constant dense<0.000000e+00> : vector<32x64xf32>
    %35 = vector.multi_reduction <add>, %34, %cst_20 [1] : vector<32x8x64xf32> to vector<32x64xf32>
    %c0_21 = arith.constant 0 : index
    %c0_22 = arith.constant 0 : index
    %36 = vector.load %arg8[%c0_21, %c0_22] : memref<64x32xf32, #tpu.memory_space<vmem>>, vector<64x32xf32>
    %cst_23 = arith.constant dense<0.000000e+00> : vector<32x32xf32>
    %37 = tpu.matmul %35, %36, %cst_23 {dimension_numbers = #tpu.dot_dimension_numbers<[1], [0], [0], [1], [0, 0, 1, 1], [], []>} : vector<32x64xf32>, vector<64x32xf32>, vector<32x32xf32> -> vector<32x32xf32>
    %c0_24 = arith.constant 0 : index
    %c0_25 = arith.constant 0 : index
    %38 = vector.load %arg9[%c0_24, %c0_25] : memref<32x32xf32, #tpu.memory_space<vmem>>, vector<32x32xf32>
    tpu.vector_store %arg9[%c0_24, %c0_25], %37 {strides = array<i32>} : memref<32x32xf32, #tpu.memory_space<vmem>>, vector<32x32xf32>,
    %c0_26 = arith.constant 0 : index
    %c0_27 = arith.constant 0 : index
    %39 = vector.load %arg10[%c0_26, %c0_27] : memref<256x2xf32, #tpu.memory_space<vmem>>, vector<256x2xf32>
    tpu.vector_store %arg10[%c0_26, %c0_27], %30 {strides = array<i32>} : memref<256x2xf32, #tpu.memory_space<vmem>>, vector<256x2xf32>,
    return
  }
  func.func @transform_0(%arg0: i32) -> (i32, i32) {
    %c0_i32 = arith.constant 0 : i32
    %c0_i32_0 = arith.constant 0 : i32
    return %arg0, %c0_i32 : i32, i32
  }
  func.func @transform_1(%arg0: i32) -> (i32, i32) {
    %c0_i32 = arith.constant 0 : i32
    %c0_i32_0 = arith.constant 0 : i32
    return %arg0, %c0_i32 : i32, i32
  }
  func.func @transform_2(%arg0: i32) -> (i32, i32) {
    %c0_i32 = arith.constant 0 : i32
    %c0_i32_0 = arith.constant 0 : i32
    return %arg0, %c0_i32 : i32, i32
  }
  func.func @transform_3(%arg0: i32) -> (i32, i32) {
    %c0_i32 = arith.constant 0 : i32
    %c0_i32_0 = arith.constant 0 : i32
    %c0_i32_1 = arith.constant 0 : i32
    return %c0_i32, %c0_i32_0 : i32, i32
  }
  func.func @transform_4(%arg0: i32) -> (i32, i32) {
    %c0_i32 = arith.constant 0 : i32
    %c0_i32_0 = arith.constant 0 : i32
    %c0_i32_1 = arith.constant 0 : i32
    return %c0_i32, %c0_i32_0 : i32, i32
  }
  func.func @transform_5(%arg0: i32) -> (i32, i32) {
    %c0_i32 = arith.constant 0 : i32
    %c0_i32_0 = arith.constant 0 : i32
    %c0_i32_1 = arith.constant 0 : i32
    return %c0_i32, %c0_i32_0 : i32, i32
  }
  func.func @transform_6(%arg0: i32) -> (i32, i32) {
    %c0_i32 = arith.constant 0 : i32
    %c0_i32_0 = arith.constant 0 : i32
    %c0_i32_1 = arith.constant 0 : i32
    return %c0_i32, %c0_i32_0 : i32, i32
  }
  func.func @transform_7(%arg0: i32) -> (i32, i32) {
    %c0_i32 = arith.constant 0 : i32
    %c0_i32_0 = arith.constant 0 : i32
    %c0_i32_1 = arith.constant 0 : i32
    return %c0_i32, %c0_i32_0 : i32, i32
  }
  func.func @transform_8(%arg0: i32) -> (i32, i32) {
    %c0_i32 = arith.constant 0 : i32
    %c0_i32_0 = arith.constant 0 : i32
    return %arg0, %c0_i32 : i32, i32
  }
  func.func @transform_9(%arg0: i32) -> (i32, i32) {
    %c0_i32 = arith.constant 0 : i32
    %c0_i32_0 = arith.constant 0 : i32
    return %arg0, %c0_i32 : i32, i32
  }
}

</mosaic_0001>

<llo_original>
// kernel: attention_forward_batched.1
$region0: #{attention_forward_batched.1}
  #allocation0 [shape = 'u32[]', space=smem, size = 0x4, offset = 0x4, fixed_abs, tag = 'smem constant byte address 0x4 - core index']
  #allocation1 [shape = 'u32[144,128]{1,0:T(1,128)}', space=vmem, size = 0x12000, scoped, tag = 'internal scratch']
  %s0 = inlined_call_operand.vmem [shape: f32[512,32], index: 0, kind: input, shape index: {}]
  %s1 = inlined_call_operand.vmem [shape: f32[64,32], index: 1, kind: input, shape index: {}]
  %s2 = inlined_call_operand.vmem [shape: f32[512,1], index: 2, kind: input, shape index: {}]
  %s3 = inlined_call_operand.vmem [shape: f32[32,64], index: 3, kind: input, shape index: {}]
  %s4 = inlined_call_operand.vmem [shape: f32[32,64], index: 4, kind: input, shape index: {}]
  %s5 = inlined_call_operand.vmem [shape: f32[64,2], index: 5, kind: input, shape index: {}]
  %s6 = inlined_call_operand.vmem [shape: f32[2,64], index: 6, kind: input, shape index: {}]
  %s7 = inlined_call_operand.vmem [shape: f32[64,32], index: 7, kind: input, shape index: {}]
  %s8 = inlined_call_operand.vmem [shape: f32[64,32], index: 8, kind: output, shape index: {0}]
  %s9 = inlined_call_operand.vmem [shape: f32[512,2], index: 9, kind: output, shape index: {1}]
  %10 = xla_tuple %s8, %s9
  %s11 = sld [smem:[#allocation0]]
  $region73: #{attention_forward_batched.1} parent=0
    _
  %s13 = ssub.s32 1, %s11
  %s14 = scalar_select 0, %s13, %s11
  loop: start=0, step=1, limit=4
  $region2: #{attention_forward_batched.1} parent=0 // loop_pre_header
    _
  $region3: #{attention_forward_batched.1} parent=0 // loop_header
    %s16 = sphi 0, %s20
    %p17 = scmp.ge.s32.totalorder %s16, 4
    %s26 = sphi 0, %s28
    %s29 = sphi 0, %s26
    %s30 = sphi 0, %s29
    %s46 = sphi 0, %s30
    %s52 = sphi 0, %s54
    %s55 = sphi 0, %s52
    %s56 = sphi 0, %s55
    %s72 = sphi 0, %s56
    %s78 = sphi 0, %s80
    %s81 = sphi 0, %s78
    %s82 = sphi 0, %s81
    %s98 = sphi 0, %s82
    %s102 = sphi 0, %s102
    %s104 = sphi 0, %s102
    %s105 = sphi 0, %s104
    %s119 = sphi 0, %s105
    %s123 = sphi 0, %s123
    %s125 = sphi 0, %s123
    %s126 = sphi 0, %s125
    %s140 = sphi 0, %s126
    %s144 = sphi 0, %s144
    %s146 = sphi 0, %s144
    %s147 = sphi 0, %s146
    %s161 = sphi 0, %s147
    %s165 = sphi 0, %s165
    %s167 = sphi 0, %s165
    %s168 = sphi 0, %s167
    %s182 = sphi 0, %s168
    %s186 = sphi 0, %s186
    %s188 = sphi 0, %s186
    %s189 = sphi 0, %s188
    %s203 = sphi 0, %s189
    %s209 = sphi 0, %s211
    %s212 = sphi 0, %s209
    %s213 = sphi 0, %s212
    %s229 = sphi 0, %s213
    %s235 = sphi 0, %s237
    %s238 = sphi 0, %s235
    %s239 = sphi 0, %s238
    %s255 = sphi 0, %s239
  $region4: #{attention_forward_batched.1} parent=0 // loop_header_branch
    %19 = sbr.rel (%p17) target = $region8
  $region5: #{attention_forward_batched.1} parent=0 // loop_body
    %s21 = ssub.s32 %s16, 1
    %s22 = ssub.s32 %s16, 2
    %s23 = sadd.s32 %s16, 1
    %s24 = ssub.s32 %s16, %s23
    %p25 = scmp.eq.s32.totalorder %s24, 0
    %s27 = sadd.s32 %s26, 1
    %s28 = scalar_select %p25, %s26, %s27
    %p31 = pneg %p25
    %p32 = scmp.eq.s32.totalorder %s16, 1
    %p33 = por %p31, %p32
    %p34 = scmp.ne.s32.totalorder %s26, %s29
    %p35 = scmp.eq.s32.totalorder %s16, 0
    %p36 = por %p34, %p35
    %p37 = scmp.ne.s32.totalorder %s26, %s29
    %p38 = scmp.eq.s32.totalorder %s21, 1
    %p39 = por %p37, %p38
    %p40 = scmp.ne.s32.totalorder %s29, %s30
    %p41 = scmp.eq.s32.totalorder %s21, 0
    %p42 = por %p40, %p41
    %p43 = scmp.ne.s32.totalorder %s29, %s30
    %p44 = scmp.eq.s32.totalorder %s22, 1
    %p45 = por %p43, %p44
    %p47 = scmp.ne.s32.totalorder %s30, %s46
    %p48 = scmp.eq.s32.totalorder %s22, 0
    %p49 = por %p47, %p48
    %s50 = ssub.s32 %s16, %s23
    %p51 = scmp.eq.s32.totalorder %s50, 0
    %s53 = sadd.s32 %s52, 1
    %s54 = scalar_select %p51, %s52, %s53
    %p57 = pneg %p51
    %p58 = scmp.eq.s32.totalorder %s16, 1
    %p59 = por %p57, %p58
    %p60 = scmp.ne.s32.totalorder %s52, %s55
    %p61 = scmp.eq.s32.totalorder %s16, 0
    %p62 = por %p60, %p61
    %p63 = scmp.ne.s32.totalorder %s52, %s55
    %p64 = scmp.eq.s32.totalorder %s21, 1
    %p65 = por %p63, %p64
    %p66 = scmp.ne.s32.totalorder %s55, %s56
    %p67 = scmp.eq.s32.totalorder %s21, 0
    %p68 = por %p66, %p67
    %p69 = scmp.ne.s32.totalorder %s55, %s56
    %p70 = scmp.eq.s32.totalorder %s22, 1
    %p71 = por %p69, %p70
    %p73 = scmp.ne.s32.totalorder %s56, %s72
    %p74 = scmp.eq.s32.totalorder %s22, 0
    %p75 = por %p73, %p74
    %s76 = ssub.s32 %s16, %s23
    %p77 = scmp.eq.s32.totalorder %s76, 0
    %s79 = sadd.s32 %s78, 1
    %s80 = scalar_select %p77, %s78, %s79
    %p83 = pneg %p77
    %p84 = scmp.eq.s32.totalorder %s16, 1
    %p85 = por %p83, %p84
    %p86 = scmp.ne.s32.totalorder %s78, %s81
    %p87 = scmp.eq.s32.totalorder %s16, 0
    %p88 = por %p86, %p87
    %p89 = scmp.ne.s32.totalorder %s78, %s81
    %p90 = scmp.eq.s32.totalorder %s21, 1
    %p91 = por %p89, %p90
    %p92 = scmp.ne.s32.totalorder %s81, %s82
    %p93 = scmp.eq.s32.totalorder %s21, 0
    %p94 = por %p92, %p93
    %p95 = scmp.ne.s32.totalorder %s81, %s82
    %p96 = scmp.eq.s32.totalorder %s22, 1
    %p97 = por %p95, %p96
    %p99 = scmp.ne.s32.totalorder %s82, %s98
    %p100 = scmp.eq.s32.totalorder %s22, 0
    %p101 = por %p99, %p100
    %s103 = sadd.s32 %s102, 1
    %p106 = scmp.eq.s32.totalorder %s16, 1
    %p107 = scmp.ne.s32.totalorder %s102, %s104
    %p108 = scmp.eq.s32.totalorder %s16, 0
    %p109 = por %p107, %p108
    %p110 = scmp.ne.s32.totalorder %s102, %s104
    %p111 = scmp.eq.s32.totalorder %s21, 1
    %p112 = por %p110, %p111
    %p113 = scmp.ne.s32.totalorder %s104, %s105
    %p114 = scmp.eq.s32.totalorder %s21, 0
    %p115 = por %p113, %p114
    %p116 = scmp.ne.s32.totalorder %s104, %s105
    %p117 = scmp.eq.s32.totalorder %s22, 1
    %p118 = por %p116, %p117
    %p120 = scmp.ne.s32.totalorder %s105, %s119
    %p121 = scmp.eq.s32.totalorder %s22, 0
    %p122 = por %p120, %p121
    %s124 = sadd.s32 %s123, 1
    %p127 = scmp.eq.s32.totalorder %s16, 1
    %p128 = scmp.ne.s32.totalorder %s123, %s125
    %p129 = scmp.eq.s32.totalorder %s16, 0
    %p130 = por %p128, %p129
    %p131 = scmp.ne.s32.totalorder %s123, %s125
    %p132 = scmp.eq.s32.totalorder %s21, 1
    %p133 = por %p131, %p132
    %p134 = scmp.ne.s32.totalorder %s125, %s126
    %p135 = scmp.eq.s32.totalorder %s21, 0
    %p136 = por %p134, %p135
    %p137 = scmp.ne.s32.totalorder %s125, %s126
    %p138 = scmp.eq.s32.totalorder %s22, 1
    %p139 = por %p137, %p138
    %p141 = scmp.ne.s32.totalorder %s126, %s140
    %p142 = scmp.eq.s32.totalorder %s22, 0
    %p143 = por %p141, %p142
    %s145 = sadd.s32 %s144, 1
    %p148 = scmp.eq.s32.totalorder %s16, 1
    %p149 = scmp.ne.s32.totalorder %s144, %s146
    %p150 = scmp.eq.s32.totalorder %s16, 0
    %p151 = por %p149, %p150
    %p152 = scmp.ne.s32.totalorder %s144, %s146
    %p153 = scmp.eq.s32.totalorder %s21, 1
    %p154 = por %p152, %p153
    %p155 = scmp.ne.s32.totalorder %s146, %s147
    %p156 = scmp.eq.s32.totalorder %s21, 0
    %p157 = por %p155, %p156
    %p158 = scmp.ne.s32.totalorder %s146, %s147
    %p159 = scmp.eq.s32.totalorder %s22, 1
    %p160 = por %p158, %p159
    %p162 = scmp.ne.s32.totalorder %s147, %s161
    %p163 = scmp.eq.s32.totalorder %s22, 0
    %p164 = por %p162, %p163
    %s166 = sadd.s32 %s165, 1
    %p169 = scmp.eq.s32.totalorder %s16, 1
    %p170 = scmp.ne.s32.totalorder %s165, %s167
    %p171 = scmp.eq.s32.totalorder %s16, 0
    %p172 = por %p170, %p171
    %p173 = scmp.ne.s32.totalorder %s165, %s167
    %p174 = scmp.eq.s32.totalorder %s21, 1
    %p175 = por %p173, %p174
    %p176 = scmp.ne.s32.totalorder %s167, %s168
    %p177 = scmp.eq.s32.totalorder %s21, 0
    %p178 = por %p176, %p177
    %p179 = scmp.ne.s32.totalorder %s167, %s168
    %p180 = scmp.eq.s32.totalorder %s22, 1
    %p181 = por %p179, %p180
    %p183 = scmp.ne.s32.totalorder %s168, %s182
    %p184 = scmp.eq.s32.totalorder %s22, 0
    %p185 = por %p183, %p184
    %s187 = sadd.s32 %s186, 1
    %p190 = scmp.eq.s32.totalorder %s16, 1
    %p191 = scmp.ne.s32.totalorder %s186, %s188
    %p192 = scmp.eq.s32.totalorder %s16, 0
    %p193 = por %p191, %p192
    %p194 = scmp.ne.s32.totalorder %s186, %s188
    %p195 = scmp.eq.s32.totalorder %s21, 1
    %p196 = por %p194, %p195
    %p197 = scmp.ne.s32.totalorder %s188, %s189
    %p198 = scmp.eq.s32.totalorder %s21, 0
    %p199 = por %p197, %p198
    %p200 = scmp.ne.s32.totalorder %s188, %s189
    %p201 = scmp.eq.s32.totalorder %s22, 1
    %p202 = por %p200, %p201
    %p204 = scmp.ne.s32.totalorder %s189, %s203
    %p205 = scmp.eq.s32.totalorder %s22, 0
    %p206 = por %p204, %p205
    %s207 = ssub.s32 %s16, %s23
    %p208 = scmp.eq.s32.totalorder %s207, 0
    %s210 = sadd.s32 %s209, 1
    %s211 = scalar_select %p208, %s209, %s210
    %p214 = pneg %p208
    %p215 = scmp.eq.s32.totalorder %s16, 1
    %p216 = por %p214, %p215
    %p217 = scmp.ne.s32.totalorder %s209, %s212
    %p218 = scmp.eq.s32.totalorder %s16, 0
    %p219 = por %p217, %p218
    %p220 = scmp.ne.s32.totalorder %s209, %s212
    %p221 = scmp.eq.s32.totalorder %s21, 1
    %p222 = por %p220, %p221
    %p223 = scmp.ne.s32.totalorder %s212, %s213
    %p224 = scmp.eq.s32.totalorder %s21, 0
    %p225 = por %p223, %p224
    %p226 = scmp.ne.s32.totalorder %s212, %s213
    %p227 = scmp.eq.s32.totalorder %s22, 1
    %p228 = por %p226, %p227
    %p230 = scmp.ne.s32.totalorder %s213, %s229
    %p231 = scmp.eq.s32.totalorder %s22, 0
    %p232 = por %p230, %p231
    %s233 = ssub.s32 %s16, %s23
    %p234 = scmp.eq.s32.totalorder %s233, 0
    %s236 = sadd.s32 %s235, 1
    %s237 = scalar_select %p234, %s235, %s236
    %p240 = pneg %p234
    %p241 = scmp.eq.s32.totalorder %s16, 1
    %p242 = por %p240, %p241
    %p243 = scmp.ne.s32.totalorder %s235, %s238
    %p244 = scmp.eq.s32.totalorder %s16, 0
    %p245 = por %p243, %p244
    %p246 = scmp.ne.s32.totalorder %s235, %s238
    %p247 = scmp.eq.s32.totalorder %s21, 1
    %p248 = por %p246, %p247
    %p249 = scmp.ne.s32.totalorder %s238, %s239
    %p250 = scmp.eq.s32.totalorder %s21, 0
    %p251 = por %p249, %p250
    %p252 = scmp.ne.s32.totalorder %s238, %s239
    %p253 = scmp.eq.s32.totalorder %s22, 1
    %p254 = por %p252, %p253
    %p256 = scmp.ne.s32.totalorder %s239, %s255
    %p257 = scmp.eq.s32.totalorder %s22, 0
    %p258 = por %p256, %p257
    %p259 = scmp.le.s32.totalorder 1, %s16
    %p260 = scmp.lt.s32.totalorder %s16, 3
    %p261 = pnand %p259, %p260
    %p262 = pneg %p261
    // Predicated region
    $region9: #{attention_forward_batched.1} parent=5 // pred_check
      _
    $region10: #{attention_forward_batched.1} parent=5 // pred_check_branch
      %264 = sbr.rel (%p261) target = $region12
    $region11: #{attention_forward_batched.1} parent=5 // pred_region
      %s265 = ssub.s32 %s16, 1
      // Predicated region
      $region13: #{attention_forward_batched.1} parent=11 // pred_check
        %p266 = pneg %p115
      $region14: #{attention_forward_batched.1} parent=11 // pred_check_branch
        %268 = sbr.rel (%p266) target = $region16
      $region15: #{attention_forward_batched.1} parent=11 // pred_region
        _
      $region16: #{attention_forward_batched.1} parent=11 // pred_fallthru
        _
      // Predicated region
      $region17: #{attention_forward_batched.1} parent=11 // pred_check
        %p269 = pneg %p136
      $region18: #{attention_forward_batched.1} parent=11 // pred_check_branch
        %271 = sbr.rel (%p269) target = $region20
      $region19: #{attention_forward_batched.1} parent=11 // pred_region
        _
      $region20: #{attention_forward_batched.1} parent=11 // pred_fallthru
        _
      // Predicated region
      $region21: #{attention_forward_batched.1} parent=11 // pred_check
        %p272 = pneg %p157
      $region22: #{attention_forward_batched.1} parent=11 // pred_check_branch
        %274 = sbr.rel (%p272) target = $region24
      $region23: #{attention_forward_batched.1} parent=11 // pred_region
        _
      $region24: #{attention_forward_batched.1} parent=11 // pred_fallthru
        _
      // Predicated region
      $region25: #{attention_forward_batched.1} parent=11 // pred_check
        %p275 = pneg %p178
      $region26: #{attention_forward_batched.1} parent=11 // pred_check_branch
        %277 = sbr.rel (%p275) target = $region28
      $region27: #{attention_forward_batched.1} parent=11 // pred_region
        _
      $region28: #{attention_forward_batched.1} parent=11 // pred_fallthru
        _
      // Predicated region
      $region29: #{attention_forward_batched.1} parent=11 // pred_check
        %p278 = pneg %p199
      $region30: #{attention_forward_batched.1} parent=11 // pred_check_branch
        %280 = sbr.rel (%p278) target = $region32
      $region31: #{attention_forward_batched.1} parent=11 // pred_region
        _
      $region32: #{attention_forward_batched.1} parent=11 // pred_fallthru
        _
    $region12: #{attention_forward_batched.1} parent=5 // pred_fallthru
      _
    %p281 = scmp.lt.s32.totalorder %s16, 2
    // Predicated region
    $region33: #{attention_forward_batched.1} parent=5 // pred_check
      %p282 = pneg %p281
    $region34: #{attention_forward_batched.1} parent=5 // pred_check_branch
      %284 = sbr.rel (%p282) target = $region36
    $region35: #{attention_forward_batched.1} parent=5 // pred_region
      // Predicated region
      $region37: #{attention_forward_batched.1} parent=35 // pred_check
        %p285 = pneg %p36
      $region38: #{attention_forward_batched.1} parent=35 // pred_check_branch
        %287 = sbr.rel (%p285) target = $region40
      $region39: #{attention_forward_batched.1} parent=35 // pred_region
        %s288 = smul.u32 32, %s16
        %p289 = scmp.lt.s32.totalorder %s288, 63
        %s290 = scalar_select %p289, %s288, 63
        %s291 = smul.addr %s290, 8
        %s292 = scalar_lea.vmem %s0, %s291
        %s293 = smul.u32 32, %s16
      $region40: #{attention_forward_batched.1} parent=35 // pred_fallthru
        _
      // Predicated region
      $region41: #{attention_forward_batched.1} parent=35 // pred_check
        %p294 = pneg %p62
      $region42: #{attention_forward_batched.1} parent=35 // pred_check_branch
        %296 = sbr.rel (%p294) target = $region44
      $region43: #{attention_forward_batched.1} parent=35 // pred_region
        %s297 = smul.u32 4, %s16
        %p298 = scmp.lt.s32.totalorder %s297, 7
        %s299 = scalar_select %p298, %s297, 7
        %s300 = smul.addr %s299, 8
        %s301 = scalar_lea.vmem %s1, %s300
        %s302 = smul.u32 4, %s16
      $region44: #{attention_forward_batched.1} parent=35 // pred_fallthru
        _
      // Predicated region
      $region45: #{attention_forward_batched.1} parent=35 // pred_check
        %p303 = pneg %p88
      $region46: #{attention_forward_batched.1} parent=35 // pred_check_branch
        %305 = sbr.rel (%p303) target = $region48
      $region47: #{attention_forward_batched.1} parent=35 // pred_region
        %s306 = smul.u32 32, %s16
        %p307 = scmp.lt.s32.totalorder %s306, 63
        %s308 = scalar_select %p307, %s306, 63
        %s309 = smul.addr %s308, 8
        %s310 = scalar_lea.vmem %s2, %s309
        %s311 = smul.u32 32, %s16
      $region48: #{attention_forward_batched.1} parent=35 // pred_fallthru
        _
    $region36: #{attention_forward_batched.1} parent=5 // pred_fallthru
      _
    %p312 = scmp.le.s32.totalorder 1, %s16
    %p313 = scmp.lt.s32.totalorder %s16, 3
    %p314 = pnand %p312, %p313
    %p315 = pneg %p314
    // Predicated region
    $region49: #{attention_forward_batched.1} parent=5 // pred_check
      _
    $region50: #{attention_forward_batched.1} parent=5 // pred_check_branch
      %317 = sbr.rel (%p314) target = $region52
    $region51: #{attention_forward_batched.1} parent=5 // pred_region
      %s318 = ssub.s32 %s16, 1
      %s319 = smul.u32 32, %s21
      %p320 = scmp.lt.s32.totalorder %s319, 63
      %s321 = scalar_select %p320, %s319, 63
      %s322 = smul.addr %s321, 8
      %s323 = scalar_lea.vmem %s0, %s322
      %p324 = pneg %p42
      %p325 = pneg %p39
      %s326 = smul.u32 4, %s21
      %p327 = scmp.lt.s32.totalorder %s326, 7
      %s328 = scalar_select %p327, %s326, 7
      %s329 = smul.addr %s328, 8
      %s330 = scalar_lea.vmem %s1, %s329
      %p331 = pneg %p68
      %p332 = pneg %p65
      %s333 = smul.u32 32, %s21
      %p334 = scmp.lt.s32.totalorder %s333, 63
      %s335 = scalar_select %p334, %s333, 63
      %s336 = smul.addr %s335, 8
      %s337 = scalar_lea.vmem %s2, %s336
      %p338 = pneg %p94
      %p339 = pneg %p91
      %p340 = pneg %p115
      %p341 = pneg %p112
      %p342 = pneg %p136
      %p343 = pneg %p133
      %p344 = pneg %p157
      %p345 = pneg %p154
      %p346 = pneg %p178
      %p347 = pneg %p175
      %p348 = pneg %p199
      %p349 = pneg %p196
      %p350 = pneg %p225
      %p351 = pneg %p222
      %s352 = smul.u32 4, %s21
      %p353 = scmp.lt.s32.totalorder %s352, 7
      %s354 = scalar_select %p353, %s352, 7
      %s355 = smul.addr %s354, 8
      %s356 = scalar_lea.vmem %s8, %s355
      %p357 = pneg %p251
      %p358 = pneg %p248
      %s359 = smul.u32 32, %s21
      %p360 = scmp.lt.s32.totalorder %s359, 63
      %s361 = scalar_select %p360, %s359, 63
      %s362 = smul.addr %s361, 8
      %s363 = scalar_lea.vmem %s9, %s362
      %s364 = smul.u32 32, %s21
      %p365 = scmp.lt.s32.totalorder %s364, 63
      %s366 = scalar_select %p365, %s364, 63
      %s367 = smul.addr %s366, 8
      %s368 = scalar_lea.vmem %s0, %s367
      %s369 = smul.u32 32, %s21
      %s370 = smul.u32 4, %s21
      %p371 = scmp.lt.s32.totalorder %s370, 7
      %s372 = scalar_select %p371, %s370, 7
      %s373 = smul.addr %s372, 8
      %s374 = scalar_lea.vmem %s1, %s373
      %s375 = smul.u32 4, %s21
      %s376 = smul.u32 32, %s21
      %p377 = scmp.lt.s32.totalorder %s376, 63
      %s378 = scalar_select %p377, %s376, 63
      %s379 = smul.addr %s378, 8
      %s380 = scalar_lea.vmem %s2, %s379
      %s381 = smul.u32 32, %s21
      %s382 = smul.u32 4, %s21
      %p383 = scmp.lt.s32.totalorder %s382, 7
      %s384 = scalar_select %p383, %s382, 7
      %s385 = smul.addr %s384, 8
      %s386 = scalar_lea.vmem %s8, %s385
      %s387 = smul.u32 4, %s21
      %s388 = smul.u32 32, %s21
      %p389 = scmp.lt.s32.totalorder %s388, 63
      %s390 = scalar_select %p389, %s388, 63
      %s391 = smul.addr %s390, 8
      %s392 = scalar_lea.vmem %s9, %s391
      %s393 = smul.u32 32, %s21
      %v394 = vld [vmem:[%s368] sm:$0xff]
      %v395 = vld [vmem:[%s368 + $0x8] sm:$0xff]
      %v396 = vld [vmem:[%s368 + $0x10] sm:$0xff]
      %v397 = vld [vmem:[%s368 + $0x18] sm:$0xff]
      %v398 = vld [vmem:[%s368 + $0x20] sm:$0xff]
      %v399 = vld [vmem:[%s368 + $0x28] sm:$0xff]
      %v400 = vld [vmem:[%s368 + $0x30] sm:$0xff]
      %v401 = vld [vmem:[%s368 + $0x38] sm:$0xff]
      %v402 = vld [vmem:[%s368 + $0x40] sm:$0xff]
      %v403 = vld [vmem:[%s368 + $0x48] sm:$0xff]
      %v404 = vld [vmem:[%s368 + $0x50] sm:$0xff]
      %v405 = vld [vmem:[%s368 + $0x58] sm:$0xff]
      %v406 = vld [vmem:[%s368 + $0x60] sm:$0xff]
      %v407 = vld [vmem:[%s368 + $0x68] sm:$0xff]
      %v408 = vld [vmem:[%s368 + $0x70] sm:$0xff]
      %v409 = vld [vmem:[%s368 + $0x78] sm:$0xff]
      %v410 = vld [vmem:[%s368 + $0x80] sm:$0xff]
      %v411 = vld [vmem:[%s368 + $0x88] sm:$0xff]
      %v412 = vld [vmem:[%s368 + $0x90] sm:$0xff]
      %v413 = vld [vmem:[%s368 + $0x98] sm:$0xff]
      %v414 = vld [vmem:[%s368 + $0xa0] sm:$0xff]
      %v415 = vld [vmem:[%s368 + $0xa8] sm:$0xff]
      %v416 = vld [vmem:[%s368 + $0xb0] sm:$0xff]
      %v417 = vld [vmem:[%s368 + $0xb8] sm:$0xff]
      %v418 = vld [vmem:[%s368 + $0xc0] sm:$0xff]
      %v419 = vld [vmem:[%s368 + $0xc8] sm:$0xff]
      %v420 = vld [vmem:[%s368 + $0xd0] sm:$0xff]
      %v421 = vld [vmem:[%s368 + $0xd8] sm:$0xff]
      %v422 = vld [vmem:[%s368 + $0xe0] sm:$0xff]
      %v423 = vld [vmem:[%s368 + $0xe8] sm:$0xff]
      %v424 = vld [vmem:[%s368 + $0xf0] sm:$0xff]
      %v425 = vld [vmem:[%s368 + $0xf8] sm:$0xff]
      %v426 = vld [vmem:[%s374] sm:$0xff]
      %v427 = vld [vmem:[%s374 + $0x8] sm:$0xff]
      %v428 = vld [vmem:[%s374 + $0x10] sm:$0xff]
      %v429 = vld [vmem:[%s374 + $0x18] sm:$0xff]
      %v430 = vld [vmem:[%s3] sm:$0xff]
      %v431 = vld [vmem:[%s3 + $0x8] sm:$0xff]
      %v432 = vld [vmem:[%s3 + $0x10] sm:$0xff]
      %v433 = vld [vmem:[%s3 + $0x18] sm:$0xff]
      %vm434 = vcmask 261120
      %v436 = vsel %vm434, %v394, 0
      %v439 = vsel %vm434, %v395, 0
      %v442 = vsel %vm434, %v396, 0
      %v445 = vsel %vm434, %v397, 0
      %v448 = vsel %vm434, %v398, 0
      %v451 = vsel %vm434, %v399, 0
      %v454 = vsel %vm434, %v400, 0
      %v457 = vsel %vm434, %v401, 0
      %v460 = vsel %vm434, %v402, 0
      %v463 = vsel %vm434, %v403, 0
      %v466 = vsel %vm434, %v404, 0
      %v469 = vsel %vm434, %v405, 0
      %v472 = vsel %vm434, %v406, 0
      %v475 = vsel %vm434, %v407, 0
      %v478 = vsel %vm434, %v408, 0
      %v481 = vsel %vm434, %v409, 0
      %v484 = vsel %vm434, %v410, 0
      %v487 = vsel %vm434, %v411, 0
      %v490 = vsel %vm434, %v412, 0
      %v493 = vsel %vm434, %v413, 0
      %v496 = vsel %vm434, %v414, 0
      %v499 = vsel %vm434, %v415, 0
      %v502 = vsel %vm434, %v416, 0
      %v505 = vsel %vm434, %v417, 0
      %v508 = vsel %vm434, %v418, 0
      %v511 = vsel %vm434, %v419, 0
      %v514 = vsel %vm434, %v420, 0
      %v517 = vsel %vm434, %v421, 0
      %v520 = vsel %vm434, %v422, 0
      %v523 = vsel %vm434, %v423, 0
      %v526 = vsel %vm434, %v424, 0
      %v529 = vsel %vm434, %v425, 0
      %531 = vmatprep.subr.mxu0 0.0
      %532 = vmatpush1.msra.mxu0 %v430
      %533 = vmatprep.subr.mxu0 0.0
      %534 = vmatpush1.msra.mxu0 %v431
      %535 = vmatprep.subr.mxu0 0.0
      %536 = vmatpush1.msra.mxu0 %v432
      %537 = vmatprep.subr.mxu0 0.0
      %538 = vmatpush1.msra.mxu0 %v433
      %539 = vmatprep.subr.mxu0 0.0
      %540 = vmatpush1.msra.mxu0 0.0
      %541 = vmatprep.subr.mxu0 0.0
      %542 = vmatpush1.msra.mxu0 0.0
      %543 = vmatprep.subr.mxu0 0.0
      %544 = vmatpush1.msra.mxu0 0.0
      %545 = vmatprep.subr.mxu0 0.0
      %546 = vmatpush1.msra.mxu0 0.0
      %547 = vmatprep.subr.mxu0 0.0
      %548 = vmatpush1.msra.mxu0 0.0
      %549 = vmatprep.subr.mxu0 0.0
      %550 = vmatpush1.msra.mxu0 0.0
      %551 = vmatprep.subr.mxu0 0.0
      %552 = vmatpush1.msra.mxu0 0.0
      %553 = vmatprep.subr.mxu0 0.0
      %554 = vmatpush1.msra.mxu0 0.0
      %555 = vmatprep.subr.mxu0 0.0
      %556 = vmatpush1.msra.mxu0 0.0
      %557 = vmatprep.subr.mxu0 0.0
      %558 = vmatpush1.msra.mxu0 0.0
      %559 = vmatprep.subr.mxu0 0.0
      %560 = vmatpush1.msra.mxu0 0.0
      %561 = vmatprep.subr.mxu0 0.0
      %562 = vmatpush1.msra.mxu0 0.0
      %563 = vmatprep.subr.mxu0 0.0
      %564 = vmatpush1.msra.mxu0 0.0
      %565 = vmatprep.subr.mxu0 0.0
      %566 = vmatpush1.msra.mxu0 0.0
      %567 = vmatprep.subr.mxu0 0.0
      %568 = vmatpush1.msra.mxu0 0.0
      %569 = vmatprep.subr.mxu0 0.0
      %570 = vmatpush1.msra.mxu0 0.0
      %571 = vmatprep.subr.mxu0 0.0
      %572 = vmatpush1.msra.mxu0 0.0
      %573 = vmatprep.subr.mxu0 0.0
      %574 = vmatpush1.msra.mxu0 0.0
      %575 = vmatprep.subr.mxu0 0.0
      %576 = vmatpush1.msra.mxu0 0.0
      %577 = vmatprep.subr.mxu0 0.0
      %578 = vmatpush1.msra.mxu0 0.0
      %579 = vmatprep.subr.mxu0 0.0
      %580 = vmatpush1.msra.mxu0 0.0
      %581 = vmatprep.subr.mxu0 0.0
      %582 = vmatpush1.msra.mxu0 0.0
      %583 = vmatprep.subr.mxu0 0.0
      %584 = vmatpush1.msra.mxu0 0.0
      %585 = vmatprep.subr.mxu0 0.0
      %586 = vmatpush1.msra.mxu0 0.0
      %587 = vmatprep.subr.mxu0 0.0
      %588 = vmatpush1.msra.mxu0 0.0
      %589 = vmatprep.subr.mxu0 0.0
      %590 = vmatpush1.msra.mxu0 0.0
      %591 = vmatprep.subr.mxu0 0.0
      %592 = vmatpush1.msra.mxu0 0.0
      %593 = vmatprep.subr.mxu0 0.0
      %594 = vmatpush1.msra.mxu0 0.0
      %595 = vmatprep.mubr.f32.mxu0 0.0
      %596 = vmatmul.mubr.f32.gmra.mrb[0].mxu0 %v436
      %v597 = vpop.f32.mrb[0].mxu0
      %v598 = vadd.f32 0.0, %v597
      %v599 = vpop.f32.mrb[0].mxu0
      %600 = vmatprep.mubr.f32.mxu0 0.0
      %601 = vmatmul.mubr.f32.gmra.mrb[0].mxu0 %v439
      %v602 = vpop.f32.mrb[0].mxu0
      %v603 = vadd.f32 0.0, %v602
      %v604 = vpop.f32.mrb[0].mxu0
      %605 = vmatprep.mubr.f32.mxu0 0.0
      %606 = vmatmul.mubr.f32.gmra.mrb[0].mxu0 %v442
      %v607 = vpop.f32.mrb[0].mxu0
      %v608 = vadd.f32 0.0, %v607
      %v609 = vpop.f32.mrb[0].mxu0
      %610 = vmatprep.mubr.f32.mxu0 0.0
      %611 = vmatmul.mubr.f32.gmra.mrb[0].mxu0 %v445
      %v612 = vpop.f32.mrb[0].mxu0
      %v613 = vadd.f32 0.0, %v612
      %v614 = vpop.f32.mrb[0].mxu0
      %615 = vmatprep.mubr.f32.mxu0 0.0
      %616 = vmatmul.mubr.f32.gmra.mrb[0].mxu0 %v448
      %v617 = vpop.f32.mrb[0].mxu0
      %v618 = vadd.f32 0.0, %v617
      %v619 = vpop.f32.mrb[0].mxu0
      %620 = vmatprep.mubr.f32.mxu0 0.0
      %621 = vmatmul.mubr.f32.gmra.mrb[0].mxu0 %v451
      %v622 = vpop.f32.mrb[0].mxu0
      %v623 = vadd.f32 0.0, %v622
      %v624 = vpop.f32.mrb[0].mxu0
      %625 = vmatprep.mubr.f32.mxu0 0.0
      %626 = vmatmul.mubr.f32.gmra.mrb[0].mxu0 %v454
      %v627 = vpop.f32.mrb[0].mxu0
      %v628 = vadd.f32 0.0, %v627
      %v629 = vpop.f32.mrb[0].mxu0
      %630 = vmatprep.mubr.f32.mxu0 0.0
      %631 = vmatmul.mubr.f32.gmra.mrb[0].mxu0 %v457
      %v632 = vpop.f32.mrb[0].mxu0
      %v633 = vadd.f32 0.0, %v632
      %v634 = vpop.f32.mrb[0].mxu0
      %635 = vmatprep.mubr.f32.mxu0 0.0
      %636 = vmatmul.mubr.f32.gmra.mrb[0].mxu0 %v460
      %v637 = vpop.f32.mrb[0].mxu0
      %v638 = vadd.f32 0.0, %v637
      %v639 = vpop.f32.mrb[0].mxu0
      %640 = vmatprep.mubr.f32.mxu0 0.0
      %641 = vmatmul.mubr.f32.gmra.mrb[0].mxu0 %v463
      %v642 = vpop.f32.mrb[0].mxu0
      %v643 = vadd.f32 0.0, %v642
      %v644 = vpop.f32.mrb[0].mxu0
      %645 = vmatprep.mubr.f32.mxu0 0.0
      %646 = vmatmul.mubr.f32.gmra.mrb[0].mxu0 %v466
      %v647 = vpop.f32.mrb[0].mxu0
      %v648 = vadd.f32 0.0, %v647
      %v649 = vpop.f32.mrb[0].mxu0
      %650 = vmatprep.mubr.f32.mxu0 0.0
      %651 = vmatmul.mubr.f32.gmra.mrb[0].mxu0 %v469
      %v652 = vpop.f32.mrb[0].mxu0
      %v653 = vadd.f32 0.0, %v652
      %v654 = vpop.f32.mrb[0].mxu0
      %655 = vmatprep.mubr.f32.mxu0 0.0
      %656 = vmatmul.mubr.f32.gmra.mrb[0].mxu0 %v472
      %v657 = vpop.f32.mrb[0].mxu0
      %v658 = vadd.f32 0.0, %v657
      %v659 = vpop.f32.mrb[0].mxu0
      %660 = vmatprep.mubr.f32.mxu0 0.0
      %661 = vmatmul.mubr.f32.gmra.mrb[0].mxu0 %v475
      %v662 = vpop.f32.mrb[0].mxu0
      %v663 = vadd.f32 0.0, %v662
      %v664 = vpop.f32.mrb[0].mxu0
      %665 = vmatprep.mubr.f32.mxu0 0.0
      %666 = vmatmul.mubr.f32.gmra.mrb[0].mxu0 %v478
      %v667 = vpop.f32.mrb[0].mxu0
      %v668 = vadd.f32 0.0, %v667
      %v669 = vpop.f32.mrb[0].mxu0
      %670 = vmatprep.mubr.f32.mxu0 0.0
      %671 = vmatmul.mubr.f32.gmra.mrb[0].mxu0 %v481
      %v672 = vpop.f32.mrb[0].mxu0
      %v673 = vadd.f32 0.0, %v672
      %v674 = vpop.f32.mrb[0].mxu0
      %675 = vmatprep.mubr.f32.mxu0 0.0
      %676 = vmatmul.mubr.f32.gmra.mrb[0].mxu0 %v484
      %v677 = vpop.f32.mrb[0].mxu0
      %v678 = vadd.f32 0.0, %v677
      %v679 = vpop.f32.mrb[0].mxu0
      %680 = vmatprep.mubr.f32.mxu0 0.0
      %681 = vmatmul.mubr.f32.gmra.mrb[0].mxu0 %v487
      %v682 = vpop.f32.mrb[0].mxu0
      %v683 = vadd.f32 0.0, %v682
      %v684 = vpop.f32.mrb[0].mxu0
      %685 = vmatprep.mubr.f32.mxu0 0.0
      %686 = vmatmul.mubr.f32.gmra.mrb[0].mxu0 %v490
      %v687 = vpop.f32.mrb[0].mxu0
      %v688 = vadd.f32 0.0, %v687
      %v689 = vpop.f32.mrb[0].mxu0
      %690 = vmatprep.mubr.f32.mxu0 0.0
      %691 = vmatmul.mubr.f32.gmra.mrb[0].mxu0 %v493
      %v692 = vpop.f32.mrb[0].mxu0
      %v693 = vadd.f32 0.0, %v692
      %v694 = vpop.f32.mrb[0].mxu0
      %695 = vmatprep.mubr.f32.mxu0 0.0
      %696 = vmatmul.mubr.f32.gmra.mrb[0].mxu0 %v496
      %v697 = vpop.f32.mrb[0].mxu0
      %v698 = vadd.f32 0.0, %v697
      %v699 = vpop.f32.mrb[0].mxu0
      %700 = vmatprep.mubr.f32.mxu0 0.0
      %701 = vmatmul.mubr.f32.gmra.mrb[0].mxu0 %v499
      %v702 = vpop.f32.mrb[0].mxu0
      %v703 = vadd.f32 0.0, %v702
      %v704 = vpop.f32.mrb[0].mxu0
      %705 = vmatprep.mubr.f32.mxu0 0.0
      %706 = vmatmul.mubr.f32.gmra.mrb[0].mxu0 %v502
      %v707 = vpop.f32.mrb[0].mxu0
      %v708 = vadd.f32 0.0, %v707
      %v709 = vpop.f32.mrb[0].mxu0
      %710 = vmatprep.mubr.f32.mxu0 0.0
      %711 = vmatmul.mubr.f32.gmra.mrb[0].mxu0 %v505
      %v712 = vpop.f32.mrb[0].mxu0
      %v713 = vadd.f32 0.0, %v712
      %v714 = vpop.f32.mrb[0].mxu0
      %715 = vmatprep.mubr.f32.mxu0 0.0
      %716 = vmatmul.mubr.f32.gmra.mrb[0].mxu0 %v508
      %v717 = vpop.f32.mrb[0].mxu0
      %v718 = vadd.f32 0.0, %v717
      %v719 = vpop.f32.mrb[0].mxu0
      %720 = vmatprep.mubr.f32.mxu0 0.0
      %721 = vmatmul.mubr.f32.gmra.mrb[0].mxu0 %v511
      %v722 = vpop.f32.mrb[0].mxu0
      %v723 = vadd.f32 0.0, %v722
      %v724 = vpop.f32.mrb[0].mxu0
      %725 = vmatprep.mubr.f32.mxu0 0.0
      %726 = vmatmul.mubr.f32.gmra.mrb[0].mxu0 %v514
      %v727 = vpop.f32.mrb[0].mxu0
      %v728 = vadd.f32 0.0, %v727
      %v729 = vpop.f32.mrb[0].mxu0
      %730 = vmatprep.mubr.f32.mxu0 0.0
      %731 = vmatmul.mubr.f32.gmra.mrb[0].mxu0 %v517
      %v732 = vpop.f32.mrb[0].mxu0
      %v733 = vadd.f32 0.0, %v732
      %v734 = vpop.f32.mrb[0].mxu0
      %735 = vmatprep.mubr.f32.mxu0 0.0
      %736 = vmatmul.mubr.f32.gmra.mrb[0].mxu0 %v520
      %v737 = vpop.f32.mrb[0].mxu0
      %v738 = vadd.f32 0.0, %v737
      %v739 = vpop.f32.mrb[0].mxu0
      %740 = vmatprep.mubr.f32.mxu0 0.0
      %741 = vmatmul.mubr.f32.gmra.mrb[0].mxu0 %v523
      %v742 = vpop.f32.mrb[0].mxu0
      %v743 = vadd.f32 0.0, %v742
      %v744 = vpop.f32.mrb[0].mxu0
      %745 = vmatprep.mubr.f32.mxu0 0.0
      %746 = vmatmul.mubr.f32.gmra.mrb[0].mxu0 %v526
      %v747 = vpop.f32.mrb[0].mxu0
      %v748 = vadd.f32 0.0, %v747
      %v749 = vpop.f32.mrb[0].mxu0
      %750 = vmatprep.mubr.f32.mxu0 0.0
      %751 = vmatmul.mubr.f32.gmra.mrb[0].mxu0 %v529
      %v752 = vpop.f32.mrb[0].mxu0
      %v753 = vadd.f32 0.0, %v752
      %v754 = vpop.f32.mrb[0].mxu0
      %755 = vdwg.mxu0
      %v756 = vld [vmem:[%s4] sm:$0xff]
      %v757 = vld [vmem:[%s4 + $0x8] sm:$0xff]
      %v758 = vld [vmem:[%s4 + $0x10] sm:$0xff]
      %v759 = vld [vmem:[%s4 + $0x18] sm:$0xff]
      %v761 = vsel %vm434, %v426, 0
      %v764 = vsel %vm434, %v427, 0
      %v767 = vsel %vm434, %v428, 0
      %v770 = vsel %vm434, %v429, 0
      %772 = vmatprep.subr.mxu0 0.0
      %773 = vmatpush1.msra.mxu0 %v756
      %774 = vmatprep.subr.mxu0 0.0
      %775 = vmatpush1.msra.mxu0 %v757
      %776 = vmatprep.subr.mxu0 0.0
      %777 = vmatpush1.msra.mxu0 %v758
      %778 = vmatprep.subr.mxu0 0.0
      %779 = vmatpush1.msra.mxu0 %v759
      %780 = vmatprep.subr.mxu0 0.0
      %781 = vmatpush1.msra.mxu0 0.0
      %782 = vmatprep.subr.mxu0 0.0
      %783 = vmatpush1.msra.mxu0 0.0
      %784 = vmatprep.subr.mxu0 0.0
      %785 = vmatpush1.msra.mxu0 0.0
      %786 = vmatprep.subr.mxu0 0.0
      %787 = vmatpush1.msra.mxu0 0.0
      %788 = vmatprep.subr.mxu0 0.0
      %789 = vmatpush1.msra.mxu0 0.0
      %790 = vmatprep.subr.mxu0 0.0
      %791 = vmatpush1.msra.mxu0 0.0
      %792 = vmatprep.subr.mxu0 0.0
      %793 = vmatpush1.msra.mxu0 0.0
      %794 = vmatprep.subr.mxu0 0.0
      %795 = vmatpush1.msra.mxu0 0.0
      %796 = vmatprep.subr.mxu0 0.0
      %797 = vmatpush1.msra.mxu0 0.0
      %798 = vmatprep.subr.mxu0 0.0
      %799 = vmatpush1.msra.mxu0 0.0
      %800 = vmatprep.subr.mxu0 0.0
      %801 = vmatpush1.msra.mxu0 0.0
      %802 = vmatprep.subr.mxu0 0.0
      %803 = vmatpush1.msra.mxu0 0.0
      %804 = vmatprep.subr.mxu0 0.0
      %805 = vmatpush1.msra.mxu0 0.0
      %806 = vmatprep.subr.mxu0 0.0
      %807 = vmatpush1.msra.mxu0 0.0
      %808 = vmatprep.subr.mxu0 0.0
      %809 = vmatpush1.msra.mxu0 0.0
      %810 = vmatprep.subr.mxu0 0.0
      %811 = vmatpush1.msra.mxu0 0.0
      %812 = vmatprep.subr.mxu0 0.0
      %813 = vmatpush1.msra.mxu0 0.0
      %814 = vmatprep.subr.mxu0 0.0
      %815 = vmatpush1.msra.mxu0 0.0
      %816 = vmatprep.subr.mxu0 0.0
      %817 = vmatpush1.msra.mxu0 0.0
      %818 = vmatprep.subr.mxu0 0.0
      %819 = vmatpush1.msra.mxu0 0.0
      %820 = vmatprep.subr.mxu0 0.0
      %821 = vmatpush1.msra.mxu0 0.0
      %822 = vmatprep.subr.mxu0 0.0
      %823 = vmatpush1.msra.mxu0 0.0
      %824 = vmatprep.subr.mxu0 0.0
      %825 = vmatpush1.msra.mxu0 0.0
      %826 = vmatprep.subr.mxu0 0.0
      %827 = vmatpush1.msra.mxu0 0.0
      %828 = vmatprep.subr.mxu0 0.0
      %829 = vmatpush1.msra.mxu0 0.0
      %830 = vmatprep.subr.mxu0 0.0
      %831 = vmatpush1.msra.mxu0 0.0
      %832 = vmatprep.subr.mxu0 0.0
      %833 = vmatpush1.msra.mxu0 0.0
      %834 = vmatprep.subr.mxu0 0.0
      %835 = vmatpush1.msra.mxu0 0.0
      %836 = vmatprep.mubr.f32.mxu0 0.0
      %837 = vmatmul.mubr.f32.gmra.mrb[0].mxu0 %v761
      %v838 = vpop.f32.mrb[0].mxu0
      %v839 = vadd.f32 0.0, %v838
      %v840 = vpop.f32.mrb[0].mxu0
      %841 = vmatprep.mubr.f32.mxu0 0.0
      %842 = vmatmul.mubr.f32.gmra.mrb[0].mxu0 %v764
      %v843 = vpop.f32.mrb[0].mxu0
      %v844 = vadd.f32 0.0, %v843
      %v845 = vpop.f32.mrb[0].mxu0
      %846 = vmatprep.mubr.f32.mxu0 0.0
      %847 = vmatmul.mubr.f32.gmra.mrb[0].mxu0 %v767
      %v848 = vpop.f32.mrb[0].mxu0
      %v849 = vadd.f32 0.0, %v848
      %v850 = vpop.f32.mrb[0].mxu0
      %851 = vmatprep.mubr.f32.mxu0 0.0
      %852 = vmatmul.mubr.f32.gmra.mrb[0].mxu0 %v770
      %v853 = vpop.f32.mrb[0].mxu0
      %v854 = vadd.f32 0.0, %v853
      %v855 = vpop.f32.mrb[0].mxu0
      %856 = vdwg.mxu0
      %v861 = vcombine.high %v839, %v839
      %v863 = vunpack.c.l.s4 1966171168
      %v864 = vunpack.c.0.s8 %v863
      %v865 = vlaneseq
      %v866 = vshrl.u32 %v865, 7
      %v867 = vsub.s32 %v864, %v866
      %v868 = vrot.slane %v839, %v867
      %v870 = vunpack.c.l.s4 1966171168
      %v871 = vunpack.c.0.s8 %v870
      %v872 = vlaneseq
      %v873 = vshrl.u32 %v872, 7
      %v874 = vsub.s32 %v871, %v873
      %v875 = vrot.slane %v861, %v874
      %v876 = vcombine.high %v868, %v868
      %v877 = vcombine.high %v875, %v875
      %v879 = vunpack.c.l.s4 1966171168
      %v880 = vunpack.c.0.s8 %v879
      %v881 = vlaneseq
      %v882 = vshrl.u32 %v881, 7
      %v883 = vsub.s32 %v880, %v882
      %v884 = vrot.slane %v868, %v883
      %v886 = vunpack.c.l.s4 1966171168
      %v887 = vunpack.c.0.s8 %v886
      %v888 = vlaneseq
      %v889 = vshrl.u32 %v888, 7
      %v890 = vsub.s32 %v887, %v889
      %v891 = vrot.slane %v875, %v890
      %v893 = vunpack.c.l.s4 1966171168
      %v894 = vunpack.c.0.s8 %v893
      %v895 = vlaneseq
      %v896 = vshrl.u32 %v895, 7
      %v897 = vsub.s32 %v894, %v896
      %v898 = vrot.slane %v876, %v897
      %v900 = vunpack.c.l.s4 1966171168
      %v901 = vunpack.c.0.s8 %v900
      %v902 = vlaneseq
      %v903 = vshrl.u32 %v902, 7
      %v904 = vsub.s32 %v901, %v903
      %v905 = vrot.slane %v877, %v904
      %v906 = vcombine.high %v884, %v884
      %v907 = vcombine.high %v891, %v891
      %v908 = vcombine.high %v898, %v898
      %v909 = vcombine.high %v905, %v905
      %v910 = vcombine.high %v844, %v844
      %v912 = vunpack.c.l.s4 1966171168
      %v913 = vunpack.c.0.s8 %v912
      %v914 = vlaneseq
      %v915 = vshrl.u32 %v914, 7
      %v916 = vsub.s32 %v913, %v915
      %v917 = vrot.slane %v844, %v916
      %v919 = vunpack.c.l.s4 1966171168
      %v920 = vunpack.c.0.s8 %v919
      %v921 = vlaneseq
      %v922 = vshrl.u32 %v921, 7
      %v923 = vsub.s32 %v920, %v922
      %v924 = vrot.slane %v910, %v923
      %v925 = vcombine.high %v917, %v917
      %v926 = vcombine.high %v924, %v924
      %v928 = vunpack.c.l.s4 1966171168
      %v929 = vunpack.c.0.s8 %v928
      %v930 = vlaneseq
      %v931 = vshrl.u32 %v930, 7
      %v932 = vsub.s32 %v929, %v931
      %v933 = vrot.slane %v917, %v932
      %v935 = vunpack.c.l.s4 1966171168
      %v936 = vunpack.c.0.s8 %v935
      %v937 = vlaneseq
      %v938 = vshrl.u32 %v937, 7
      %v939 = vsub.s32 %v936, %v938
      %v940 = vrot.slane %v924, %v939
      %v942 = vunpack.c.l.s4 1966171168
      %v943 = vunpack.c.0.s8 %v942
      %v944 = vlaneseq
      %v945 = vshrl.u32 %v944, 7
      %v946 = vsub.s32 %v943, %v945
      %v947 = vrot.slane %v925, %v946
      %v949 = vunpack.c.l.s4 1966171168
      %v950 = vunpack.c.0.s8 %v949
      %v951 = vlaneseq
      %v952 = vshrl.u32 %v951, 7
      %v953 = vsub.s32 %v950, %v952
      %v954 = vrot.slane %v926, %v953
      %v955 = vcombine.high %v933, %v933
      %v956 = vcombine.high %v940, %v940
      %v957 = vcombine.high %v947, %v947
      %v958 = vcombine.high %v954, %v954
      %v959 = vcombine.high %v849, %v849
      %v961 = vunpack.c.l.s4 1966171168
      %v962 = vunpack.c.0.s8 %v961
      %v963 = vlaneseq
      %v964 = vshrl.u32 %v963, 7
      %v965 = vsub.s32 %v962, %v964
      %v966 = vrot.slane %v849, %v965
      %v968 = vunpack.c.l.s4 1966171168
      %v969 = vunpack.c.0.s8 %v968
      %v970 = vlaneseq
      %v971 = vshrl.u32 %v970, 7
      %v972 = vsub.s32 %v969, %v971
      %v973 = vrot.slane %v959, %v972
      %v974 = vcombine.high %v966, %v966
      %v975 = vcombine.high %v973, %v973
      %v977 = vunpack.c.l.s4 1966171168
      %v978 = vunpack.c.0.s8 %v977
      %v979 = vlaneseq
      %v980 = vshrl.u32 %v979, 7
      %v981 = vsub.s32 %v978, %v980
      %v982 = vrot.slane %v966, %v981
      %v984 = vunpack.c.l.s4 1966171168
      %v985 = vunpack.c.0.s8 %v984
      %v986 = vlaneseq
      %v987 = vshrl.u32 %v986, 7
      %v988 = vsub.s32 %v985, %v987
      %v989 = vrot.slane %v973, %v988
      %v991 = vunpack.c.l.s4 1966171168
      %v992 = vunpack.c.0.s8 %v991
      %v993 = vlaneseq
      %v994 = vshrl.u32 %v993, 7
      %v995 = vsub.s32 %v992, %v994
      %v996 = vrot.slane %v974, %v995
      %v998 = vunpack.c.l.s4 1966171168
      %v999 = vunpack.c.0.s8 %v998
      %v1000 = vlaneseq
      %v1001 = vshrl.u32 %v1000, 7
      %v1002 = vsub.s32 %v999, %v1001
      %v1003 = vrot.slane %v975, %v1002
      %v1004 = vcombine.high %v982, %v982
      %v1005 = vcombine.high %v989, %v989
      %v1006 = vcombine.high %v996, %v996
      %v1007 = vcombine.high %v1003, %v1003
      %v1008 = vcombine.high %v854, %v854
      %v1010 = vunpack.c.l.s4 1966171168
      %v1011 = vunpack.c.0.s8 %v1010
      %v1012 = vlaneseq
      %v1013 = vshrl.u32 %v1012, 7
      %v1014 = vsub.s32 %v1011, %v1013
      %v1015 = vrot.slane %v854, %v1014
      %v1017 = vunpack.c.l.s4 1966171168
      %v1018 = vunpack.c.0.s8 %v1017
      %v1019 = vlaneseq
      %v1020 = vshrl.u32 %v1019, 7
      %v1021 = vsub.s32 %v1018, %v1020
      %v1022 = vrot.slane %v1008, %v1021
      %v1023 = vcombine.high %v1015, %v1015
      %v1024 = vcombine.high %v1022, %v1022
      %v1026 = vunpack.c.l.s4 1966171168
      %v1027 = vunpack.c.0.s8 %v1026
      %v1028 = vlaneseq
      %v1029 = vshrl.u32 %v1028, 7
      %v1030 = vsub.s32 %v1027, %v1029
      %v1031 = vrot.slane %v1015, %v1030
      %v1033 = vunpack.c.l.s4 1966171168
      %v1034 = vunpack.c.0.s8 %v1033
      %v1035 = vlaneseq
      %v1036 = vshrl.u32 %v1035, 7
      %v1037 = vsub.s32 %v1034, %v1036
      %v1038 = vrot.slane %v1022, %v1037
      %v1040 = vunpack.c.l.s4 1966171168
      %v1041 = vunpack.c.0.s8 %v1040
      %v1042 = vlaneseq
      %v1043 = vshrl.u32 %v1042, 7
      %v1044 = vsub.s32 %v1041, %v1043
      %v1045 = vrot.slane %v1023, %v1044
      %v1047 = vunpack.c.l.s4 1966171168
      %v1048 = vunpack.c.0.s8 %v1047
      %v1049 = vlaneseq
      %v1050 = vshrl.u32 %v1049, 7
      %v1051 = vsub.s32 %v1048, %v1050
      %v1052 = vrot.slane %v1024, %v1051
      %v1053 = vcombine.high %v1031, %v1031
      %v1054 = vcombine.high %v1038, %v1038
      %v1055 = vcombine.high %v1045, %v1045
      %v1056 = vcombine.high %v1052, %v1052
      %v1057 = vlaneseq
      %v1058 = vshrl.u32 %v1057, 7
      %v1059 = vsub.s32 0, %v1058
      %v1060 = vrot.slane %v884, %v1059
      %v1061 = vlaneseq
      %v1062 = vshrl.u32 %v1061, 7
      %v1063 = vsub.s32 0, %v1062
      %v1064 = vrot.slane %v898, %v1063
      %v1065 = vlaneseq
      %v1066 = vshrl.u32 %v1065, 7
      %v1067 = vsub.s32 0, %v1066
      %v1068 = vrot.slane %v906, %v1067
      %v1069 = vlaneseq
      %v1070 = vshrl.u32 %v1069, 7
      %v1071 = vsub.s32 0, %v1070
      %v1072 = vrot.slane %v908, %v1071
      %v1073 = vlaneseq
      %v1074 = vshrl.u32 %v1073, 7
      %v1075 = vsub.s32 0, %v1074
      %v1076 = vrot.slane %v891, %v1075
      %v1077 = vlaneseq
      %v1078 = vshrl.u32 %v1077, 7
      %v1079 = vsub.s32 0, %v1078
      %v1080 = vrot.slane %v905, %v1079
      %v1081 = vlaneseq
      %v1082 = vshrl.u32 %v1081, 7
      %v1083 = vsub.s32 0, %v1082
      %v1084 = vrot.slane %v907, %v1083
      %v1085 = vlaneseq
      %v1086 = vshrl.u32 %v1085, 7
      %v1087 = vsub.s32 0, %v1086
      %v1088 = vrot.slane %v909, %v1087
      %v1089 = vlaneseq
      %v1090 = vshrl.u32 %v1089, 7
      %v1091 = vsub.s32 0, %v1090
      %v1092 = vrot.slane %v933, %v1091
      %v1093 = vlaneseq
      %v1094 = vshrl.u32 %v1093, 7
      %v1095 = vsub.s32 0, %v1094
      %v1096 = vrot.slane %v947, %v1095
      %v1097 = vlaneseq
      %v1098 = vshrl.u32 %v1097, 7
      %v1099 = vsub.s32 0, %v1098
      %v1100 = vrot.slane %v955, %v1099
      %v1101 = vlaneseq
      %v1102 = vshrl.u32 %v1101, 7
      %v1103 = vsub.s32 0, %v1102
      %v1104 = vrot.slane %v957, %v1103
      %v1105 = vlaneseq
      %v1106 = vshrl.u32 %v1105, 7
      %v1107 = vsub.s32 0, %v1106
      %v1108 = vrot.slane %v940, %v1107
      %v1109 = vlaneseq
      %v1110 = vshrl.u32 %v1109, 7
      %v1111 = vsub.s32 0, %v1110
      %v1112 = vrot.slane %v954, %v1111
      %v1113 = vlaneseq
      %v1114 = vshrl.u32 %v1113, 7
      %v1115 = vsub.s32 0, %v1114
      %v1116 = vrot.slane %v956, %v1115
      %v1117 = vlaneseq
      %v1118 = vshrl.u32 %v1117, 7
      %v1119 = vsub.s32 0, %v1118
      %v1120 = vrot.slane %v958, %v1119
      %v1121 = vlaneseq
      %v1122 = vshrl.u32 %v1121, 7
      %v1123 = vsub.s32 0, %v1122
      %v1124 = vrot.slane %v982, %v1123
      %v1125 = vlaneseq
      %v1126 = vshrl.u32 %v1125, 7
      %v1127 = vsub.s32 0, %v1126
      %v1128 = vrot.slane %v996, %v1127
      %v1129 = vlaneseq
      %v1130 = vshrl.u32 %v1129, 7
      %v1131 = vsub.s32 0, %v1130
      %v1132 = vrot.slane %v1004, %v1131
      %v1133 = vlaneseq
      %v1134 = vshrl.u32 %v1133, 7
      %v1135 = vsub.s32 0, %v1134
      %v1136 = vrot.slane %v1006, %v1135
      %v1137 = vlaneseq
      %v1138 = vshrl.u32 %v1137, 7
      %v1139 = vsub.s32 0, %v1138
      %v1140 = vrot.slane %v989, %v1139
      %v1141 = vlaneseq
      %v1142 = vshrl.u32 %v1141, 7
      %v1143 = vsub.s32 0, %v1142
      %v1144 = vrot.slane %v1003, %v1143
      %v1145 = vlaneseq
      %v1146 = vshrl.u32 %v1145, 7
      %v1147 = vsub.s32 0, %v1146
      %v1148 = vrot.slane %v1005, %v1147
      %v1149 = vlaneseq
      %v1150 = vshrl.u32 %v1149, 7
      %v1151 = vsub.s32 0, %v1150
      %v1152 = vrot.slane %v1007, %v1151
      %v1153 = vlaneseq
      %v1154 = vshrl.u32 %v1153, 7
      %v1155 = vsub.s32 0, %v1154
      %v1156 = vrot.slane %v1031, %v1155
      %v1157 = vlaneseq
      %v1158 = vshrl.u32 %v1157, 7
      %v1159 = vsub.s32 0, %v1158
      %v1160 = vrot.slane %v1045, %v1159
      %v1161 = vlaneseq
      %v1162 = vshrl.u32 %v1161, 7
      %v1163 = vsub.s32 0, %v1162
      %v1164 = vrot.slane %v1053, %v1163
      %v1165 = vlaneseq
      %v1166 = vshrl.u32 %v1165, 7
      %v1167 = vsub.s32 0, %v1166
      %v1168 = vrot.slane %v1055, %v1167
      %v1169 = vlaneseq
      %v1170 = vshrl.u32 %v1169, 7
      %v1171 = vsub.s32 0, %v1170
      %v1172 = vrot.slane %v1038, %v1171
      %v1173 = vlaneseq
      %v1174 = vshrl.u32 %v1173, 7
      %v1175 = vsub.s32 0, %v1174
      %v1176 = vrot.slane %v1052, %v1175
      %v1177 = vlaneseq
      %v1178 = vshrl.u32 %v1177, 7
      %v1179 = vsub.s32 0, %v1178
      %v1180 = vrot.slane %v1054, %v1179
      %v1181 = vlaneseq
      %v1182 = vshrl.u32 %v1181, 7
      %v1183 = vsub.s32 0, %v1182
      %v1184 = vrot.slane %v1056, %v1183
      %v1217 = vmul.f32 %v598, %v1060
      %v1218 = vmul.f32 %v603, %v1064
      %v1219 = vmul.f32 %v608, %v1068
      %v1220 = vmul.f32 %v613, %v1072
      %v1221 = vmul.f32 %v618, %v1076
      %v1222 = vmul.f32 %v623, %v1080
      %v1223 = vmul.f32 %v628, %v1084
      %v1224 = vmul.f32 %v633, %v1088
      %v1225 = vmul.f32 %v638, %v1092
      %v1226 = vmul.f32 %v643, %v1096
      %v1227 = vmul.f32 %v648, %v1100
      %v1228 = vmul.f32 %v653, %v1104
      %v1229 = vmul.f32 %v658, %v1108
      %v1230 = vmul.f32 %v663, %v1112
      %v1231 = vmul.f32 %v668, %v1116
      %v1232 = vmul.f32 %v673, %v1120
      %v1233 = vmul.f32 %v678, %v1124
      %v1234 = vmul.f32 %v683, %v1128
      %v1235 = vmul.f32 %v688, %v1132
      %v1236 = vmul.f32 %v693, %v1136
      %v1237 = vmul.f32 %v698, %v1140
      %v1238 = vmul.f32 %v703, %v1144
      %v1239 = vmul.f32 %v708, %v1148
      %v1240 = vmul.f32 %v713, %v1152
      %v1241 = vmul.f32 %v718, %v1156
      %v1242 = vmul.f32 %v723, %v1160
      %v1243 = vmul.f32 %v728, %v1164
      %v1244 = vmul.f32 %v733, %v1168
      %v1245 = vmul.f32 %v738, %v1172
      %v1246 = vmul.f32 %v743, %v1176
      %v1247 = vmul.f32 %v748, %v1180
      %v1248 = vmul.f32 %v753, %v1184
      %v1249 = vld [vmem:[%s5] sm:$0xff]
      %v1250 = vld [vmem:[%s5 + $0x8] sm:$0xff]
      %v1251 = vld [vmem:[%s5 + $0x10] sm:$0xff]
      %v1252 = vld [vmem:[%s5 + $0x18] sm:$0xff]
      %v1253 = vld [vmem:[%s5 + $0x20] sm:$0xff]
      %v1254 = vld [vmem:[%s5 + $0x28] sm:$0xff]
      %v1255 = vld [vmem:[%s5 + $0x30] sm:$0xff]
      %v1256 = vld [vmem:[%s5 + $0x38] sm:$0xff]
      %vm1257 = vcmask 523264
      %v1259 = vsel %vm1257, %v1217, 0
      %v1262 = vsel %vm1257, %v1218, 0
      %v1265 = vsel %vm1257, %v1219, 0
      %v1268 = vsel %vm1257, %v1220, 0
      %v1271 = vsel %vm1257, %v1221, 0
      %v1274 = vsel %vm1257, %v1222, 0
      %v1277 = vsel %vm1257, %v1223, 0
      %v1280 = vsel %vm1257, %v1224, 0
      %v1283 = vsel %vm1257, %v1225, 0
      %v1286 = vsel %vm1257, %v1226, 0
      %v1289 = vsel %vm1257, %v1227, 0
      %v1292 = vsel %vm1257, %v1228, 0
      %v1295 = vsel %vm1257, %v1229, 0
      %v1298 = vsel %vm1257, %v1230, 0
      %v1301 = vsel %vm1257, %v1231, 0
      %v1304 = vsel %vm1257, %v1232, 0
      %v1307 = vsel %vm1257, %v1233, 0
      %v1310 = vsel %vm1257, %v1234, 0
      %v1313 = vsel %vm1257, %v1235, 0
      %v1316 = vsel %vm1257, %v1236, 0
      %v1319 = vsel %vm1257, %v1237, 0
      %v1322 = vsel %vm1257, %v1238, 0
      %v1325 = vsel %vm1257, %v1239, 0
      %v1328 = vsel %vm1257, %v1240, 0
      %v1331 = vsel %vm1257, %v1241, 0
      %v1334 = vsel %vm1257, %v1242, 0
      %v1337 = vsel %vm1257, %v1243, 0
      %v1340 = vsel %vm1257, %v1244, 0
      %v1343 = vsel %vm1257, %v1245, 0
      %v1346 = vsel %vm1257, %v1246, 0
      %v1349 = vsel %vm1257, %v1247, 0
      %v1352 = vsel %vm1257, %v1248, 0
      %1354 = vmatprep.subr.mxu0 0.0
      %1355 = vmatpush1.msra.mxu0 %v1249
      %1356 = vmatprep.subr.mxu0 0.0
      %1357 = vmatpush1.msra.mxu0 %v1250
      %1358 = vmatprep.subr.mxu0 0.0
      %1359 = vmatpush1.msra.mxu0 %v1251
      %1360 = vmatprep.subr.mxu0 0.0
      %1361 = vmatpush1.msra.mxu0 %v1252
      %1362 = vmatprep.subr.mxu0 0.0
      %1363 = vmatpush1.msra.mxu0 %v1253
      %1364 = vmatprep.subr.mxu0 0.0
      %1365 = vmatpush1.msra.mxu0 %v1254
      %1366 = vmatprep.subr.mxu0 0.0
      %1367 = vmatpush1.msra.mxu0 %v1255
      %1368 = vmatprep.subr.mxu0 0.0
      %1369 = vmatpush1.msra.mxu0 %v1256
      %1370 = vmatprep.subr.mxu0 0.0
      %1371 = vmatpush1.msra.mxu0 0.0
      %1372 = vmatprep.subr.mxu0 0.0
      %1373 = vmatpush1.msra.mxu0 0.0
      %1374 = vmatprep.subr.mxu0 0.0
      %1375 = vmatpush1.msra.mxu0 0.0
      %1376 = vmatprep.subr.mxu0 0.0
      %1377 = vmatpush1.msra.mxu0 0.0
      %1378 = vmatprep.subr.mxu0 0.0
      %1379 = vmatpush1.msra.mxu0 0.0
      %1380 = vmatprep.subr.mxu0 0.0
      %1381 = vmatpush1.msra.mxu0 0.0
      %1382 = vmatprep.subr.mxu0 0.0
      %1383 = vmatpush1.msra.mxu0 0.0
      %1384 = vmatprep.subr.mxu0 0.0
      %1385 = vmatpush1.msra.mxu0 0.0
      %1386 = vmatprep.subr.mxu0 0.0
      %1387 = vmatpush1.msra.mxu0 0.0
      %1388 = vmatprep.subr.mxu0 0.0
      %1389 = vmatpush1.msra.mxu0 0.0
      %1390 = vmatprep.subr.mxu0 0.0
      %1391 = vmatpush1.msra.mxu0 0.0
      %1392 = vmatprep.subr.mxu0 0.0
      %1393 = vmatpush1.msra.mxu0 0.0
      %1394 = vmatprep.subr.mxu0 0.0
      %1395 = vmatpush1.msra.mxu0 0.0
      %1396 = vmatprep.subr.mxu0 0.0
      %1397 = vmatpush1.msra.mxu0 0.0
      %1398 = vmatprep.subr.mxu0 0.0
      %1399 = vmatpush1.msra.mxu0 0.0
      %1400 = vmatprep.subr.mxu0 0.0
      %1401 = vmatpush1.msra.mxu0 0.0
      %1402 = vmatprep.subr.mxu0 0.0
      %1403 = vmatpush1.msra.mxu0 0.0
      %1404 = vmatprep.subr.mxu0 0.0
      %1405 = vmatpush1.msra.mxu0 0.0
      %1406 = vmatprep.subr.mxu0 0.0
      %1407 = vmatpush1.msra.mxu0 0.0
      %1408 = vmatprep.subr.mxu0 0.0
      %1409 = vmatpush1.msra.mxu0 0.0
      %1410 = vmatprep.subr.mxu0 0.0
      %1411 = vmatpush1.msra.mxu0 0.0
      %1412 = vmatprep.subr.mxu0 0.0
      %1413 = vmatpush1.msra.mxu0 0.0
      %1414 = vmatprep.subr.mxu0 0.0
      %1415 = vmatpush1.msra.mxu0 0.0
      %1416 = vmatprep.subr.mxu0 0.0
      %1417 = vmatpush1.msra.mxu0 0.0
      %1418 = vmatprep.mubr.f32.mxu0 0.0
      %1419 = vmatmul.mubr.f32.gmra.mrb[0].mxu0 %v1259
      %v1420 = vpop.f32.mrb[0].mxu0
      %v1421 = vadd.f32 0.0, %v1420
      %v1422 = vpop.f32.mrb[0].mxu0
      %1423 = vmatprep.mubr.f32.mxu0 0.0
      %1424 = vmatmul.mubr.f32.gmra.mrb[0].mxu0 %v1262
      %v1425 = vpop.f32.mrb[0].mxu0
      %v1426 = vadd.f32 0.0, %v1425
      %v1427 = vpop.f32.mrb[0].mxu0
      %1428 = vmatprep.mubr.f32.mxu0 0.0
      %1429 = vmatmul.mubr.f32.gmra.mrb[0].mxu0 %v1265
      %v1430 = vpop.f32.mrb[0].mxu0
      %v1431 = vadd.f32 0.0, %v1430
      %v1432 = vpop.f32.mrb[0].mxu0
      %1433 = vmatprep.mubr.f32.mxu0 0.0
      %1434 = vmatmul.mubr.f32.gmra.mrb[0].mxu0 %v1268
      %v1435 = vpop.f32.mrb[0].mxu0
      %v1436 = vadd.f32 0.0, %v1435
      %v1437 = vpop.f32.mrb[0].mxu0
      %1438 = vmatprep.mubr.f32.mxu0 0.0
      %1439 = vmatmul.mubr.f32.gmra.mrb[0].mxu0 %v1271
      %v1440 = vpop.f32.mrb[0].mxu0
      %v1441 = vadd.f32 0.0, %v1440
      %v1442 = vpop.f32.mrb[0].mxu0
      %1443 = vmatprep.mubr.f32.mxu0 0.0
      %1444 = vmatmul.mubr.f32.gmra.mrb[0].mxu0 %v1274
      %v1445 = vpop.f32.mrb[0].mxu0
      %v1446 = vadd.f32 0.0, %v1445
      %v1447 = vpop.f32.mrb[0].mxu0
      %1448 = vmatprep.mubr.f32.mxu0 0.0
      %1449 = vmatmul.mubr.f32.gmra.mrb[0].mxu0 %v1277
      %v1450 = vpop.f32.mrb[0].mxu0
      %v1451 = vadd.f32 0.0, %v1450
      %v1452 = vpop.f32.mrb[0].mxu0
      %1453 = vmatprep.mubr.f32.mxu0 0.0
      %1454 = vmatmul.mubr.f32.gmra.mrb[0].mxu0 %v1280
      %v1455 = vpop.f32.mrb[0].mxu0
      %v1456 = vadd.f32 0.0, %v1455
      %v1457 = vpop.f32.mrb[0].mxu0
      %1458 = vmatprep.mubr.f32.mxu0 0.0
      %1459 = vmatmul.mubr.f32.gmra.mrb[0].mxu0 %v1283
      %v1460 = vpop.f32.mrb[0].mxu0
      %v1461 = vadd.f32 0.0, %v1460
      %v1462 = vpop.f32.mrb[0].mxu0
      %1463 = vmatprep.mubr.f32.mxu0 0.0
      %1464 = vmatmul.mubr.f32.gmra.mrb[0].mxu0 %v1286
      %v1465 = vpop.f32.mrb[0].mxu0
      %v1466 = vadd.f32 0.0, %v1465
      %v1467 = vpop.f32.mrb[0].mxu0
      %1468 = vmatprep.mubr.f32.mxu0 0.0
      %1469 = vmatmul.mubr.f32.gmra.mrb[0].mxu0 %v1289
      %v1470 = vpop.f32.mrb[0].mxu0
      %v1471 = vadd.f32 0.0, %v1470
      %v1472 = vpop.f32.mrb[0].mxu0
      %1473 = vmatprep.mubr.f32.mxu0 0.0
      %1474 = vmatmul.mubr.f32.gmra.mrb[0].mxu0 %v1292
      %v1475 = vpop.f32.mrb[0].mxu0
      %v1476 = vadd.f32 0.0, %v1475
      %v1477 = vpop.f32.mrb[0].mxu0
      %1478 = vmatprep.mubr.f32.mxu0 0.0
      %1479 = vmatmul.mubr.f32.gmra.mrb[0].mxu0 %v1295
      %v1480 = vpop.f32.mrb[0].mxu0
      %v1481 = vadd.f32 0.0, %v1480
      %v1482 = vpop.f32.mrb[0].mxu0
      %1483 = vmatprep.mubr.f32.mxu0 0.0
      %1484 = vmatmul.mubr.f32.gmra.mrb[0].mxu0 %v1298
      %v1485 = vpop.f32.mrb[0].mxu0
      %v1486 = vadd.f32 0.0, %v1485
      %v1487 = vpop.f32.mrb[0].mxu0
      %1488 = vmatprep.mubr.f32.mxu0 0.0
      %1489 = vmatmul.mubr.f32.gmra.mrb[0].mxu0 %v1301
      %v1490 = vpop.f32.mrb[0].mxu0
      %v1491 = vadd.f32 0.0, %v1490
      %v1492 = vpop.f32.mrb[0].mxu0
      %1493 = vmatprep.mubr.f32.mxu0 0.0
      %1494 = vmatmul.mubr.f32.gmra.mrb[0].mxu0 %v1304
      %v1495 = vpop.f32.mrb[0].mxu0
      %v1496 = vadd.f32 0.0, %v1495
      %v1497 = vpop.f32.mrb[0].mxu0
      %1498 = vmatprep.mubr.f32.mxu0 0.0
      %1499 = vmatmul.mubr.f32.gmra.mrb[0].mxu0 %v1307
      %v1500 = vpop.f32.mrb[0].mxu0
      %v1501 = vadd.f32 0.0, %v1500
      %v1502 = vpop.f32.mrb[0].mxu0
      %1503 = vmatprep.mubr.f32.mxu0 0.0
      %1504 = vmatmul.mubr.f32.gmra.mrb[0].mxu0 %v1310
      %v1505 = vpop.f32.mrb[0].mxu0
      %v1506 = vadd.f32 0.0, %v1505
      %v1507 = vpop.f32.mrb[0].mxu0
      %1508 = vmatprep.mubr.f32.mxu0 0.0
      %1509 = vmatmul.mubr.f32.gmra.mrb[0].mxu0 %v1313
      %v1510 = vpop.f32.mrb[0].mxu0
      %v1511 = vadd.f32 0.0, %v1510
      %v1512 = vpop.f32.mrb[0].mxu0
      %1513 = vmatprep.mubr.f32.mxu0 0.0
      %1514 = vmatmul.mubr.f32.gmra.mrb[0].mxu0 %v1316
      %v1515 = vpop.f32.mrb[0].mxu0
      %v1516 = vadd.f32 0.0, %v1515
      %v1517 = vpop.f32.mrb[0].mxu0
      %1518 = vmatprep.mubr.f32.mxu0 0.0
      %1519 = vmatmul.mubr.f32.gmra.mrb[0].mxu0 %v1319
      %v1520 = vpop.f32.mrb[0].mxu0
      %v1521 = vadd.f32 0.0, %v1520
      %v1522 = vpop.f32.mrb[0].mxu0
      %1523 = vmatprep.mubr.f32.mxu0 0.0
      %1524 = vmatmul.mubr.f32.gmra.mrb[0].mxu0 %v1322
      %v1525 = vpop.f32.mrb[0].mxu0
      %v1526 = vadd.f32 0.0, %v1525
      %v1527 = vpop.f32.mrb[0].mxu0
      %1528 = vmatprep.mubr.f32.mxu0 0.0
      %1529 = vmatmul.mubr.f32.gmra.mrb[0].mxu0 %v1325
      %v1530 = vpop.f32.mrb[0].mxu0
      %v1531 = vadd.f32 0.0, %v1530
      %v1532 = vpop.f32.mrb[0].mxu0
      %1533 = vmatprep.mubr.f32.mxu0 0.0
      %1534 = vmatmul.mubr.f32.gmra.mrb[0].mxu0 %v1328
      %v1535 = vpop.f32.mrb[0].mxu0
      %v1536 = vadd.f32 0.0, %v1535
      %v1537 = vpop.f32.mrb[0].mxu0
      %1538 = vmatprep.mubr.f32.mxu0 0.0
      %1539 = vmatmul.mubr.f32.gmra.mrb[0].mxu0 %v1331
      %v1540 = vpop.f32.mrb[0].mxu0
      %v1541 = vadd.f32 0.0, %v1540
      %v1542 = vpop.f32.mrb[0].mxu0
      %1543 = vmatprep.mubr.f32.mxu0 0.0
      %1544 = vmatmul.mubr.f32.gmra.mrb[0].mxu0 %v1334
      %v1545 = vpop.f32.mrb[0].mxu0
      %v1546 = vadd.f32 0.0, %v1545
      %v1547 = vpop.f32.mrb[0].mxu0
      %1548 = vmatprep.mubr.f32.mxu0 0.0
      %1549 = vmatmul.mubr.f32.gmra.mrb[0].mxu0 %v1337
      %v1550 = vpop.f32.mrb[0].mxu0
      %v1551 = vadd.f32 0.0, %v1550
      %v1552 = vpop.f32.mrb[0].mxu0
      %1553 = vmatprep.mubr.f32.mxu0 0.0
      %1554 = vmatmul.mubr.f32.gmra.mrb[0].mxu0 %v1340
      %v1555 = vpop.f32.mrb[0].mxu0
      %v1556 = vadd.f32 0.0, %v1555
      %v1557 = vpop.f32.mrb[0].mxu0
      %1558 = vmatprep.mubr.f32.mxu0 0.0
      %1559 = vmatmul.mubr.f32.gmra.mrb[0].mxu0 %v1343
      %v1560 = vpop.f32.mrb[0].mxu0
      %v1561 = vadd.f32 0.0, %v1560
      %v1562 = vpop.f32.mrb[0].mxu0
      %1563 = vmatprep.mubr.f32.mxu0 0.0
      %1564 = vmatmul.mubr.f32.gmra.mrb[0].mxu0 %v1346
      %v1565 = vpop.f32.mrb[0].mxu0
      %v1566 = vadd.f32 0.0, %v1565
      %v1567 = vpop.f32.mrb[0].mxu0
      %1568 = vmatprep.mubr.f32.mxu0 0.0
      %1569 = vmatmul.mubr.f32.gmra.mrb[0].mxu0 %v1349
      %v1570 = vpop.f32.mrb[0].mxu0
      %v1571 = vadd.f32 0.0, %v1570
      %v1572 = vpop.f32.mrb[0].mxu0
      %1573 = vmatprep.mubr.f32.mxu0 0.0
      %1574 = vmatmul.mubr.f32.gmra.mrb[0].mxu0 %v1352
      %v1575 = vpop.f32.mrb[0].mxu0
      %v1576 = vadd.f32 0.0, %v1575
      %v1577 = vpop.f32.mrb[0].mxu0
      %1578 = vdwg.mxu0
      %v1579 = vld [vmem:[%s380] sm:$0xff]
      %v1580 = vld [vmem:[%s380 + $0x8] sm:$0xff]
      %v1581 = vld [vmem:[%s380 + $0x10] sm:$0xff]
      %v1582 = vld [vmem:[%s380 + $0x18] sm:$0xff]
      %v1583 = vld [vmem:[%s380 + $0x20] sm:$0xff]
      %v1584 = vld [vmem:[%s380 + $0x28] sm:$0xff]
      %v1585 = vld [vmem:[%s380 + $0x30] sm:$0xff]
      %v1586 = vld [vmem:[%s380 + $0x38] sm:$0xff]
      %v1587 = vld [vmem:[%s380 + $0x40] sm:$0xff]
      %v1588 = vld [vmem:[%s380 + $0x48] sm:$0xff]
      %v1589 = vld [vmem:[%s380 + $0x50] sm:$0xff]
      %v1590 = vld [vmem:[%s380 + $0x58] sm:$0xff]
      %v1591 = vld [vmem:[%s380 + $0x60] sm:$0xff]
      %v1592 = vld [vmem:[%s380 + $0x68] sm:$0xff]
      %v1593 = vld [vmem:[%s380 + $0x70] sm:$0xff]
      %v1594 = vld [vmem:[%s380 + $0x78] sm:$0xff]
      %v1595 = vld [vmem:[%s380 + $0x80] sm:$0xff]
      %v1596 = vld [vmem:[%s380 + $0x88] sm:$0xff]
      %v1597 = vld [vmem:[%s380 + $0x90] sm:$0xff]
      %v1598 = vld [vmem:[%s380 + $0x98] sm:$0xff]
      %v1599 = vld [vmem:[%s380 + $0xa0] sm:$0xff]
      %v1600 = vld [vmem:[%s380 + $0xa8] sm:$0xff]
      %v1601 = vld [vmem:[%s380 + $0xb0] sm:$0xff]
      %v1602 = vld [vmem:[%s380 + $0xb8] sm:$0xff]
      %v1603 = vld [vmem:[%s380 + $0xc0] sm:$0xff]
      %v1604 = vld [vmem:[%s380 + $0xc8] sm:$0xff]
      %v1605 = vld [vmem:[%s380 + $0xd0] sm:$0xff]
      %v1606 = vld [vmem:[%s380 + $0xd8] sm:$0xff]
      %v1607 = vld [vmem:[%s380 + $0xe0] sm:$0xff]
      %v1608 = vld [vmem:[%s380 + $0xe8] sm:$0xff]
      %v1609 = vld [vmem:[%s380 + $0xf0] sm:$0xff]
      %v1610 = vld [vmem:[%s380 + $0xf8] sm:$0xff]
      %vm1611 = vcmp.eq.f32.partialorder %v1579, 0.0
      %vm1612 = vcmp.eq.f32.partialorder %v1580, 0.0
      %vm1613 = vcmp.eq.f32.partialorder %v1581, 0.0
      %vm1614 = vcmp.eq.f32.partialorder %v1582, 0.0
      %vm1615 = vcmp.eq.f32.partialorder %v1583, 0.0
      %vm1616 = vcmp.eq.f32.partialorder %v1584, 0.0
      %vm1617 = vcmp.eq.f32.partialorder %v1585, 0.0
      %vm1618 = vcmp.eq.f32.partialorder %v1586, 0.0
      %vm1619 = vcmp.eq.f32.partialorder %v1587, 0.0
      %vm1620 = vcmp.eq.f32.partialorder %v1588, 0.0
      %vm1621 = vcmp.eq.f32.partialorder %v1589, 0.0
      %vm1622 = vcmp.eq.f32.partialorder %v1590, 0.0
      %vm1623 = vcmp.eq.f32.partialorder %v1591, 0.0
      %vm1624 = vcmp.eq.f32.partialorder %v1592, 0.0
      %vm1625 = vcmp.eq.f32.partialorder %v1593, 0.0
      %vm1626 = vcmp.eq.f32.partialorder %v1594, 0.0
      %vm1627 = vcmp.eq.f32.partialorder %v1595, 0.0
      %vm1628 = vcmp.eq.f32.partialorder %v1596, 0.0
      %vm1629 = vcmp.eq.f32.partialorder %v1597, 0.0
      %vm1630 = vcmp.eq.f32.partialorder %v1598, 0.0
      %vm1631 = vcmp.eq.f32.partialorder %v1599, 0.0
      %vm1632 = vcmp.eq.f32.partialorder %v1600, 0.0
      %vm1633 = vcmp.eq.f32.partialorder %v1601, 0.0
      %vm1634 = vcmp.eq.f32.partialorder %v1602, 0.0
      %vm1635 = vcmp.eq.f32.partialorder %v1603, 0.0
      %vm1636 = vcmp.eq.f32.partialorder %v1604, 0.0
      %vm1637 = vcmp.eq.f32.partialorder %v1605, 0.0
      %vm1638 = vcmp.eq.f32.partialorder %v1606, 0.0
      %vm1639 = vcmp.eq.f32.partialorder %v1607, 0.0
      %vm1640 = vcmp.eq.f32.partialorder %v1608, 0.0
      %vm1641 = vcmp.eq.f32.partialorder %v1609, 0.0
      %vm1642 = vcmp.eq.f32.partialorder %v1610, 0.0
      %v1643 = vsel %vm1611, 1, 0
      %v1644 = vsel %vm1612, 1, 0
      %v1645 = vsel %vm1613, 1, 0
      %v1646 = vsel %vm1614, 1, 0
      %v1647 = vsel %vm1615, 1, 0
      %v1648 = vsel %vm1616, 1, 0
      %v1649 = vsel %vm1617, 1, 0
      %v1650 = vsel %vm1618, 1, 0
      %v1651 = vsel %vm1619, 1, 0
      %v1652 = vsel %vm1620, 1, 0
      %v1653 = vsel %vm1621, 1, 0
      %v1654 = vsel %vm1622, 1, 0
      %v1655 = vsel %vm1623, 1, 0
      %v1656 = vsel %vm1624, 1, 0
      %v1657 = vsel %vm1625, 1, 0
      %v1658 = vsel %vm1626, 1, 0
      %v1659 = vsel %vm1627, 1, 0
      %v1660 = vsel %vm1628, 1, 0
      %v1661 = vsel %vm1629, 1, 0
      %v1662 = vsel %vm1630, 1, 0
      %v1663 = vsel %vm1631, 1, 0
      %v1664 = vsel %vm1632, 1, 0
      %v1665 = vsel %vm1633, 1, 0
      %v1666 = vsel %vm1634, 1, 0
      %v1667 = vsel %vm1635, 1, 0
      %v1668 = vsel %vm1636, 1, 0
      %v1669 = vsel %vm1637, 1, 0
      %v1670 = vsel %vm1638, 1, 0
      %v1671 = vsel %vm1639, 1, 0
      %v1672 = vsel %vm1640, 1, 0
      %v1673 = vsel %vm1641, 1, 0
      %v1674 = vsel %vm1642, 1, 0
      %1675 = vset.pattern.permute.xlu0 0
      %1676 = vperm.xlu0 %1675, %v1643
      %v1677 = vpop.permute.xlu0 %1676
      %1678 = vset.pattern.permute.xlu0 0
      %1679 = vperm.xlu0 %1678, %v1644
      %v1680 = vpop.permute.xlu0 %1679
      %1681 = vset.pattern.permute.xlu0 0
      %1682 = vperm.xlu0 %1681, %v1645
      %v1683 = vpop.permute.xlu0 %1682
      %1684 = vset.pattern.permute.xlu0 0
      %1685 = vperm.xlu0 %1684, %v1646
      %v1686 = vpop.permute.xlu0 %1685
      %1687 = vset.pattern.permute.xlu0 0
      %1688 = vperm.xlu0 %1687, %v1647
      %v1689 = vpop.permute.xlu0 %1688
      %1690 = vset.pattern.permute.xlu0 0
      %1691 = vperm.xlu0 %1690, %v1648
      %v1692 = vpop.permute.xlu0 %1691
      %1693 = vset.pattern.permute.xlu0 0
      %1694 = vperm.xlu0 %1693, %v1649
      %v1695 = vpop.permute.xlu0 %1694
      %1696 = vset.pattern.permute.xlu0 0
      %1697 = vperm.xlu0 %1696, %v1650
      %v1698 = vpop.permute.xlu0 %1697
      %1699 = vset.pattern.permute.xlu0 0
      %1700 = vperm.xlu0 %1699, %v1651
      %v1701 = vpop.permute.xlu0 %1700
      %1702 = vset.pattern.permute.xlu0 0
      %1703 = vperm.xlu0 %1702, %v1652
      %v1704 = vpop.permute.xlu0 %1703
      %1705 = vset.pattern.permute.xlu0 0
      %1706 = vperm.xlu0 %1705, %v1653
      %v1707 = vpop.permute.xlu0 %1706
      %1708 = vset.pattern.permute.xlu0 0
      %1709 = vperm.xlu0 %1708, %v1654
      %v1710 = vpop.permute.xlu0 %1709
      %1711 = vset.pattern.permute.xlu0 0
      %1712 = vperm.xlu0 %1711, %v1655
      %v1713 = vpop.permute.xlu0 %1712
      %1714 = vset.pattern.permute.xlu0 0
      %1715 = vperm.xlu0 %1714, %v1656
      %v1716 = vpop.permute.xlu0 %1715
      %1717 = vset.pattern.permute.xlu0 0
      %1718 = vperm.xlu0 %1717, %v1657
      %v1719 = vpop.permute.xlu0 %1718
      %1720 = vset.pattern.permute.xlu0 0
      %1721 = vperm.xlu0 %1720, %v1658
      %v1722 = vpop.permute.xlu0 %1721
      %1723 = vset.pattern.permute.xlu0 0
      %1724 = vperm.xlu0 %1723, %v1659
      %v1725 = vpop.permute.xlu0 %1724
      %1726 = vset.pattern.permute.xlu0 0
      %1727 = vperm.xlu0 %1726, %v1660
      %v1728 = vpop.permute.xlu0 %1727
      %1729 = vset.pattern.permute.xlu0 0
      %1730 = vperm.xlu0 %1729, %v1661
      %v1731 = vpop.permute.xlu0 %1730
      %1732 = vset.pattern.permute.xlu0 0
      %1733 = vperm.xlu0 %1732, %v1662
      %v1734 = vpop.permute.xlu0 %1733
      %1735 = vset.pattern.permute.xlu0 0
      %1736 = vperm.xlu0 %1735, %v1663
      %v1737 = vpop.permute.xlu0 %1736
      %1738 = vset.pattern.permute.xlu0 0
      %1739 = vperm.xlu0 %1738, %v1664
      %v1740 = vpop.permute.xlu0 %1739
      %1741 = vset.pattern.permute.xlu0 0
      %1742 = vperm.xlu0 %1741, %v1665
      %v1743 = vpop.permute.xlu0 %1742
      %1744 = vset.pattern.permute.xlu0 0
      %1745 = vperm.xlu0 %1744, %v1666
      %v1746 = vpop.permute.xlu0 %1745
      %1747 = vset.pattern.permute.xlu0 0
      %1748 = vperm.xlu0 %1747, %v1667
      %v1749 = vpop.permute.xlu0 %1748
      %1750 = vset.pattern.permute.xlu0 0
      %1751 = vperm.xlu0 %1750, %v1668
      %v1752 = vpop.permute.xlu0 %1751
      %1753 = vset.pattern.permute.xlu0 0
      %1754 = vperm.xlu0 %1753, %v1669
      %v1755 = vpop.permute.xlu0 %1754
      %1756 = vset.pattern.permute.xlu0 0
      %1757 = vperm.xlu0 %1756, %v1670
      %v1758 = vpop.permute.xlu0 %1757
      %1759 = vset.pattern.permute.xlu0 0
      %1760 = vperm.xlu0 %1759, %v1671
      %v1761 = vpop.permute.xlu0 %1760
      %1762 = vset.pattern.permute.xlu0 0
      %1763 = vperm.xlu0 %1762, %v1672
      %v1764 = vpop.permute.xlu0 %1763
      %1765 = vset.pattern.permute.xlu0 0
      %1766 = vperm.xlu0 %1765, %v1673
      %v1767 = vpop.permute.xlu0 %1766
      %1768 = vset.pattern.permute.xlu0 0
      %1769 = vperm.xlu0 %1768, %v1674
      %v1770 = vpop.permute.xlu0 %1769
      %vm1771 = vcmp.eq.s32.totalorder %v1677, 1
      %vm1772 = vcmp.eq.s32.totalorder %v1680, 1
      %vm1773 = vcmp.eq.s32.totalorder %v1683, 1
      %vm1774 = vcmp.eq.s32.totalorder %v1686, 1
      %vm1775 = vcmp.eq.s32.totalorder %v1689, 1
      %vm1776 = vcmp.eq.s32.totalorder %v1692, 1
      %vm1777 = vcmp.eq.s32.totalorder %v1695, 1
      %vm1778 = vcmp.eq.s32.totalorder %v1698, 1
      %vm1779 = vcmp.eq.s32.totalorder %v1701, 1
      %vm1780 = vcmp.eq.s32.totalorder %v1704, 1
      %vm1781 = vcmp.eq.s32.totalorder %v1707, 1
      %vm1782 = vcmp.eq.s32.totalorder %v1710, 1
      %vm1783 = vcmp.eq.s32.totalorder %v1713, 1
      %vm1784 = vcmp.eq.s32.totalorder %v1716, 1
      %vm1785 = vcmp.eq.s32.totalorder %v1719, 1
      %vm1786 = vcmp.eq.s32.totalorder %v1722, 1
      %vm1787 = vcmp.eq.s32.totalorder %v1725, 1
      %vm1788 = vcmp.eq.s32.totalorder %v1728, 1
      %vm1789 = vcmp.eq.s32.totalorder %v1731, 1
      %vm1790 = vcmp.eq.s32.totalorder %v1734, 1
      %vm1791 = vcmp.eq.s32.totalorder %v1737, 1
      %vm1792 = vcmp.eq.s32.totalorder %v1740, 1
      %vm1793 = vcmp.eq.s32.totalorder %v1743, 1
      %vm1794 = vcmp.eq.s32.totalorder %v1746, 1
      %vm1795 = vcmp.eq.s32.totalorder %v1749, 1
      %vm1796 = vcmp.eq.s32.totalorder %v1752, 1
      %vm1797 = vcmp.eq.s32.totalorder %v1755, 1
      %vm1798 = vcmp.eq.s32.totalorder %v1758, 1
      %vm1799 = vcmp.eq.s32.totalorder %v1761, 1
      %vm1800 = vcmp.eq.s32.totalorder %v1764, 1
      %vm1801 = vcmp.eq.s32.totalorder %v1767, 1
      %vm1802 = vcmp.eq.s32.totalorder %v1770, 1
      %v1803 = vsel %vm1771, -1e+10, %v1421
      %v1804 = vsel %vm1772, -1e+10, %v1426
      %v1805 = vsel %vm1773, -1e+10, %v1431
      %v1806 = vsel %vm1774, -1e+10, %v1436
      %v1807 = vsel %vm1775, -1e+10, %v1441
      %v1808 = vsel %vm1776, -1e+10, %v1446
      %v1809 = vsel %vm1777, -1e+10, %v1451
      %v1810 = vsel %vm1778, -1e+10, %v1456
      %v1811 = vsel %vm1779, -1e+10, %v1461
      %v1812 = vsel %vm1780, -1e+10, %v1466
      %v1813 = vsel %vm1781, -1e+10, %v1471
      %v1814 = vsel %vm1782, -1e+10, %v1476
      %v1815 = vsel %vm1783, -1e+10, %v1481
      %v1816 = vsel %vm1784, -1e+10, %v1486
      %v1817 = vsel %vm1785, -1e+10, %v1491
      %v1818 = vsel %vm1786, -1e+10, %v1496
      %v1819 = vsel %vm1787, -1e+10, %v1501
      %v1820 = vsel %vm1788, -1e+10, %v1506
      %v1821 = vsel %vm1789, -1e+10, %v1511
      %v1822 = vsel %vm1790, -1e+10, %v1516
      %v1823 = vsel %vm1791, -1e+10, %v1521
      %v1824 = vsel %vm1792, -1e+10, %v1526
      %v1825 = vsel %vm1793, -1e+10, %v1531
      %v1826 = vsel %vm1794, -1e+10, %v1536
      %v1827 = vsel %vm1795, -1e+10, %v1541
      %v1828 = vsel %vm1796, -1e+10, %v1546
      %v1829 = vsel %vm1797, -1e+10, %v1551
      %v1830 = vsel %vm1798, -1e+10, %v1556
      %v1831 = vsel %vm1799, -1e+10, %v1561
      %v1832 = vsel %vm1800, -1e+10, %v1566
      %v1833 = vsel %vm1801, -1e+10, %v1571
      %v1834 = vsel %vm1802, -1e+10, %v1576
      %vm1835 = vcmask 15360
      %v1836 = vsel %vm1835, %v1803, -inf
      %v1837 = vrot.slane %v1836, 4
      %v1838 = vmax.f32 %v1836, %v1837
      %v1839 = vrot.slane %v1838, 2
      %v1840 = vmax.f32 %v1838, %v1839
      %v1841 = vrot.slane %v1840, 1
      %v1842 = vmax.f32 %v1840, %v1841
      %v1843 = vsel %vm1835, %v1804, -inf
      %v1844 = vrot.slane %v1843, 4
      %v1845 = vmax.f32 %v1843, %v1844
      %v1846 = vrot.slane %v1845, 2
      %v1847 = vmax.f32 %v1845, %v1846
      %v1848 = vrot.slane %v1847, 1
      %v1849 = vmax.f32 %v1847, %v1848
      %v1850 = vsel %vm1835, %v1805, -inf
      %v1851 = vrot.slane %v1850, 4
      %v1852 = vmax.f32 %v1850, %v1851
      %v1853 = vrot.slane %v1852, 2
      %v1854 = vmax.f32 %v1852, %v1853
      %v1855 = vrot.slane %v1854, 1
      %v1856 = vmax.f32 %v1854, %v1855
      %v1857 = vsel %vm1835, %v1806, -inf
      %v1858 = vrot.slane %v1857, 4
      %v1859 = vmax.f32 %v1857, %v1858
      %v1860 = vrot.slane %v1859, 2
      %v1861 = vmax.f32 %v1859, %v1860
      %v1862 = vrot.slane %v1861, 1
      %v1863 = vmax.f32 %v1861, %v1862
      %v1864 = vsel %vm1835, %v1807, -inf
      %v1865 = vrot.slane %v1864, 4
      %v1866 = vmax.f32 %v1864, %v1865
      %v1867 = vrot.slane %v1866, 2
      %v1868 = vmax.f32 %v1866, %v1867
      %v1869 = vrot.slane %v1868, 1
      %v1870 = vmax.f32 %v1868, %v1869
      %v1871 = vsel %vm1835, %v1808, -inf
      %v1872 = vrot.slane %v1871, 4
      %v1873 = vmax.f32 %v1871, %v1872
      %v1874 = vrot.slane %v1873, 2
      %v1875 = vmax.f32 %v1873, %v1874
      %v1876 = vrot.slane %v1875, 1
      %v1877 = vmax.f32 %v1875, %v1876
      %v1878 = vsel %vm1835, %v1809, -inf
      %v1879 = vrot.slane %v1878, 4
      %v1880 = vmax.f32 %v1878, %v1879
      %v1881 = vrot.slane %v1880, 2
      %v1882 = vmax.f32 %v1880, %v1881
      %v1883 = vrot.slane %v1882, 1
      %v1884 = vmax.f32 %v1882, %v1883
      %v1885 = vsel %vm1835, %v1810, -inf
      %v1886 = vrot.slane %v1885, 4
      %v1887 = vmax.f32 %v1885, %v1886
      %v1888 = vrot.slane %v1887, 2
      %v1889 = vmax.f32 %v1887, %v1888
      %v1890 = vrot.slane %v1889, 1
      %v1891 = vmax.f32 %v1889, %v1890
      %v1892 = vsel %vm1835, %v1811, -inf
      %v1893 = vrot.slane %v1892, 4
      %v1894 = vmax.f32 %v1892, %v1893
      %v1895 = vrot.slane %v1894, 2
      %v1896 = vmax.f32 %v1894, %v1895
      %v1897 = vrot.slane %v1896, 1
      %v1898 = vmax.f32 %v1896, %v1897
      %v1899 = vsel %vm1835, %v1812, -inf
      %v1900 = vrot.slane %v1899, 4
      %v1901 = vmax.f32 %v1899, %v1900
      %v1902 = vrot.slane %v1901, 2
      %v1903 = vmax.f32 %v1901, %v1902
      %v1904 = vrot.slane %v1903, 1
      %v1905 = vmax.f32 %v1903, %v1904
      %v1906 = vsel %vm1835, %v1813, -inf
      %v1907 = vrot.slane %v1906, 4
      %v1908 = vmax.f32 %v1906, %v1907
      %v1909 = vrot.slane %v1908, 2
      %v1910 = vmax.f32 %v1908, %v1909
      %v1911 = vrot.slane %v1910, 1
      %v1912 = vmax.f32 %v1910, %v1911
      %v1913 = vsel %vm1835, %v1814, -inf
      %v1914 = vrot.slane %v1913, 4
      %v1915 = vmax.f32 %v1913, %v1914
      %v1916 = vrot.slane %v1915, 2
      %v1917 = vmax.f32 %v1915, %v1916
      %v1918 = vrot.slane %v1917, 1
      %v1919 = vmax.f32 %v1917, %v1918
      %v1920 = vsel %vm1835, %v1815, -inf
      %v1921 = vrot.slane %v1920, 4
      %v1922 = vmax.f32 %v1920, %v1921
      %v1923 = vrot.slane %v1922, 2
      %v1924 = vmax.f32 %v1922, %v1923
      %v1925 = vrot.slane %v1924, 1
      %v1926 = vmax.f32 %v1924, %v1925
      %v1927 = vsel %vm1835, %v1816, -inf
      %v1928 = vrot.slane %v1927, 4
      %v1929 = vmax.f32 %v1927, %v1928
      %v1930 = vrot.slane %v1929, 2
      %v1931 = vmax.f32 %v1929, %v1930
      %v1932 = vrot.slane %v1931, 1
      %v1933 = vmax.f32 %v1931, %v1932
      %v1934 = vsel %vm1835, %v1817, -inf
      %v1935 = vrot.slane %v1934, 4
      %v1936 = vmax.f32 %v1934, %v1935
      %v1937 = vrot.slane %v1936, 2
      %v1938 = vmax.f32 %v1936, %v1937
      %v1939 = vrot.slane %v1938, 1
      %v1940 = vmax.f32 %v1938, %v1939
      %v1941 = vsel %vm1835, %v1818, -inf
      %v1942 = vrot.slane %v1941, 4
      %v1943 = vmax.f32 %v1941, %v1942
      %v1944 = vrot.slane %v1943, 2
      %v1945 = vmax.f32 %v1943, %v1944
      %v1946 = vrot.slane %v1945, 1
      %v1947 = vmax.f32 %v1945, %v1946
      %v1948 = vsel %vm1835, %v1819, -inf
      %v1949 = vrot.slane %v1948, 4
      %v1950 = vmax.f32 %v1948, %v1949
      %v1951 = vrot.slane %v1950, 2
      %v1952 = vmax.f32 %v1950, %v1951
      %v1953 = vrot.slane %v1952, 1
      %v1954 = vmax.f32 %v1952, %v1953
      %v1955 = vsel %vm1835, %v1820, -inf
      %v1956 = vrot.slane %v1955, 4
      %v1957 = vmax.f32 %v1955, %v1956
      %v1958 = vrot.slane %v1957, 2
      %v1959 = vmax.f32 %v1957, %v1958
      %v1960 = vrot.slane %v1959, 1
      %v1961 = vmax.f32 %v1959, %v1960
      %v1962 = vsel %vm1835, %v1821, -inf
      %v1963 = vrot.slane %v1962, 4
      %v1964 = vmax.f32 %v1962, %v1963
      %v1965 = vrot.slane %v1964, 2
      %v1966 = vmax.f32 %v1964, %v1965
      %v1967 = vrot.slane %v1966, 1
      %v1968 = vmax.f32 %v1966, %v1967
      %v1969 = vsel %vm1835, %v1822, -inf
      %v1970 = vrot.slane %v1969, 4
      %v1971 = vmax.f32 %v1969, %v1970
      %v1972 = vrot.slane %v1971, 2
      %v1973 = vmax.f32 %v1971, %v1972
      %v1974 = vrot.slane %v1973, 1
      %v1975 = vmax.f32 %v1973, %v1974
      %v1976 = vsel %vm1835, %v1823, -inf
      %v1977 = vrot.slane %v1976, 4
      %v1978 = vmax.f32 %v1976, %v1977
      %v1979 = vrot.slane %v1978, 2
      %v1980 = vmax.f32 %v1978, %v1979
      %v1981 = vrot.slane %v1980, 1
      %v1982 = vmax.f32 %v1980, %v1981
      %v1983 = vsel %vm1835, %v1824, -inf
      %v1984 = vrot.slane %v1983, 4
      %v1985 = vmax.f32 %v1983, %v1984
      %v1986 = vrot.slane %v1985, 2
      %v1987 = vmax.f32 %v1985, %v1986
      %v1988 = vrot.slane %v1987, 1
      %v1989 = vmax.f32 %v1987, %v1988
      %v1990 = vsel %vm1835, %v1825, -inf
      %v1991 = vrot.slane %v1990, 4
      %v1992 = vmax.f32 %v1990, %v1991
      %v1993 = vrot.slane %v1992, 2
      %v1994 = vmax.f32 %v1992, %v1993
      %v1995 = vrot.slane %v1994, 1
      %v1996 = vmax.f32 %v1994, %v1995
      %v1997 = vsel %vm1835, %v1826, -inf
      %v1998 = vrot.slane %v1997, 4
      %v1999 = vmax.f32 %v1997, %v1998
      %v2000 = vrot.slane %v1999, 2
      %v2001 = vmax.f32 %v1999, %v2000
      %v2002 = vrot.slane %v2001, 1
      %v2003 = vmax.f32 %v2001, %v2002
      %v2004 = vsel %vm1835, %v1827, -inf
      %v2005 = vrot.slane %v2004, 4
      %v2006 = vmax.f32 %v2004, %v2005
      %v2007 = vrot.slane %v2006, 2
      %v2008 = vmax.f32 %v2006, %v2007
      %v2009 = vrot.slane %v2008, 1
      %v2010 = vmax.f32 %v2008, %v2009
      %v2011 = vsel %vm1835, %v1828, -inf
      %v2012 = vrot.slane %v2011, 4
      %v2013 = vmax.f32 %v2011, %v2012
      %v2014 = vrot.slane %v2013, 2
      %v2015 = vmax.f32 %v2013, %v2014
      %v2016 = vrot.slane %v2015, 1
      %v2017 = vmax.f32 %v2015, %v2016
      %v2018 = vsel %vm1835, %v1829, -inf
      %v2019 = vrot.slane %v2018, 4
      %v2020 = vmax.f32 %v2018, %v2019
      %v2021 = vrot.slane %v2020, 2
      %v2022 = vmax.f32 %v2020, %v2021
      %v2023 = vrot.slane %v2022, 1
      %v2024 = vmax.f32 %v2022, %v2023
      %v2025 = vsel %vm1835, %v1830, -inf
      %v2026 = vrot.slane %v2025, 4
      %v2027 = vmax.f32 %v2025, %v2026
      %v2028 = vrot.slane %v2027, 2
      %v2029 = vmax.f32 %v2027, %v2028
      %v2030 = vrot.slane %v2029, 1
      %v2031 = vmax.f32 %v2029, %v2030
      %v2032 = vsel %vm1835, %v1831, -inf
      %v2033 = vrot.slane %v2032, 4
      %v2034 = vmax.f32 %v2032, %v2033
      %v2035 = vrot.slane %v2034, 2
      %v2036 = vmax.f32 %v2034, %v2035
      %v2037 = vrot.slane %v2036, 1
      %v2038 = vmax.f32 %v2036, %v2037
      %v2039 = vsel %vm1835, %v1832, -inf
      %v2040 = vrot.slane %v2039, 4
      %v2041 = vmax.f32 %v2039, %v2040
      %v2042 = vrot.slane %v2041, 2
      %v2043 = vmax.f32 %v2041, %v2042
      %v2044 = vrot.slane %v2043, 1
      %v2045 = vmax.f32 %v2043, %v2044
      %v2046 = vsel %vm1835, %v1833, -inf
      %v2047 = vrot.slane %v2046, 4
      %v2048 = vmax.f32 %v2046, %v2047
      %v2049 = vrot.slane %v2048, 2
      %v2050 = vmax.f32 %v2048, %v2049
      %v2051 = vrot.slane %v2050, 1
      %v2052 = vmax.f32 %v2050, %v2051
      %v2053 = vsel %vm1835, %v1834, -inf
      %v2054 = vrot.slane %v2053, 4
      %v2055 = vmax.f32 %v2053, %v2054
      %v2056 = vrot.slane %v2055, 2
      %v2057 = vmax.f32 %v2055, %v2056
      %v2058 = vrot.slane %v2057, 1
      %v2059 = vmax.f32 %v2057, %v2058
      %v2060 = vsub.f32 %v1803, %v1842
      %v2061 = vsub.f32 %v1804, %v1849
      %v2062 = vsub.f32 %v1805, %v1856
      %v2063 = vsub.f32 %v1806, %v1863
      %v2064 = vsub.f32 %v1807, %v1870
      %v2065 = vsub.f32 %v1808, %v1877
      %v2066 = vsub.f32 %v1809, %v1884
      %v2067 = vsub.f32 %v1810, %v1891
      %v2068 = vsub.f32 %v1811, %v1898
      %v2069 = vsub.f32 %v1812, %v1905
      %v2070 = vsub.f32 %v1813, %v1912
      %v2071 = vsub.f32 %v1814, %v1919
      %v2072 = vsub.f32 %v1815, %v1926
      %v2073 = vsub.f32 %v1816, %v1933
      %v2074 = vsub.f32 %v1817, %v1940
      %v2075 = vsub.f32 %v1818, %v1947
      %v2076 = vsub.f32 %v1819, %v1954
      %v2077 = vsub.f32 %v1820, %v1961
      %v2078 = vsub.f32 %v1821, %v1968
      %v2079 = vsub.f32 %v1822, %v1975
      %v2080 = vsub.f32 %v1823, %v1982
      %v2081 = vsub.f32 %v1824, %v1989
      %v2082 = vsub.f32 %v1825, %v1996
      %v2083 = vsub.f32 %v1826, %v2003
      %v2084 = vsub.f32 %v1827, %v2010
      %v2085 = vsub.f32 %v1828, %v2017
      %v2086 = vsub.f32 %v1829, %v2024
      %v2087 = vsub.f32 %v1830, %v2031
      %v2088 = vsub.f32 %v1831, %v2038
      %v2089 = vsub.f32 %v1832, %v2045
      %v2090 = vsub.f32 %v1833, %v2052
      %v2091 = vsub.f32 %v1834, %v2059
      %v2092 = vmul.f32 %v2060, 1.442695
      %v2093 = vpow.pop %v2092
      %v2094 = vmul.f32 %v2061, 1.442695
      %v2095 = vpow.pop %v2094
      %v2096 = vmul.f32 %v2062, 1.442695
      %v2097 = vpow.pop %v2096
      %v2098 = vmul.f32 %v2063, 1.442695
      %v2099 = vpow.pop %v2098
      %v2100 = vmul.f32 %v2064, 1.442695
      %v2101 = vpow.pop %v2100
      %v2102 = vmul.f32 %v2065, 1.442695
      %v2103 = vpow.pop %v2102
      %v2104 = vmul.f32 %v2066, 1.442695
      %v2105 = vpow.pop %v2104
      %v2106 = vmul.f32 %v2067, 1.442695
      %v2107 = vpow.pop %v2106
      %v2108 = vmul.f32 %v2068, 1.442695
      %v2109 = vpow.pop %v2108
      %v2110 = vmul.f32 %v2069, 1.442695
      %v2111 = vpow.pop %v2110
      %v2112 = vmul.f32 %v2070, 1.442695
      %v2113 = vpow.pop %v2112
      %v2114 = vmul.f32 %v2071, 1.442695
      %v2115 = vpow.pop %v2114
      %v2116 = vmul.f32 %v2072, 1.442695
      %v2117 = vpow.pop %v2116
      %v2118 = vmul.f32 %v2073, 1.442695
      %v2119 = vpow.pop %v2118
      %v2120 = vmul.f32 %v2074, 1.442695
      %v2121 = vpow.pop %v2120
      %v2122 = vmul.f32 %v2075, 1.442695
      %v2123 = vpow.pop %v2122
      %v2124 = vmul.f32 %v2076, 1.442695
      %v2125 = vpow.pop %v2124
      %v2126 = vmul.f32 %v2077, 1.442695
      %v2127 = vpow.pop %v2126
      %v2128 = vmul.f32 %v2078, 1.442695
      %v2129 = vpow.pop %v2128
      %v2130 = vmul.f32 %v2079, 1.442695
      %v2131 = vpow.pop %v2130
      %v2132 = vmul.f32 %v2080, 1.442695
      %v2133 = vpow.pop %v2132
      %v2134 = vmul.f32 %v2081, 1.442695
      %v2135 = vpow.pop %v2134
      %v2136 = vmul.f32 %v2082, 1.442695
      %v2137 = vpow.pop %v2136
      %v2138 = vmul.f32 %v2083, 1.442695
      %v2139 = vpow.pop %v2138
      %v2140 = vmul.f32 %v2084, 1.442695
      %v2141 = vpow.pop %v2140
      %v2142 = vmul.f32 %v2085, 1.442695
      %v2143 = vpow.pop %v2142
      %v2144 = vmul.f32 %v2086, 1.442695
      %v2145 = vpow.pop %v2144
      %v2146 = vmul.f32 %v2087, 1.442695
      %v2147 = vpow.pop %v2146
      %v2148 = vmul.f32 %v2088, 1.442695
      %v2149 = vpow.pop %v2148
      %v2150 = vmul.f32 %v2089, 1.442695
      %v2151 = vpow.pop %v2150
      %v2152 = vmul.f32 %v2090, 1.442695
      %v2153 = vpow.pop %v2152
      %v2154 = vmul.f32 %v2091, 1.442695
      %v2155 = vpow.pop %v2154
      %v2156 = vsel %vm1835, %v2093, 0.0
      %v2157 = vrot.slane %v2156, 4
      %v2158 = vadd.f32 %v2156, %v2157
      %v2159 = vrot.slane %v2158, 2
      %v2160 = vadd.f32 %v2158, %v2159
      %v2161 = vrot.slane %v2160, 1
      %v2162 = vadd.f32 %v2160, %v2161
      %v2163 = vsel %vm1835, %v2095, 0.0
      %v2164 = vrot.slane %v2163, 4
      %v2165 = vadd.f32 %v2163, %v2164
      %v2166 = vrot.slane %v2165, 2
      %v2167 = vadd.f32 %v2165, %v2166
      %v2168 = vrot.slane %v2167, 1
      %v2169 = vadd.f32 %v2167, %v2168
      %v2170 = vsel %vm1835, %v2097, 0.0
      %v2171 = vrot.slane %v2170, 4
      %v2172 = vadd.f32 %v2170, %v2171
      %v2173 = vrot.slane %v2172, 2
      %v2174 = vadd.f32 %v2172, %v2173
      %v2175 = vrot.slane %v2174, 1
      %v2176 = vadd.f32 %v2174, %v2175
      %v2177 = vsel %vm1835, %v2099, 0.0
      %v2178 = vrot.slane %v2177, 4
      %v2179 = vadd.f32 %v2177, %v2178
      %v2180 = vrot.slane %v2179, 2
      %v2181 = vadd.f32 %v2179, %v2180
      %v2182 = vrot.slane %v2181, 1
      %v2183 = vadd.f32 %v2181, %v2182
      %v2184 = vsel %vm1835, %v2101, 0.0
      %v2185 = vrot.slane %v2184, 4
      %v2186 = vadd.f32 %v2184, %v2185
      %v2187 = vrot.slane %v2186, 2
      %v2188 = vadd.f32 %v2186, %v2187
      %v2189 = vrot.slane %v2188, 1
      %v2190 = vadd.f32 %v2188, %v2189
      %v2191 = vsel %vm1835, %v2103, 0.0
      %v2192 = vrot.slane %v2191, 4
      %v2193 = vadd.f32 %v2191, %v2192
      %v2194 = vrot.slane %v2193, 2
      %v2195 = vadd.f32 %v2193, %v2194
      %v2196 = vrot.slane %v2195, 1
      %v2197 = vadd.f32 %v2195, %v2196
      %v2198 = vsel %vm1835, %v2105, 0.0
      %v2199 = vrot.slane %v2198, 4
      %v2200 = vadd.f32 %v2198, %v2199
      %v2201 = vrot.slane %v2200, 2
      %v2202 = vadd.f32 %v2200, %v2201
      %v2203 = vrot.slane %v2202, 1
      %v2204 = vadd.f32 %v2202, %v2203
      %v2205 = vsel %vm1835, %v2107, 0.0
      %v2206 = vrot.slane %v2205, 4
      %v2207 = vadd.f32 %v2205, %v2206
      %v2208 = vrot.slane %v2207, 2
      %v2209 = vadd.f32 %v2207, %v2208
      %v2210 = vrot.slane %v2209, 1
      %v2211 = vadd.f32 %v2209, %v2210
      %v2212 = vsel %vm1835, %v2109, 0.0
      %v2213 = vrot.slane %v2212, 4
      %v2214 = vadd.f32 %v2212, %v2213
      %v2215 = vrot.slane %v2214, 2
      %v2216 = vadd.f32 %v2214, %v2215
      %v2217 = vrot.slane %v2216, 1
      %v2218 = vadd.f32 %v2216, %v2217
      %v2219 = vsel %vm1835, %v2111, 0.0
      %v2220 = vrot.slane %v2219, 4
      %v2221 = vadd.f32 %v2219, %v2220
      %v2222 = vrot.slane %v2221, 2
      %v2223 = vadd.f32 %v2221, %v2222
      %v2224 = vrot.slane %v2223, 1
      %v2225 = vadd.f32 %v2223, %v2224
      %v2226 = vsel %vm1835, %v2113, 0.0
      %v2227 = vrot.slane %v2226, 4
      %v2228 = vadd.f32 %v2226, %v2227
      %v2229 = vrot.slane %v2228, 2
      %v2230 = vadd.f32 %v2228, %v2229
      %v2231 = vrot.slane %v2230, 1
      %v2232 = vadd.f32 %v2230, %v2231
      %v2233 = vsel %vm1835, %v2115, 0.0
      %v2234 = vrot.slane %v2233, 4
      %v2235 = vadd.f32 %v2233, %v2234
      %v2236 = vrot.slane %v2235, 2
      %v2237 = vadd.f32 %v2235, %v2236
      %v2238 = vrot.slane %v2237, 1
      %v2239 = vadd.f32 %v2237, %v2238
      %v2240 = vsel %vm1835, %v2117, 0.0
      %v2241 = vrot.slane %v2240, 4
      %v2242 = vadd.f32 %v2240, %v2241
      %v2243 = vrot.slane %v2242, 2
      %v2244 = vadd.f32 %v2242, %v2243
      %v2245 = vrot.slane %v2244, 1
      %v2246 = vadd.f32 %v2244, %v2245
      %v2247 = vsel %vm1835, %v2119, 0.0
      %v2248 = vrot.slane %v2247, 4
      %v2249 = vadd.f32 %v2247, %v2248
      %v2250 = vrot.slane %v2249, 2
      %v2251 = vadd.f32 %v2249, %v2250
      %v2252 = vrot.slane %v2251, 1
      %v2253 = vadd.f32 %v2251, %v2252
      %v2254 = vsel %vm1835, %v2121, 0.0
      %v2255 = vrot.slane %v2254, 4
      %v2256 = vadd.f32 %v2254, %v2255
      %v2257 = vrot.slane %v2256, 2
      %v2258 = vadd.f32 %v2256, %v2257
      %v2259 = vrot.slane %v2258, 1
      %v2260 = vadd.f32 %v2258, %v2259
      %v2261 = vsel %vm1835, %v2123, 0.0
      %v2262 = vrot.slane %v2261, 4
      %v2263 = vadd.f32 %v2261, %v2262
      %v2264 = vrot.slane %v2263, 2
      %v2265 = vadd.f32 %v2263, %v2264
      %v2266 = vrot.slane %v2265, 1
      %v2267 = vadd.f32 %v2265, %v2266
      %v2268 = vsel %vm1835, %v2125, 0.0
      %v2269 = vrot.slane %v2268, 4
      %v2270 = vadd.f32 %v2268, %v2269
      %v2271 = vrot.slane %v2270, 2
      %v2272 = vadd.f32 %v2270, %v2271
      %v2273 = vrot.slane %v2272, 1
      %v2274 = vadd.f32 %v2272, %v2273
      %v2275 = vsel %vm1835, %v2127, 0.0
      %v2276 = vrot.slane %v2275, 4
      %v2277 = vadd.f32 %v2275, %v2276
      %v2278 = vrot.slane %v2277, 2
      %v2279 = vadd.f32 %v2277, %v2278
      %v2280 = vrot.slane %v2279, 1
      %v2281 = vadd.f32 %v2279, %v2280
      %v2282 = vsel %vm1835, %v2129, 0.0
      %v2283 = vrot.slane %v2282, 4
      %v2284 = vadd.f32 %v2282, %v2283
      %v2285 = vrot.slane %v2284, 2
      %v2286 = vadd.f32 %v2284, %v2285
      %v2287 = vrot.slane %v2286, 1
      %v2288 = vadd.f32 %v2286, %v2287
      %v2289 = vsel %vm1835, %v2131, 0.0
      %v2290 = vrot.slane %v2289, 4
      %v2291 = vadd.f32 %v2289, %v2290
      %v2292 = vrot.slane %v2291, 2
      %v2293 = vadd.f32 %v2291, %v2292
      %v2294 = vrot.slane %v2293, 1
      %v2295 = vadd.f32 %v2293, %v2294
      %v2296 = vsel %vm1835, %v2133, 0.0
      %v2297 = vrot.slane %v2296, 4
      %v2298 = vadd.f32 %v2296, %v2297
      %v2299 = vrot.slane %v2298, 2
      %v2300 = vadd.f32 %v2298, %v2299
      %v2301 = vrot.slane %v2300, 1
      %v2302 = vadd.f32 %v2300, %v2301
      %v2303 = vsel %vm1835, %v2135, 0.0
      %v2304 = vrot.slane %v2303, 4
      %v2305 = vadd.f32 %v2303, %v2304
      %v2306 = vrot.slane %v2305, 2
      %v2307 = vadd.f32 %v2305, %v2306
      %v2308 = vrot.slane %v2307, 1
      %v2309 = vadd.f32 %v2307, %v2308
      %v2310 = vsel %vm1835, %v2137, 0.0
      %v2311 = vrot.slane %v2310, 4
      %v2312 = vadd.f32 %v2310, %v2311
      %v2313 = vrot.slane %v2312, 2
      %v2314 = vadd.f32 %v2312, %v2313
      %v2315 = vrot.slane %v2314, 1
      %v2316 = vadd.f32 %v2314, %v2315
      %v2317 = vsel %vm1835, %v2139, 0.0
      %v2318 = vrot.slane %v2317, 4
      %v2319 = vadd.f32 %v2317, %v2318
      %v2320 = vrot.slane %v2319, 2
      %v2321 = vadd.f32 %v2319, %v2320
      %v2322 = vrot.slane %v2321, 1
      %v2323 = vadd.f32 %v2321, %v2322
      %v2324 = vsel %vm1835, %v2141, 0.0
      %v2325 = vrot.slane %v2324, 4
      %v2326 = vadd.f32 %v2324, %v2325
      %v2327 = vrot.slane %v2326, 2
      %v2328 = vadd.f32 %v2326, %v2327
      %v2329 = vrot.slane %v2328, 1
      %v2330 = vadd.f32 %v2328, %v2329
      %v2331 = vsel %vm1835, %v2143, 0.0
      %v2332 = vrot.slane %v2331, 4
      %v2333 = vadd.f32 %v2331, %v2332
      %v2334 = vrot.slane %v2333, 2
      %v2335 = vadd.f32 %v2333, %v2334
      %v2336 = vrot.slane %v2335, 1
      %v2337 = vadd.f32 %v2335, %v2336
      %v2338 = vsel %vm1835, %v2145, 0.0
      %v2339 = vrot.slane %v2338, 4
      %v2340 = vadd.f32 %v2338, %v2339
      %v2341 = vrot.slane %v2340, 2
      %v2342 = vadd.f32 %v2340, %v2341
      %v2343 = vrot.slane %v2342, 1
      %v2344 = vadd.f32 %v2342, %v2343
      %v2345 = vsel %vm1835, %v2147, 0.0
      %v2346 = vrot.slane %v2345, 4
      %v2347 = vadd.f32 %v2345, %v2346
      %v2348 = vrot.slane %v2347, 2
      %v2349 = vadd.f32 %v2347, %v2348
      %v2350 = vrot.slane %v2349, 1
      %v2351 = vadd.f32 %v2349, %v2350
      %v2352 = vsel %vm1835, %v2149, 0.0
      %v2353 = vrot.slane %v2352, 4
      %v2354 = vadd.f32 %v2352, %v2353
      %v2355 = vrot.slane %v2354, 2
      %v2356 = vadd.f32 %v2354, %v2355
      %v2357 = vrot.slane %v2356, 1
      %v2358 = vadd.f32 %v2356, %v2357
      %v2359 = vsel %vm1835, %v2151, 0.0
      %v2360 = vrot.slane %v2359, 4
      %v2361 = vadd.f32 %v2359, %v2360
      %v2362 = vrot.slane %v2361, 2
      %v2363 = vadd.f32 %v2361, %v2362
      %v2364 = vrot.slane %v2363, 1
      %v2365 = vadd.f32 %v2363, %v2364
      %v2366 = vsel %vm1835, %v2153, 0.0
      %v2367 = vrot.slane %v2366, 4
      %v2368 = vadd.f32 %v2366, %v2367
      %v2369 = vrot.slane %v2368, 2
      %v2370 = vadd.f32 %v2368, %v2369
      %v2371 = vrot.slane %v2370, 1
      %v2372 = vadd.f32 %v2370, %v2371
      %v2373 = vsel %vm1835, %v2155, 0.0
      %v2374 = vrot.slane %v2373, 4
      %v2375 = vadd.f32 %v2373, %v2374
      %v2376 = vrot.slane %v2375, 2
      %v2377 = vadd.f32 %v2375, %v2376
      %v2378 = vrot.slane %v2377, 1
      %v2379 = vadd.f32 %v2377, %v2378
      %v2380 = vrcp.pop %v2162
      %v2381 = vmul.f32 %v2093, %v2380
      %v2382 = vrcp.pop %v2169
      %v2383 = vmul.f32 %v2095, %v2382
      %v2384 = vrcp.pop %v2176
      %v2385 = vmul.f32 %v2097, %v2384
      %v2386 = vrcp.pop %v2183
      %v2387 = vmul.f32 %v2099, %v2386
      %v2388 = vrcp.pop %v2190
      %v2389 = vmul.f32 %v2101, %v2388
      %v2390 = vrcp.pop %v2197
      %v2391 = vmul.f32 %v2103, %v2390
      %v2392 = vrcp.pop %v2204
      %v2393 = vmul.f32 %v2105, %v2392
      %v2394 = vrcp.pop %v2211
      %v2395 = vmul.f32 %v2107, %v2394
      %v2396 = vrcp.pop %v2218
      %v2397 = vmul.f32 %v2109, %v2396
      %v2398 = vrcp.pop %v2225
      %v2399 = vmul.f32 %v2111, %v2398
      %v2400 = vrcp.pop %v2232
      %v2401 = vmul.f32 %v2113, %v2400
      %v2402 = vrcp.pop %v2239
      %v2403 = vmul.f32 %v2115, %v2402
      %v2404 = vrcp.pop %v2246
      %v2405 = vmul.f32 %v2117, %v2404
      %v2406 = vrcp.pop %v2253
      %v2407 = vmul.f32 %v2119, %v2406
      %v2408 = vrcp.pop %v2260
      %v2409 = vmul.f32 %v2121, %v2408
      %v2410 = vrcp.pop %v2267
      %v2411 = vmul.f32 %v2123, %v2410
      %v2412 = vrcp.pop %v2274
      %v2413 = vmul.f32 %v2125, %v2412
      %v2414 = vrcp.pop %v2281
      %v2415 = vmul.f32 %v2127, %v2414
      %v2416 = vrcp.pop %v2288
      %v2417 = vmul.f32 %v2129, %v2416
      %v2418 = vrcp.pop %v2295
      %v2419 = vmul.f32 %v2131, %v2418
      %v2420 = vrcp.pop %v2302
      %v2421 = vmul.f32 %v2133, %v2420
      %v2422 = vrcp.pop %v2309
      %v2423 = vmul.f32 %v2135, %v2422
      %v2424 = vrcp.pop %v2316
      %v2425 = vmul.f32 %v2137, %v2424
      %v2426 = vrcp.pop %v2323
      %v2427 = vmul.f32 %v2139, %v2426
      %v2428 = vrcp.pop %v2330
      %v2429 = vmul.f32 %v2141, %v2428
      %v2430 = vrcp.pop %v2337
      %v2431 = vmul.f32 %v2143, %v2430
      %v2432 = vrcp.pop %v2344
      %v2433 = vmul.f32 %v2145, %v2432
      %v2434 = vrcp.pop %v2351
      %v2435 = vmul.f32 %v2147, %v2434
      %v2436 = vrcp.pop %v2358
      %v2437 = vmul.f32 %v2149, %v2436
      %v2438 = vrcp.pop %v2365
      %v2439 = vmul.f32 %v2151, %v2438
      %v2440 = vrcp.pop %v2372
      %v2441 = vmul.f32 %v2153, %v2440
      %v2442 = vrcp.pop %v2379
      %v2443 = vmul.f32 %v2155, %v2442
      %v2444 = vld [vmem:[%s6] sm:$0x3]
      %v2446 = vsel %vm1835, %v2381, 0
      %v2449 = vsel %vm1835, %v2383, 0
      %v2452 = vsel %vm1835, %v2385, 0
      %v2455 = vsel %vm1835, %v2387, 0
      %v2458 = vsel %vm1835, %v2389, 0
      %v2461 = vsel %vm1835, %v2391, 0
      %v2464 = vsel %vm1835, %v2393, 0
      %v2467 = vsel %vm1835, %v2395, 0
      %v2470 = vsel %vm1835, %v2397, 0
      %v2473 = vsel %vm1835, %v2399, 0
      %v2476 = vsel %vm1835, %v2401, 0
      %v2479 = vsel %vm1835, %v2403, 0
      %v2482 = vsel %vm1835, %v2405, 0
      %v2485 = vsel %vm1835, %v2407, 0
      %v2488 = vsel %vm1835, %v2409, 0
      %v2491 = vsel %vm1835, %v2411, 0
      %v2494 = vsel %vm1835, %v2413, 0
      %v2497 = vsel %vm1835, %v2415, 0
      %v2500 = vsel %vm1835, %v2417, 0
      %v2503 = vsel %vm1835, %v2419, 0
      %v2506 = vsel %vm1835, %v2421, 0
      %v2509 = vsel %vm1835, %v2423, 0
      %v2512 = vsel %vm1835, %v2425, 0
      %v2515 = vsel %vm1835, %v2427, 0
      %v2518 = vsel %vm1835, %v2429, 0
      %v2521 = vsel %vm1835, %v2431, 0
      %v2524 = vsel %vm1835, %v2433, 0
      %v2527 = vsel %vm1835, %v2435, 0
      %v2530 = vsel %vm1835, %v2437, 0
      %v2533 = vsel %vm1835, %v2439, 0
      %v2536 = vsel %vm1835, %v2441, 0
      %v2539 = vsel %vm1835, %v2443, 0
      %vm2541 = vcmask 1041408
      %v2543 = vsel %vm2541, %v2444, 0
      %2545 = vmatprep.subr.mxu0 0.0
      %2546 = vmatpush1.msra.mxu0 %v2543
      %2547 = vmatprep.subr.mxu0 0.0
      %2548 = vmatpush1.msra.mxu0 0.0
      %2549 = vmatprep.subr.mxu0 0.0
      %2550 = vmatpush1.msra.mxu0 0.0
      %2551 = vmatprep.subr.mxu0 0.0
      %2552 = vmatpush1.msra.mxu0 0.0
      %2553 = vmatprep.subr.mxu0 0.0
      %2554 = vmatpush1.msra.mxu0 0.0
      %2555 = vmatprep.subr.mxu0 0.0
      %2556 = vmatpush1.msra.mxu0 0.0
      %2557 = vmatprep.subr.mxu0 0.0
      %2558 = vmatpush1.msra.mxu0 0.0
      %2559 = vmatprep.subr.mxu0 0.0
      %2560 = vmatpush1.msra.mxu0 0.0
      %2561 = vmatprep.subr.mxu0 0.0
      %2562 = vmatpush1.msra.mxu0 0.0
      %2563 = vmatprep.subr.mxu0 0.0
      %2564 = vmatpush1.msra.mxu0 0.0
      %2565 = vmatprep.subr.mxu0 0.0
      %2566 = vmatpush1.msra.mxu0 0.0
      %2567 = vmatprep.subr.mxu0 0.0
      %2568 = vmatpush1.msra.mxu0 0.0
      %2569 = vmatprep.subr.mxu0 0.0
      %2570 = vmatpush1.msra.mxu0 0.0
      %2571 = vmatprep.subr.mxu0 0.0
      %2572 = vmatpush1.msra.mxu0 0.0
      %2573 = vmatprep.subr.mxu0 0.0
      %2574 = vmatpush1.msra.mxu0 0.0
      %2575 = vmatprep.subr.mxu0 0.0
      %2576 = vmatpush1.msra.mxu0 0.0
      %2577 = vmatprep.subr.mxu0 0.0
      %2578 = vmatpush1.msra.mxu0 0.0
      %2579 = vmatprep.subr.mxu0 0.0
      %2580 = vmatpush1.msra.mxu0 0.0
      %2581 = vmatprep.subr.mxu0 0.0
      %2582 = vmatpush1.msra.mxu0 0.0
      %2583 = vmatprep.subr.mxu0 0.0
      %2584 = vmatpush1.msra.mxu0 0.0
      %2585 = vmatprep.subr.mxu0 0.0
      %2586 = vmatpush1.msra.mxu0 0.0
      %2587 = vmatprep.subr.mxu0 0.0
      %2588 = vmatpush1.msra.mxu0 0.0
      %2589 = vmatprep.subr.mxu0 0.0
      %2590 = vmatpush1.msra.mxu0 0.0
      %2591 = vmatprep.subr.mxu0 0.0
      %2592 = vmatpush1.msra.mxu0 0.0
      %2593 = vmatprep.subr.mxu0 0.0
      %2594 = vmatpush1.msra.mxu0 0.0
      %2595 = vmatprep.subr.mxu0 0.0
      %2596 = vmatpush1.msra.mxu0 0.0
      %2597 = vmatprep.subr.mxu0 0.0
      %2598 = vmatpush1.msra.mxu0 0.0
      %2599 = vmatprep.subr.mxu0 0.0
      %2600 = vmatpush1.msra.mxu0 0.0
      %2601 = vmatprep.subr.mxu0 0.0
      %2602 = vmatpush1.msra.mxu0 0.0
      %2603 = vmatprep.subr.mxu0 0.0
      %2604 = vmatpush1.msra.mxu0 0.0
      %2605 = vmatprep.subr.mxu0 0.0
      %2606 = vmatpush1.msra.mxu0 0.0
      %2607 = vmatprep.subr.mxu0 0.0
      %2608 = vmatpush1.msra.mxu0 0.0
      %2609 = vmatprep.mubr.f32.mxu0 0.0
      %2610 = vmatmul.mubr.f32.gmra.mrb[0].mxu0 %v2446
      %v2611 = vpop.f32.mrb[0].mxu0
      %v2612 = vadd.f32 0.0, %v2611
      %v2613 = vpop.f32.mrb[0].mxu0
      %2614 = vmatprep.mubr.f32.mxu0 0.0
      %2615 = vmatmul.mubr.f32.gmra.mrb[0].mxu0 %v2449
      %v2616 = vpop.f32.mrb[0].mxu0
      %v2617 = vadd.f32 0.0, %v2616
      %v2618 = vpop.f32.mrb[0].mxu0
      %2619 = vmatprep.mubr.f32.mxu0 0.0
      %2620 = vmatmul.mubr.f32.gmra.mrb[0].mxu0 %v2452
      %v2621 = vpop.f32.mrb[0].mxu0
      %v2622 = vadd.f32 0.0, %v2621
      %v2623 = vpop.f32.mrb[0].mxu0
      %2624 = vmatprep.mubr.f32.mxu0 0.0
      %2625 = vmatmul.mubr.f32.gmra.mrb[0].mxu0 %v2455
      %v2626 = vpop.f32.mrb[0].mxu0
      %v2627 = vadd.f32 0.0, %v2626
      %v2628 = vpop.f32.mrb[0].mxu0
      %2629 = vmatprep.mubr.f32.mxu0 0.0
      %2630 = vmatmul.mubr.f32.gmra.mrb[0].mxu0 %v2458
      %v2631 = vpop.f32.mrb[0].mxu0
      %v2632 = vadd.f32 0.0, %v2631
      %v2633 = vpop.f32.mrb[0].mxu0
      %2634 = vmatprep.mubr.f32.mxu0 0.0
      %2635 = vmatmul.mubr.f32.gmra.mrb[0].mxu0 %v2461
      %v2636 = vpop.f32.mrb[0].mxu0
      %v2637 = vadd.f32 0.0, %v2636
      %v2638 = vpop.f32.mrb[0].mxu0
      %2639 = vmatprep.mubr.f32.mxu0 0.0
      %2640 = vmatmul.mubr.f32.gmra.mrb[0].mxu0 %v2464
      %v2641 = vpop.f32.mrb[0].mxu0
      %v2642 = vadd.f32 0.0, %v2641
      %v2643 = vpop.f32.mrb[0].mxu0
      %2644 = vmatprep.mubr.f32.mxu0 0.0
      %2645 = vmatmul.mubr.f32.gmra.mrb[0].mxu0 %v2467
      %v2646 = vpop.f32.mrb[0].mxu0
      %v2647 = vadd.f32 0.0, %v2646
      %v2648 = vpop.f32.mrb[0].mxu0
      %2649 = vmatprep.mubr.f32.mxu0 0.0
      %2650 = vmatmul.mubr.f32.gmra.mrb[0].mxu0 %v2470
      %v2651 = vpop.f32.mrb[0].mxu0
      %v2652 = vadd.f32 0.0, %v2651
      %v2653 = vpop.f32.mrb[0].mxu0
      %2654 = vmatprep.mubr.f32.mxu0 0.0
      %2655 = vmatmul.mubr.f32.gmra.mrb[0].mxu0 %v2473
      %v2656 = vpop.f32.mrb[0].mxu0
      %v2657 = vadd.f32 0.0, %v2656
      %v2658 = vpop.f32.mrb[0].mxu0
      %2659 = vmatprep.mubr.f32.mxu0 0.0
      %2660 = vmatmul.mubr.f32.gmra.mrb[0].mxu0 %v2476
      %v2661 = vpop.f32.mrb[0].mxu0
      %v2662 = vadd.f32 0.0, %v2661
      %v2663 = vpop.f32.mrb[0].mxu0
      %2664 = vmatprep.mubr.f32.mxu0 0.0
      %2665 = vmatmul.mubr.f32.gmra.mrb[0].mxu0 %v2479
      %v2666 = vpop.f32.mrb[0].mxu0
      %v2667 = vadd.f32 0.0, %v2666
      %v2668 = vpop.f32.mrb[0].mxu0
      %2669 = vmatprep.mubr.f32.mxu0 0.0
      %2670 = vmatmul.mubr.f32.gmra.mrb[0].mxu0 %v2482
      %v2671 = vpop.f32.mrb[0].mxu0
      %v2672 = vadd.f32 0.0, %v2671
      %v2673 = vpop.f32.mrb[0].mxu0
      %2674 = vmatprep.mubr.f32.mxu0 0.0
      %2675 = vmatmul.mubr.f32.gmra.mrb[0].mxu0 %v2485
      %v2676 = vpop.f32.mrb[0].mxu0
      %v2677 = vadd.f32 0.0, %v2676
      %v2678 = vpop.f32.mrb[0].mxu0
      %2679 = vmatprep.mubr.f32.mxu0 0.0
      %2680 = vmatmul.mubr.f32.gmra.mrb[0].mxu0 %v2488
      %v2681 = vpop.f32.mrb[0].mxu0
      %v2682 = vadd.f32 0.0, %v2681
      %v2683 = vpop.f32.mrb[0].mxu0
      %2684 = vmatprep.mubr.f32.mxu0 0.0
      %2685 = vmatmul.mubr.f32.gmra.mrb[0].mxu0 %v2491
      %v2686 = vpop.f32.mrb[0].mxu0
      %v2687 = vadd.f32 0.0, %v2686
      %v2688 = vpop.f32.mrb[0].mxu0
      %2689 = vmatprep.mubr.f32.mxu0 0.0
      %2690 = vmatmul.mubr.f32.gmra.mrb[0].mxu0 %v2494
      %v2691 = vpop.f32.mrb[0].mxu0
      %v2692 = vadd.f32 0.0, %v2691
      %v2693 = vpop.f32.mrb[0].mxu0
      %2694 = vmatprep.mubr.f32.mxu0 0.0
      %2695 = vmatmul.mubr.f32.gmra.mrb[0].mxu0 %v2497
      %v2696 = vpop.f32.mrb[0].mxu0
      %v2697 = vadd.f32 0.0, %v2696
      %v2698 = vpop.f32.mrb[0].mxu0
      %2699 = vmatprep.mubr.f32.mxu0 0.0
      %2700 = vmatmul.mubr.f32.gmra.mrb[0].mxu0 %v2500
      %v2701 = vpop.f32.mrb[0].mxu0
      %v2702 = vadd.f32 0.0, %v2701
      %v2703 = vpop.f32.mrb[0].mxu0
      %2704 = vmatprep.mubr.f32.mxu0 0.0
      %2705 = vmatmul.mubr.f32.gmra.mrb[0].mxu0 %v2503
      %v2706 = vpop.f32.mrb[0].mxu0
      %v2707 = vadd.f32 0.0, %v2706
      %v2708 = vpop.f32.mrb[0].mxu0
      %2709 = vmatprep.mubr.f32.mxu0 0.0
      %2710 = vmatmul.mubr.f32.gmra.mrb[0].mxu0 %v2506
      %v2711 = vpop.f32.mrb[0].mxu0
      %v2712 = vadd.f32 0.0, %v2711
      %v2713 = vpop.f32.mrb[0].mxu0
      %2714 = vmatprep.mubr.f32.mxu0 0.0
      %2715 = vmatmul.mubr.f32.gmra.mrb[0].mxu0 %v2509
      %v2716 = vpop.f32.mrb[0].mxu0
      %v2717 = vadd.f32 0.0, %v2716
      %v2718 = vpop.f32.mrb[0].mxu0
      %2719 = vmatprep.mubr.f32.mxu0 0.0
      %2720 = vmatmul.mubr.f32.gmra.mrb[0].mxu0 %v2512
      %v2721 = vpop.f32.mrb[0].mxu0
      %v2722 = vadd.f32 0.0, %v2721
      %v2723 = vpop.f32.mrb[0].mxu0
      %2724 = vmatprep.mubr.f32.mxu0 0.0
      %2725 = vmatmul.mubr.f32.gmra.mrb[0].mxu0 %v2515
      %v2726 = vpop.f32.mrb[0].mxu0
      %v2727 = vadd.f32 0.0, %v2726
      %v2728 = vpop.f32.mrb[0].mxu0
      %2729 = vmatprep.mubr.f32.mxu0 0.0
      %2730 = vmatmul.mubr.f32.gmra.mrb[0].mxu0 %v2518
      %v2731 = vpop.f32.mrb[0].mxu0
      %v2732 = vadd.f32 0.0, %v2731
      %v2733 = vpop.f32.mrb[0].mxu0
      %2734 = vmatprep.mubr.f32.mxu0 0.0
      %2735 = vmatmul.mubr.f32.gmra.mrb[0].mxu0 %v2521
      %v2736 = vpop.f32.mrb[0].mxu0
      %v2737 = vadd.f32 0.0, %v2736
      %v2738 = vpop.f32.mrb[0].mxu0
      %2739 = vmatprep.mubr.f32.mxu0 0.0
      %2740 = vmatmul.mubr.f32.gmra.mrb[0].mxu0 %v2524
      %v2741 = vpop.f32.mrb[0].mxu0
      %v2742 = vadd.f32 0.0, %v2741
      %v2743 = vpop.f32.mrb[0].mxu0
      %2744 = vmatprep.mubr.f32.mxu0 0.0
      %2745 = vmatmul.mubr.f32.gmra.mrb[0].mxu0 %v2527
      %v2746 = vpop.f32.mrb[0].mxu0
      %v2747 = vadd.f32 0.0, %v2746
      %v2748 = vpop.f32.mrb[0].mxu0
      %2749 = vmatprep.mubr.f32.mxu0 0.0
      %2750 = vmatmul.mubr.f32.gmra.mrb[0].mxu0 %v2530
      %v2751 = vpop.f32.mrb[0].mxu0
      %v2752 = vadd.f32 0.0, %v2751
      %v2753 = vpop.f32.mrb[0].mxu0
      %2754 = vmatprep.mubr.f32.mxu0 0.0
      %2755 = vmatmul.mubr.f32.gmra.mrb[0].mxu0 %v2533
      %v2756 = vpop.f32.mrb[0].mxu0
      %v2757 = vadd.f32 0.0, %v2756
      %v2758 = vpop.f32.mrb[0].mxu0
      %2759 = vmatprep.mubr.f32.mxu0 0.0
      %2760 = vmatmul.mubr.f32.gmra.mrb[0].mxu0 %v2536
      %v2761 = vpop.f32.mrb[0].mxu0
      %v2762 = vadd.f32 0.0, %v2761
      %v2763 = vpop.f32.mrb[0].mxu0
      %2764 = vmatprep.mubr.f32.mxu0 0.0
      %2765 = vmatmul.mubr.f32.gmra.mrb[0].mxu0 %v2539
      %v2766 = vpop.f32.mrb[0].mxu0
      %v2767 = vadd.f32 0.0, %v2766
      %v2768 = vpop.f32.mrb[0].mxu0
      %2769 = vdwg.mxu0
      %v2770 = vmul.f32 %v2612, %v598
      %v2771 = vmul.f32 %v2617, %v603
      %v2772 = vmul.f32 %v2622, %v608
      %v2773 = vmul.f32 %v2627, %v613
      %v2774 = vmul.f32 %v2632, %v618
      %v2775 = vmul.f32 %v2637, %v623
      %v2776 = vmul.f32 %v2642, %v628
      %v2777 = vmul.f32 %v2647, %v633
      %v2778 = vmul.f32 %v2652, %v638
      %v2779 = vmul.f32 %v2657, %v643
      %v2780 = vmul.f32 %v2662, %v648
      %v2781 = vmul.f32 %v2667, %v653
      %v2782 = vmul.f32 %v2672, %v658
      %v2783 = vmul.f32 %v2677, %v663
      %v2784 = vmul.f32 %v2682, %v668
      %v2785 = vmul.f32 %v2687, %v673
      %v2786 = vmul.f32 %v2692, %v678
      %v2787 = vmul.f32 %v2697, %v683
      %v2788 = vmul.f32 %v2702, %v688
      %v2789 = vmul.f32 %v2707, %v693
      %v2790 = vmul.f32 %v2712, %v698
      %v2791 = vmul.f32 %v2717, %v703
      %v2792 = vmul.f32 %v2722, %v708
      %v2793 = vmul.f32 %v2727, %v713
      %v2794 = vmul.f32 %v2732, %v718
      %v2795 = vmul.f32 %v2737, %v723
      %v2796 = vmul.f32 %v2742, %v728
      %v2797 = vmul.f32 %v2747, %v733
      %v2798 = vmul.f32 %v2752, %v738
      %v2799 = vmul.f32 %v2757, %v743
      %v2800 = vmul.f32 %v2762, %v748
      %v2801 = vmul.f32 %v2767, %v753
      %v2802 = vsel %vm1257, %v2770, 0.0
      %v2803 = vrot.slane %v2802, 4
      %v2804 = vadd.f32 %v2802, %v2803
      %v2805 = vrot.slane %v2804, 2
      %v2806 = vadd.f32 %v2804, %v2805
      %v2807 = vrot.slane %v2806, 1
      %v2808 = vadd.f32 %v2806, %v2807
      %v2809 = vsel %vm1257, %v2771, 0.0
      %v2810 = vrot.slane %v2809, 4
      %v2811 = vadd.f32 %v2809, %v2810
      %v2812 = vrot.slane %v2811, 2
      %v2813 = vadd.f32 %v2811, %v2812
      %v2814 = vrot.slane %v2813, 1
      %v2815 = vadd.f32 %v2813, %v2814
      %v2816 = vsel %vm1257, %v2772, 0.0
      %v2817 = vrot.slane %v2816, 4
      %v2818 = vadd.f32 %v2816, %v2817
      %v2819 = vrot.slane %v2818, 2
      %v2820 = vadd.f32 %v2818, %v2819
      %v2821 = vrot.slane %v2820, 1
      %v2822 = vadd.f32 %v2820, %v2821
      %v2823 = vsel %vm1257, %v2773, 0.0
      %v2824 = vrot.slane %v2823, 4
      %v2825 = vadd.f32 %v2823, %v2824
      %v2826 = vrot.slane %v2825, 2
      %v2827 = vadd.f32 %v2825, %v2826
      %v2828 = vrot.slane %v2827, 1
      %v2829 = vadd.f32 %v2827, %v2828
      %v2830 = vsel %vm1257, %v2774, 0.0
      %v2831 = vrot.slane %v2830, 4
      %v2832 = vadd.f32 %v2830, %v2831
      %v2833 = vrot.slane %v2832, 2
      %v2834 = vadd.f32 %v2832, %v2833
      %v2835 = vrot.slane %v2834, 1
      %v2836 = vadd.f32 %v2834, %v2835
      %v2837 = vsel %vm1257, %v2775, 0.0
      %v2838 = vrot.slane %v2837, 4
      %v2839 = vadd.f32 %v2837, %v2838
      %v2840 = vrot.slane %v2839, 2
      %v2841 = vadd.f32 %v2839, %v2840
      %v2842 = vrot.slane %v2841, 1
      %v2843 = vadd.f32 %v2841, %v2842
      %v2844 = vsel %vm1257, %v2776, 0.0
      %v2845 = vrot.slane %v2844, 4
      %v2846 = vadd.f32 %v2844, %v2845
      %v2847 = vrot.slane %v2846, 2
      %v2848 = vadd.f32 %v2846, %v2847
      %v2849 = vrot.slane %v2848, 1
      %v2850 = vadd.f32 %v2848, %v2849
      %v2851 = vsel %vm1257, %v2777, 0.0
      %v2852 = vrot.slane %v2851, 4
      %v2853 = vadd.f32 %v2851, %v2852
      %v2854 = vrot.slane %v2853, 2
      %v2855 = vadd.f32 %v2853, %v2854
      %v2856 = vrot.slane %v2855, 1
      %v2857 = vadd.f32 %v2855, %v2856
      %v2858 = vsel %vm1257, %v2778, 0.0
      %v2859 = vrot.slane %v2858, 4
      %v2860 = vadd.f32 %v2858, %v2859
      %v2861 = vrot.slane %v2860, 2
      %v2862 = vadd.f32 %v2860, %v2861
      %v2863 = vrot.slane %v2862, 1
      %v2864 = vadd.f32 %v2862, %v2863
      %v2865 = vsel %vm1257, %v2779, 0.0
      %v2866 = vrot.slane %v2865, 4
      %v2867 = vadd.f32 %v2865, %v2866
      %v2868 = vrot.slane %v2867, 2
      %v2869 = vadd.f32 %v2867, %v2868
      %v2870 = vrot.slane %v2869, 1
      %v2871 = vadd.f32 %v2869, %v2870
      %v2872 = vsel %vm1257, %v2780, 0.0
      %v2873 = vrot.slane %v2872, 4
      %v2874 = vadd.f32 %v2872, %v2873
      %v2875 = vrot.slane %v2874, 2
      %v2876 = vadd.f32 %v2874, %v2875
      %v2877 = vrot.slane %v2876, 1
      %v2878 = vadd.f32 %v2876, %v2877
      %v2879 = vsel %vm1257, %v2781, 0.0
      %v2880 = vrot.slane %v2879, 4
      %v2881 = vadd.f32 %v2879, %v2880
      %v2882 = vrot.slane %v2881, 2
      %v2883 = vadd.f32 %v2881, %v2882
      %v2884 = vrot.slane %v2883, 1
      %v2885 = vadd.f32 %v2883, %v2884
      %v2886 = vsel %vm1257, %v2782, 0.0
      %v2887 = vrot.slane %v2886, 4
      %v2888 = vadd.f32 %v2886, %v2887
      %v2889 = vrot.slane %v2888, 2
      %v2890 = vadd.f32 %v2888, %v2889
      %v2891 = vrot.slane %v2890, 1
      %v2892 = vadd.f32 %v2890, %v2891
      %v2893 = vsel %vm1257, %v2783, 0.0
      %v2894 = vrot.slane %v2893, 4
      %v2895 = vadd.f32 %v2893, %v2894
      %v2896 = vrot.slane %v2895, 2
      %v2897 = vadd.f32 %v2895, %v2896
      %v2898 = vrot.slane %v2897, 1
      %v2899 = vadd.f32 %v2897, %v2898
      %v2900 = vsel %vm1257, %v2784, 0.0
      %v2901 = vrot.slane %v2900, 4
      %v2902 = vadd.f32 %v2900, %v2901
      %v2903 = vrot.slane %v2902, 2
      %v2904 = vadd.f32 %v2902, %v2903
      %v2905 = vrot.slane %v2904, 1
      %v2906 = vadd.f32 %v2904, %v2905
      %v2907 = vsel %vm1257, %v2785, 0.0
      %v2908 = vrot.slane %v2907, 4
      %v2909 = vadd.f32 %v2907, %v2908
      %v2910 = vrot.slane %v2909, 2
      %v2911 = vadd.f32 %v2909, %v2910
      %v2912 = vrot.slane %v2911, 1
      %v2913 = vadd.f32 %v2911, %v2912
      %v2914 = vsel %vm1257, %v2786, 0.0
      %v2915 = vrot.slane %v2914, 4
      %v2916 = vadd.f32 %v2914, %v2915
      %v2917 = vrot.slane %v2916, 2
      %v2918 = vadd.f32 %v2916, %v2917
      %v2919 = vrot.slane %v2918, 1
      %v2920 = vadd.f32 %v2918, %v2919
      %v2921 = vsel %vm1257, %v2787, 0.0
      %v2922 = vrot.slane %v2921, 4
      %v2923 = vadd.f32 %v2921, %v2922
      %v2924 = vrot.slane %v2923, 2
      %v2925 = vadd.f32 %v2923, %v2924
      %v2926 = vrot.slane %v2925, 1
      %v2927 = vadd.f32 %v2925, %v2926
      %v2928 = vsel %vm1257, %v2788, 0.0
      %v2929 = vrot.slane %v2928, 4
      %v2930 = vadd.f32 %v2928, %v2929
      %v2931 = vrot.slane %v2930, 2
      %v2932 = vadd.f32 %v2930, %v2931
      %v2933 = vrot.slane %v2932, 1
      %v2934 = vadd.f32 %v2932, %v2933
      %v2935 = vsel %vm1257, %v2789, 0.0
      %v2936 = vrot.slane %v2935, 4
      %v2937 = vadd.f32 %v2935, %v2936
      %v2938 = vrot.slane %v2937, 2
      %v2939 = vadd.f32 %v2937, %v2938
      %v2940 = vrot.slane %v2939, 1
      %v2941 = vadd.f32 %v2939, %v2940
      %v2942 = vsel %vm1257, %v2790, 0.0
      %v2943 = vrot.slane %v2942, 4
      %v2944 = vadd.f32 %v2942, %v2943
      %v2945 = vrot.slane %v2944, 2
      %v2946 = vadd.f32 %v2944, %v2945
      %v2947 = vrot.slane %v2946, 1
      %v2948 = vadd.f32 %v2946, %v2947
      %v2949 = vsel %vm1257, %v2791, 0.0
      %v2950 = vrot.slane %v2949, 4
      %v2951 = vadd.f32 %v2949, %v2950
      %v2952 = vrot.slane %v2951, 2
      %v2953 = vadd.f32 %v2951, %v2952
      %v2954 = vrot.slane %v2953, 1
      %v2955 = vadd.f32 %v2953, %v2954
      %v2956 = vsel %vm1257, %v2792, 0.0
      %v2957 = vrot.slane %v2956, 4
      %v2958 = vadd.f32 %v2956, %v2957
      %v2959 = vrot.slane %v2958, 2
      %v2960 = vadd.f32 %v2958, %v2959
      %v2961 = vrot.slane %v2960, 1
      %v2962 = vadd.f32 %v2960, %v2961
      %v2963 = vsel %vm1257, %v2793, 0.0
      %v2964 = vrot.slane %v2963, 4
      %v2965 = vadd.f32 %v2963, %v2964
      %v2966 = vrot.slane %v2965, 2
      %v2967 = vadd.f32 %v2965, %v2966
      %v2968 = vrot.slane %v2967, 1
      %v2969 = vadd.f32 %v2967, %v2968
      %v2970 = vsel %vm1257, %v2794, 0.0
      %v2971 = vrot.slane %v2970, 4
      %v2972 = vadd.f32 %v2970, %v2971
      %v2973 = vrot.slane %v2972, 2
      %v2974 = vadd.f32 %v2972, %v2973
      %v2975 = vrot.slane %v2974, 1
      %v2976 = vadd.f32 %v2974, %v2975
      %v2977 = vsel %vm1257, %v2795, 0.0
      %v2978 = vrot.slane %v2977, 4
      %v2979 = vadd.f32 %v2977, %v2978
      %v2980 = vrot.slane %v2979, 2
      %v2981 = vadd.f32 %v2979, %v2980
      %v2982 = vrot.slane %v2981, 1
      %v2983 = vadd.f32 %v2981, %v2982
      %v2984 = vsel %vm1257, %v2796, 0.0
      %v2985 = vrot.slane %v2984, 4
      %v2986 = vadd.f32 %v2984, %v2985
      %v2987 = vrot.slane %v2986, 2
      %v2988 = vadd.f32 %v2986, %v2987
      %v2989 = vrot.slane %v2988, 1
      %v2990 = vadd.f32 %v2988, %v2989
      %v2991 = vsel %vm1257, %v2797, 0.0
      %v2992 = vrot.slane %v2991, 4
      %v2993 = vadd.f32 %v2991, %v2992
      %v2994 = vrot.slane %v2993, 2
      %v2995 = vadd.f32 %v2993, %v2994
      %v2996 = vrot.slane %v2995, 1
      %v2997 = vadd.f32 %v2995, %v2996
      %v2998 = vsel %vm1257, %v2798, 0.0
      %v2999 = vrot.slane %v2998, 4
      %v3000 = vadd.f32 %v2998, %v2999
      %v3001 = vrot.slane %v3000, 2
      %v3002 = vadd.f32 %v3000, %v3001
      %v3003 = vrot.slane %v3002, 1
      %v3004 = vadd.f32 %v3002, %v3003
      %v3005 = vsel %vm1257, %v2799, 0.0
      %v3006 = vrot.slane %v3005, 4
      %v3007 = vadd.f32 %v3005, %v3006
      %v3008 = vrot.slane %v3007, 2
      %v3009 = vadd.f32 %v3007, %v3008
      %v3010 = vrot.slane %v3009, 1
      %v3011 = vadd.f32 %v3009, %v3010
      %v3012 = vsel %vm1257, %v2800, 0.0
      %v3013 = vrot.slane %v3012, 4
      %v3014 = vadd.f32 %v3012, %v3013
      %v3015 = vrot.slane %v3014, 2
      %v3016 = vadd.f32 %v3014, %v3015
      %v3017 = vrot.slane %v3016, 1
      %v3018 = vadd.f32 %v3016, %v3017
      %v3019 = vsel %vm1257, %v2801, 0.0
      %v3020 = vrot.slane %v3019, 4
      %v3021 = vadd.f32 %v3019, %v3020
      %v3022 = vrot.slane %v3021, 2
      %v3023 = vadd.f32 %v3021, %v3022
      %v3024 = vrot.slane %v3023, 1
      %v3025 = vadd.f32 %v3023, %v3024
      %v3026 = vld [vmem:[%s7] sm:$0xff]
      %v3027 = vld [vmem:[%s7 + $0x8] sm:$0xff]
      %v3028 = vld [vmem:[%s7 + $0x10] sm:$0xff]
      %v3029 = vld [vmem:[%s7 + $0x18] sm:$0xff]
      %v3030 = vld [vmem:[%s7 + $0x20] sm:$0xff]
      %v3031 = vld [vmem:[%s7 + $0x28] sm:$0xff]
      %v3032 = vld [vmem:[%s7 + $0x30] sm:$0xff]
      %v3033 = vld [vmem:[%s7 + $0x38] sm:$0xff]
      %vm3066 = vcmask 1041409
      %v3067 = vsel %vm3066, %v2815, %v2808
      %vm3068 = vcmask 1042434
      %v3069 = vsel %vm3068, %v2822, %v3067
      %vm3070 = vcmask 1043459
      %v3071 = vsel %vm3070, %v2829, %v3069
      %vm3072 = vcmask 1044484
      %v3073 = vsel %vm3072, %v2836, %v3071
      %vm3074 = vcmask 1045509
      %v3075 = vsel %vm3074, %v2843, %v3073
      %vm3076 = vcmask 1046534
      %v3077 = vsel %vm3076, %v2850, %v3075
      %vm3078 = vcmask 1047559
      %v3079 = vsel %vm3078, %v2857, %v3077
      %v3080 = vsel %vm3066, %v2871, %v2864
      %v3081 = vsel %vm3068, %v2878, %v3080
      %v3082 = vsel %vm3070, %v2885, %v3081
      %v3083 = vsel %vm3072, %v2892, %v3082
      %v3084 = vsel %vm3074, %v2899, %v3083
      %v3085 = vsel %vm3076, %v2906, %v3084
      %v3086 = vsel %vm3078, %v2913, %v3085
      %v3087 = vsel %vm3066, %v2927, %v2920
      %v3088 = vsel %vm3068, %v2934, %v3087
      %v3089 = vsel %vm3070, %v2941, %v3088
      %v3090 = vsel %vm3072, %v2948, %v3089
      %v3091 = vsel %vm3074, %v2955, %v3090
      %v3092 = vsel %vm3076, %v2962, %v3091
      %v3093 = vsel %vm3078, %v2969, %v3092
      %v3094 = vsel %vm3066, %v2983, %v2976
      %v3095 = vsel %vm3068, %v2990, %v3094
      %v3096 = vsel %vm3070, %v2997, %v3095
      %v3097 = vsel %vm3072, %v3004, %v3096
      %v3098 = vsel %vm3074, %v3011, %v3097
      %v3099 = vsel %vm3076, %v3018, %v3098
      %v3100 = vsel %vm3078, %v3025, %v3099
      %v3101 = vsel %vm1257, %v3079, 0
      %v3103 = vsel %vm1257, %v3086, 0
      %v3105 = vsel %vm1257, %v3093, 0
      %v3107 = vsel %vm1257, %v3100, 0
      %3109 = vmatprep.subr.mxu0 0.0
      %3110 = vmatpush1.msra.mxu0 %v3026
      %3111 = vmatprep.subr.mxu0 0.0
      %3112 = vmatpush1.msra.mxu0 %v3027
      %3113 = vmatprep.subr.mxu0 0.0
      %3114 = vmatpush1.msra.mxu0 %v3028
      %3115 = vmatprep.subr.mxu0 0.0
      %3116 = vmatpush1.msra.mxu0 %v3029
      %3117 = vmatprep.subr.mxu0 0.0
      %3118 = vmatpush1.msra.mxu0 %v3030
      %3119 = vmatprep.subr.mxu0 0.0
      %3120 = vmatpush1.msra.mxu0 %v3031
      %3121 = vmatprep.subr.mxu0 0.0
      %3122 = vmatpush1.msra.mxu0 %v3032
      %3123 = vmatprep.subr.mxu0 0.0
      %3124 = vmatpush1.msra.mxu0 %v3033
      %3125 = vmatprep.subr.mxu0 0.0
      %3126 = vmatpush1.msra.mxu0 0.0
      %3127 = vmatprep.subr.mxu0 0.0
      %3128 = vmatpush1.msra.mxu0 0.0
      %3129 = vmatprep.subr.mxu0 0.0
      %3130 = vmatpush1.msra.mxu0 0.0
      %3131 = vmatprep.subr.mxu0 0.0
      %3132 = vmatpush1.msra.mxu0 0.0
      %3133 = vmatprep.subr.mxu0 0.0
      %3134 = vmatpush1.msra.mxu0 0.0
      %3135 = vmatprep.subr.mxu0 0.0
      %3136 = vmatpush1.msra.mxu0 0.0
      %3137 = vmatprep.subr.mxu0 0.0
      %3138 = vmatpush1.msra.mxu0 0.0
      %3139 = vmatprep.subr.mxu0 0.0
      %3140 = vmatpush1.msra.mxu0 0.0
      %3141 = vmatprep.subr.mxu0 0.0
      %3142 = vmatpush1.msra.mxu0 0.0
      %3143 = vmatprep.subr.mxu0 0.0
      %3144 = vmatpush1.msra.mxu0 0.0
      %3145 = vmatprep.subr.mxu0 0.0
      %3146 = vmatpush1.msra.mxu0 0.0
      %3147 = vmatprep.subr.mxu0 0.0
      %3148 = vmatpush1.msra.mxu0 0.0
      %3149 = vmatprep.subr.mxu0 0.0
      %3150 = vmatpush1.msra.mxu0 0.0
      %3151 = vmatprep.subr.mxu0 0.0
      %3152 = vmatpush1.msra.mxu0 0.0
      %3153 = vmatprep.subr.mxu0 0.0
      %3154 = vmatpush1.msra.mxu0 0.0
      %3155 = vmatprep.subr.mxu0 0.0
      %3156 = vmatpush1.msra.mxu0 0.0
      %3157 = vmatprep.subr.mxu0 0.0
      %3158 = vmatpush1.msra.mxu0 0.0
      %3159 = vmatprep.subr.mxu0 0.0
      %3160 = vmatpush1.msra.mxu0 0.0
      %3161 = vmatprep.subr.mxu0 0.0
      %3162 = vmatpush1.msra.mxu0 0.0
      %3163 = vmatprep.subr.mxu0 0.0
      %3164 = vmatpush1.msra.mxu0 0.0
      %3165 = vmatprep.subr.mxu0 0.0
      %3166 = vmatpush1.msra.mxu0 0.0
      %3167 = vmatprep.subr.mxu0 0.0
      %3168 = vmatpush1.msra.mxu0 0.0
      %3169 = vmatprep.subr.mxu0 0.0
      %3170 = vmatpush1.msra.mxu0 0.0
      %3171 = vmatprep.subr.mxu0 0.0
      %3172 = vmatpush1.msra.mxu0 0.0
      %3173 = vmatprep.mubr.f32.mxu0 0.0
      %3174 = vmatmul.mubr.f32.gmra.mrb[0].mxu0 %v3101
      %v3175 = vpop.f32.mrb[0].mxu0
      %v3176 = vadd.f32 0.0, %v3175
      %v3177 = vpop.f32.mrb[0].mxu0
      %3178 = vmatprep.mubr.f32.mxu0 0.0
      %3179 = vmatmul.mubr.f32.gmra.mrb[0].mxu0 %v3103
      %v3180 = vpop.f32.mrb[0].mxu0
      %v3181 = vadd.f32 0.0, %v3180
      %v3182 = vpop.f32.mrb[0].mxu0
      %3183 = vmatprep.mubr.f32.mxu0 0.0
      %3184 = vmatmul.mubr.f32.gmra.mrb[0].mxu0 %v3105
      %v3185 = vpop.f32.mrb[0].mxu0
      %v3186 = vadd.f32 0.0, %v3185
      %v3187 = vpop.f32.mrb[0].mxu0
      %3188 = vmatprep.mubr.f32.mxu0 0.0
      %3189 = vmatmul.mubr.f32.gmra.mrb[0].mxu0 %v3107
      %v3190 = vpop.f32.mrb[0].mxu0
      %v3191 = vadd.f32 0.0, %v3190
      %v3192 = vpop.f32.mrb[0].mxu0
      %3193 = vdwg.mxu0
      %3194 = vst.msk [vmem:[%s386] sm:$0xff] %vm434, %v3176
      %3195 = vst.msk [vmem:[%s386 + $0x8] sm:$0xff] %vm434, %v3181
      %3196 = vst.msk [vmem:[%s386 + $0x10] sm:$0xff] %vm434, %v3186
      %3197 = vst.msk [vmem:[%s386 + $0x18] sm:$0xff] %vm434, %v3191
      %3198 = vst.msk [vmem:[%s392] sm:$0xff] %vm1835, %v2381
      %3199 = vst.msk [vmem:[%s392 + $0x8] sm:$0xff] %vm1835, %v2383
      %3200 = vst.msk [vmem:[%s392 + $0x10] sm:$0xff] %vm1835, %v2385
      %3201 = vst.msk [vmem:[%s392 + $0x18] sm:$0xff] %vm1835, %v2387
      %3202 = vst.msk [vmem:[%s392 + $0x20] sm:$0xff] %vm1835, %v2389
      %3203 = vst.msk [vmem:[%s392 + $0x28] sm:$0xff] %vm1835, %v2391
      %3204 = vst.msk [vmem:[%s392 + $0x30] sm:$0xff] %vm1835, %v2393
      %3205 = vst.msk [vmem:[%s392 + $0x38] sm:$0xff] %vm1835, %v2395
      %3206 = vst.msk [vmem:[%s392 + $0x40] sm:$0xff] %vm1835, %v2397
      %3207 = vst.msk [vmem:[%s392 + $0x48] sm:$0xff] %vm1835, %v2399
      %3208 = vst.msk [vmem:[%s392 + $0x50] sm:$0xff] %vm1835, %v2401
      %3209 = vst.msk [vmem:[%s392 + $0x58] sm:$0xff] %vm1835, %v2403
      %3210 = vst.msk [vmem:[%s392 + $0x60] sm:$0xff] %vm1835, %v2405
      %3211 = vst.msk [vmem:[%s392 + $0x68] sm:$0xff] %vm1835, %v2407
      %3212 = vst.msk [vmem:[%s392 + $0x70] sm:$0xff] %vm1835, %v2409
      %3213 = vst.msk [vmem:[%s392 + $0x78] sm:$0xff] %vm1835, %v2411
      %3214 = vst.msk [vmem:[%s392 + $0x80] sm:$0xff] %vm1835, %v2413
      %3215 = vst.msk [vmem:[%s392 + $0x88] sm:$0xff] %vm1835, %v2415
      %3216 = vst.msk [vmem:[%s392 + $0x90] sm:$0xff] %vm1835, %v2417
      %3217 = vst.msk [vmem:[%s392 + $0x98] sm:$0xff] %vm1835, %v2419
      %3218 = vst.msk [vmem:[%s392 + $0xa0] sm:$0xff] %vm1835, %v2421
      %3219 = vst.msk [vmem:[%s392 + $0xa8] sm:$0xff] %vm1835, %v2423
      %3220 = vst.msk [vmem:[%s392 + $0xb0] sm:$0xff] %vm1835, %v2425
      %3221 = vst.msk [vmem:[%s392 + $0xb8] sm:$0xff] %vm1835, %v2427
      %3222 = vst.msk [vmem:[%s392 + $0xc0] sm:$0xff] %vm1835, %v2429
      %3223 = vst.msk [vmem:[%s392 + $0xc8] sm:$0xff] %vm1835, %v2431
      %3224 = vst.msk [vmem:[%s392 + $0xd0] sm:$0xff] %vm1835, %v2433
      %3225 = vst.msk [vmem:[%s392 + $0xd8] sm:$0xff] %vm1835, %v2435
      %3226 = vst.msk [vmem:[%s392 + $0xe0] sm:$0xff] %vm1835, %v2437
      %3227 = vst.msk [vmem:[%s392 + $0xe8] sm:$0xff] %vm1835, %v2439
      %3228 = vst.msk [vmem:[%s392 + $0xf0] sm:$0xff] %vm1835, %v2441
      %3229 = vst.msk [vmem:[%s392 + $0xf8] sm:$0xff] %vm1835, %v2443
      %s3230 = smul.u32 4, %s21
      %p3231 = scmp.lt.s32.totalorder %s3230, 7
      %s3232 = scalar_select %p3231, %s3230, 7
      %s3233 = smul.addr %s3232, 8
      %s3234 = scalar_lea.vmem %s8, %s3233
      %s3235 = smul.u32 32, %s21
      %p3236 = scmp.lt.s32.totalorder %s3235, 63
      %s3237 = scalar_select %p3236, %s3235, 63
      %s3238 = smul.addr %s3237, 8
      %s3239 = scalar_lea.vmem %s9, %s3238
      // Predicated region
      $region53: #{attention_forward_batched.1} parent=51 // pred_check
        %p3240 = pneg %p222
      $region54: #{attention_forward_batched.1} parent=51 // pred_check_branch
        %3242 = sbr.rel (%p3240) target = $region56
      $region55: #{attention_forward_batched.1} parent=51 // pred_region
        %s3243 = smul.u32 4, %s21
      $region56: #{attention_forward_batched.1} parent=51 // pred_fallthru
        _
      // Predicated region
      $region57: #{attention_forward_batched.1} parent=51 // pred_check
        %p3244 = pneg %p248
      $region58: #{attention_forward_batched.1} parent=51 // pred_check_branch
        %3246 = sbr.rel (%p3244) target = $region60
      $region59: #{attention_forward_batched.1} parent=51 // pred_region
        %s3247 = smul.u32 32, %s21
      $region60: #{attention_forward_batched.1} parent=51 // pred_fallthru
        _
    $region52: #{attention_forward_batched.1} parent=5 // pred_fallthru
      _
    %p3248 = scmp.le.s32.totalorder 2, %s16
    // Predicated region
    $region61: #{attention_forward_batched.1} parent=5 // pred_check
      %p3249 = pneg %p3248
    $region62: #{attention_forward_batched.1} parent=5 // pred_check_branch
      %3251 = sbr.rel (%p3249) target = $region64
    $region63: #{attention_forward_batched.1} parent=5 // pred_region
      %s3252 = ssub.s32 %s16, 2
      // Predicated region
      $region65: #{attention_forward_batched.1} parent=63 // pred_check
        %p3253 = pneg %p228
      $region66: #{attention_forward_batched.1} parent=63 // pred_check_branch
        %3255 = sbr.rel (%p3253) target = $region68
      $region67: #{attention_forward_batched.1} parent=63 // pred_region
        %s3256 = smul.u32 4, %s22
        %p3257 = scmp.lt.s32.totalorder %s3256, 7
        %s3258 = scalar_select %p3257, %s3256, 7
        %s3259 = smul.addr %s3258, 8
        %s3260 = scalar_lea.vmem %s8, %s3259
      $region68: #{attention_forward_batched.1} parent=63 // pred_fallthru
        _
      // Predicated region
      $region69: #{attention_forward_batched.1} parent=63 // pred_check
        %p3261 = pneg %p254
      $region70: #{attention_forward_batched.1} parent=63 // pred_check_branch
        %3263 = sbr.rel (%p3261) target = $region72
      $region71: #{attention_forward_batched.1} parent=63 // pred_region
        %s3264 = smul.u32 32, %s22
        %p3265 = scmp.lt.s32.totalorder %s3264, 63
        %s3266 = scalar_select %p3265, %s3264, 63
        %s3267 = smul.addr %s3266, 8
        %s3268 = scalar_lea.vmem %s9, %s3267
      $region72: #{attention_forward_batched.1} parent=63 // pred_fallthru
        _
    $region64: #{attention_forward_batched.1} parent=5 // pred_fallthru
      _
  $region6: #{attention_forward_batched.1} parent=0 // loop_footer
    %s20 = sadd.s32 1, %s16
  $region7: #{attention_forward_batched.1} parent=0 // loop_footer_branch
    %15 = sbr.rel target = $region3
  $region8: #{attention_forward_batched.1} parent=0 // loop_exit
    _

</llo_original>
